<compile_context>
chip_gen: v7x
topology: tpu7x:2x2x1
jax: 0.10.0
libtpu: 0.0.40
codegen_flags: <defaults>
</compile_context>

<pallas_src>
import math

import jax
import jax.numpy as jnp
from jax.experimental import pallas as pl
from jax.experimental.pallas import tpu as pltpu


def _tpu_generation():
    """Best-effort TPU generation tag: 'v5' / 'v6' / 'v7' or None."""
    try:
        kind = jax.devices()[0].device_kind.lower()
    except Exception:  # noqa: BLE001
        return None
    for tag in ("v7", "v6", "v5"):
        if tag in kind:
            return tag
    return None


def _make_kernel(H, d, C, TB, N, batched_heads):
    R = TB * N

    def kernel(x_ref, wqkv_ref, bqkv_ref, rb_ref, wp_ref, bp_ref, o_ref):
        x = x_ref[...]                                              # (R, C) bf16

        # Fused QKV projection (qk scale folded into Q columns), f32 accumulate.
        qkv = jnp.dot(x, wqkv_ref[...],
                      preferred_element_type=jnp.float32) + bqkv_ref[...]   # (R, 3C) f32
        qkv = qkv.astype(jnp.bfloat16)

        if batched_heads:
            # One batched contraction over all heads.
            q = qkv[:, 0 * C:1 * C].reshape(TB, N, H, d)
            k = qkv[:, 1 * C:2 * C].reshape(TB, N, H, d)
            v = qkv[:, 2 * C:3 * C].reshape(TB, N, H, d)

            s = jnp.einsum("bqhd,bkhd->bhqk", q, k,
                           preferred_element_type=jnp.float32)      # (TB, H, N, N) f32
            s = s + rb_ref[...][None]                               # single broadcast

            m = jnp.max(s, axis=-1, keepdims=True)
            e = jnp.exp(s - m)
            p = e * pl.reciprocal(jnp.sum(e, axis=-1, keepdims=True), approx=True)

            o = jnp.einsum("bhqk,bkhd->bqhd", p.astype(jnp.bfloat16), v,
                           preferred_element_type=jnp.float32)      # (TB, N, H, d) f32
            om = o.reshape(R, C).astype(jnp.bfloat16)               # head-major channels
        else:
            # Fallback: per-head unroll (previously verified lowering path).
            qkv3 = qkv.reshape(TB, N, 3 * C)
            outs = []
            for h in range(H):
                qh = qkv3[:, :, h * d:(h + 1) * d]
                kh = qkv3[:, :, C + h * d:C + (h + 1) * d]
                vh = qkv3[:, :, 2 * C + h * d:2 * C + (h + 1) * d]

                s = jnp.einsum("bnd,bmd->bnm", qh, kh,
                               preferred_element_type=jnp.float32)  # (TB, N, N) f32
                s = s + rb_ref[h]

                m = jnp.max(s, axis=-1, keepdims=True)
                e = jnp.exp(s - m)
                p = e * pl.reciprocal(jnp.sum(e, axis=-1, keepdims=True), approx=True)

                outs.append(jnp.einsum("bnm,bmd->bnd", p.astype(jnp.bfloat16), vh,
                                       preferred_element_type=jnp.float32))
            om = jnp.concatenate(outs, axis=-1).reshape(R, C).astype(jnp.bfloat16)

        out = jnp.dot(om, wp_ref[...],
                      preferred_element_type=jnp.float32) + bp_ref[...]
        o_ref[...] = out.astype(o_ref.dtype)

    return kernel


def window_attention_pallas(x, params, window_size, num_heads, mask=None,
                            block_windows=None):
    """x: (B_, N, C) float32 -> (B_, N, C) float32 (WindowAttention.forward, eval)."""
    # TODO(synk): mask != None (shifted-window SW-MSA) path: fold the (nW, N, N)
    # mask into the pre-softmax additive bias; not wired into the kernel yet.
    assert mask is None

    B_, N, C = x.shape
    H = num_heads
    d = C // H
    Wh, Ww = window_size
    assert N == Wh * Ww and H * d == C
    scale = d ** (-0.5)

    gen = _tpu_generation()
    n_tc = 2 if gen == "v7" else 1                       # v7x: 2 TensorCores / chip
    vmem_budget = {"v7": 48 << 20, "v6": 96 << 20, "v5": 96 << 20}.get(gen, 64 << 20)

    # ---- resident parameters: bf16 MXU operands, f32 biases / rel-pos bias ----
    w_qkv = params["w_qkv"].astype(jnp.float32)          # (3C, C) torch Linear layout
    scale_vec = jnp.concatenate([jnp.full((C,), scale, jnp.float32),
                                 jnp.ones((2 * C,), jnp.float32)])
    wqkv = (w_qkv.T * scale_vec[None, :]).astype(jnp.bfloat16)         # (C, 3C)
    bqkv = (params["b_qkv"].astype(jnp.float32) * scale_vec).reshape(1, 3 * C)
    wp = params["w_proj"].astype(jnp.float32).T.astype(jnp.bfloat16)   # (C, C)
    bp = params["b_proj"].astype(jnp.float32).reshape(1, C)

    coords = jnp.stack(jnp.meshgrid(jnp.arange(Wh), jnp.arange(Ww), indexing="ij"))
    cf = coords.reshape(2, -1)                                          # (2, N)
    rel = (cf[:, :, None] - cf[:, None, :]).transpose(1, 2, 0)          # (N, N, 2)
    rel_index = ((rel[..., 0] + (Wh - 1)) * (2 * Ww - 1)
                 + (rel[..., 1] + (Ww - 1))).reshape(-1)                # (N*N,)
    rb = params["rpb_table"][rel_index].reshape(N, N, H).transpose(2, 0, 1)
    rb = rb.astype(jnp.float32)                                         # (H, N, N)

    resident_bytes = (wqkv.size + wp.size) * 2 + (bqkv.size + bp.size + rb.size) * 4

    # ---- windows per grid step: as large as the VMEM budget allows ----
    if block_windows is None:
        per_win = N * C * 48 + H * N * N * 12            # rough per-window working set
        avail = max(per_win, vmem_budget - 2 * resident_bytes - (4 << 20))
        TB = max(1, min(B_, avail // per_win))
        if n_tc > 1 and B_ > 1:
            TB = min(TB, -(-B_ // n_tc))                 # keep >= n_tc grid steps (v7x)
        row_align = 16 // math.gcd(N, 16)                # bf16 sublane tiling of rows
        mxu_align = max(1, 256 // N)                     # aim for >=256-row matmuls
        pref = math.lcm(row_align, mxu_align)
        if TB >= pref:
            TB = (TB // pref) * pref
        elif TB >= row_align:
            TB = (TB // row_align) * row_align
        else:
            TB = row_align                               # round up (extra rows padded)
    else:
        TB = block_windows

    nb = -(-B_ // TB)                                    # ceil
    B_pad = nb * TB
    R = TB * N

    # 2-D (tokens, C) slabs in/out: matmul-shaped blocks, no in-kernel (N,C) relayout.
    x2d = x.astype(jnp.bfloat16).reshape(B_ * N, C)
    if B_pad != B_:
        x2d = jnp.pad(x2d, ((0, (B_pad - B_) * N), (0, 0)))

    def build_and_run(batched_heads, single_buffer_residents):
        res_kw = {"pipeline_mode": pl.Buffered(1)} if single_buffer_residents else {}
        grid_spec = pltpu.PrefetchScalarGridSpec(
            num_scalar_prefetch=0,
            grid=(nb,),
            in_specs=[
                pl.BlockSpec((R, C), lambda b: (b, 0)),                  # x block
                pl.BlockSpec((C, 3 * C), lambda b: (0, 0), **res_kw),    # qkv weight
                pl.BlockSpec((1, 3 * C), lambda b: (0, 0), **res_kw),    # qkv bias
                pl.BlockSpec((H, N, N), lambda b: (0, 0, 0), **res_kw),  # rel-pos bias
                pl.BlockSpec((C, C), lambda b: (0, 0), **res_kw),        # proj weight
                pl.BlockSpec((1, C), lambda b: (0, 0), **res_kw),        # proj bias
            ],
            out_specs=pl.BlockSpec((R, C), lambda b: (b, 0)),
        )
        return pl.pallas_call(
            _make_kernel(H, d, C, TB, N, batched_heads),
            out_shape=jax.ShapeDtypeStruct((B_pad * N, C), jnp.float32),
            grid_spec=grid_spec,
            compiler_params=pltpu.CompilerParams(
                dimension_semantics=("parallel",),
                vmem_limit_bytes=int(vmem_budget)),
        )(x2d, wqkv, bqkv, rb, wp, bp)

    # Preferred config first; fall back to the previously verified per-head unroll
    # if the batched-head lowering (multi-batch dot_general / transpose) or the
    # single-buffered residents are not supported by the installed Mosaic.
    attempts = ([(True, True)] if gen == "v7" else []) + [(True, False), (False, False)]
    out2d = None
    for i, (bh, sb) in enumerate(attempts):
        try:
            out2d = build_and_run(bh, sb)
            break
        except Exception:  # noqa: BLE001
            if i == len(attempts) - 1:
                raise

    return out2d[:B_ * N].reshape(B_, N, C)


def window_attention_ref(x, params, window_size, num_heads):
    """Pure-JAX f32 reference mirroring the PyTorch forward (mask=None, no dropout)."""
    B_, N, C = x.shape
    H = num_heads
    d = C // H
    Wh, Ww = window_size
    scale = d ** (-0.5)

    qkv = x @ params["w_qkv"].T + params["b_qkv"]                  # (B_, N, 3C)
    qkv = qkv.reshape(B_, N, 3, H, d).transpose(2, 0, 3, 1, 4)     # (3, B_, H, N, d)
    q, k, v = qkv[0], qkv[1], qkv[2]
    q = q * scale
    attn = jnp.einsum("bhnd,bhmd->bhnm", q, k)

    coords = jnp.stack(jnp.meshgrid(jnp.arange(Wh), jnp.arange(Ww), indexing="ij"))
    cf = coords.reshape(2, -1)
    rel = (cf[:, :, None] - cf[:, None, :]).transpose(1, 2, 0)
    idx = ((rel[..., 0] + Wh - 1) * (2 * Ww - 1) + (rel[..., 1] + Ww - 1)).reshape(-1)
    rb = params["rpb_table"][idx].reshape(N, N, H).transpose(2, 0, 1)  # (H, N, N)

    attn = attn + rb[None]
    attn = jax.nn.softmax(attn, axis=-1)
    out = jnp.einsum("bhnm,bhmd->bhnd", attn, v)
    out = out.transpose(0, 2, 1, 3).reshape(B_, N, C)
    out = out @ params["w_proj"].T + params["b_proj"]
    return out


if __name__ == "__main__":
    # Small, forward-consistent shapes.
    dim = 32
    window_size = (8, 8)       # N = 64
    num_heads = 4              # head_dim = 8
    B_ = 4                     # num_windows * batch
    N = window_size[0] * window_size[1]

    key = jax.random.PRNGKey(0)
    k0, k1, k2, k3, k4, k5 = jax.random.split(key, 6)

    params = {
        "w_qkv":  jax.random.normal(k1, (3 * dim, dim), jnp.float32) * 0.05,
        "b_qkv":  jax.random.normal(k2, (3 * dim,), jnp.float32) * 0.02,
        "w_proj": jax.random.normal(k3, (dim, dim), jnp.float32) * 0.05,
        "b_proj": jax.random.normal(k4, (dim,), jnp.float32) * 0.02,
        # trunc_normal_(std=0.02) approximated by a clipped normal (synthetic init)
        "rpb_table": jnp.clip(
            jax.random.normal(
                k5, ((2 * window_size[0] - 1) * (2 * window_size[1] - 1), num_heads),
                jnp.float32) * 0.02, -2.0, 2.0),
    }

    x = jax.random.normal(k0, (B_, N, dim), jnp.float32)

    out = window_attention_pallas(x, params, window_size, num_heads)
    out = jax.block_until_ready(out)

    ref = window_attention_ref(x, params, window_size, num_heads)
    assert out.shape == (B_, N, dim)
    # Tolerance accounts for bf16 MXU operands and the EUP approximate reciprocal.
    rel_err = float(jnp.linalg.norm(out - ref) / (jnp.linalg.norm(ref) + 1e-12))
    assert rel_err < 5e-2, f"relative error too large: {rel_err}"

    print("KERNEL_OK")
</pallas_src>

<mosaic_0001>
module attributes {stable_mosaic.version = 11 : i64} {
  func.func @kernel(%arg0: i32, %arg1: memref<256x32xbf16, #tpu.memory_space<vmem>>, %arg2: memref<32x96xbf16, #tpu.memory_space<vmem>>, %arg3: memref<1x96xf32, #tpu.memory_space<vmem>>, %arg4: memref<4x64x64xf32, #tpu.memory_space<vmem>>, %arg5: memref<32x32xbf16, #tpu.memory_space<vmem>>, %arg6: memref<1x32xf32, #tpu.memory_space<vmem>>, %arg7: memref<256x32xf32, #tpu.memory_space<vmem>>) attributes {dimension_semantics = [#tpu.dimension_semantics<parallel>], iteration_bounds = array<i64: 1>, scalar_prefetch = 0 : i64, scratch_operands = 0 : i64, tpu.core_type = #tpu.core_type<tc>, window_params = [{transform_indices = @transform_0, window_bounds = array<i64: 256, 32>}, {pipeline_mode = #tpu.pipeline_mode<synchronous>, transform_indices = @transform_1, window_bounds = array<i64: 32, 96>}, {pipeline_mode = #tpu.pipeline_mode<synchronous>, transform_indices = @transform_2, window_bounds = array<i64: 1, 96>}, {pipeline_mode = #tpu.pipeline_mode<synchronous>, transform_indices = @transform_3, window_bounds = array<i64: 4, 64, 64>}, {pipeline_mode = #tpu.pipeline_mode<synchronous>, transform_indices = @transform_4, window_bounds = array<i64: 32, 32>}, {pipeline_mode = #tpu.pipeline_mode<synchronous>, transform_indices = @transform_5, window_bounds = array<i64: 1, 32>}, {transform_indices = @transform_6, window_bounds = array<i64: 256, 32>}]} {
    %c0 = arith.constant 0 : index
    %c0_0 = arith.constant 0 : index
    %0 = vector.load %arg1[%c0, %c0_0] : memref<256x32xbf16, #tpu.memory_space<vmem>>, vector<256x32xbf16>
    %c0_1 = arith.constant 0 : index
    %c0_2 = arith.constant 0 : index
    %1 = vector.load %arg2[%c0_1, %c0_2] : memref<32x96xbf16, #tpu.memory_space<vmem>>, vector<32x96xbf16>
    %cst = arith.constant dense<0.000000e+00> : vector<256x96xf32>
    %2 = tpu.matmul %0, %1, %cst {dimension_numbers = #tpu.dot_dimension_numbers<[1], [0], [0], [1], [0, 0, 1, 1], [], []>} : vector<256x32xbf16>, vector<32x96xbf16>, vector<256x96xf32> -> vector<256x96xf32>
    %c0_3 = arith.constant 0 : index
    %c0_4 = arith.constant 0 : index
    %3 = vector.load %arg3[%c0_3, %c0_4] : memref<1x96xf32, #tpu.memory_space<vmem>>, vector<1x96xf32>
    %4 = vector.broadcast %3 : vector<1x96xf32> to vector<256x96xf32>
    %5 = arith.addf %2, %4 : vector<256x96xf32>
    %6 = arith.truncf %5 : vector<256x96xf32> to vector<256x96xbf16>
    %7 = vector.shape_cast %6 : vector<256x96xbf16> to vector<4x64x96xbf16>
    %8 = vector.extract_strided_slice %7 {offsets = [0, 0, 0], sizes = [4, 64, 8], strides = [1, 1, 1]} : vector<4x64x96xbf16> to vector<4x64x8xbf16>
    %9 = vector.extract_strided_slice %7 {offsets = [0, 0, 32], sizes = [4, 64, 8], strides = [1, 1, 1]} : vector<4x64x96xbf16> to vector<4x64x8xbf16>
    %10 = vector.extract_strided_slice %7 {offsets = [0, 0, 64], sizes = [4, 64, 8], strides = [1, 1, 1]} : vector<4x64x96xbf16> to vector<4x64x8xbf16>
    "tpu.trace_start"() <{level = 10 : i32, message = "bnd,bmd->bnm"}> : () -> ()
    %cst_5 = arith.constant dense<0.000000e+00> : vector<4x64x64xf32>
    %11 = tpu.matmul %8, %9, %cst_5 {dimension_numbers = #tpu.dot_dimension_numbers<[2], [2], [1], [1], [0, 0, 0, 1, 1, 1], [0], [0]>} : vector<4x64x8xbf16>, vector<4x64x8xbf16>, vector<4x64x64xf32> -> vector<4x64x64xf32>
    "tpu.trace_stop"() : () -> ()
    %c0_6 = arith.constant 0 : index
    %c0_7 = arith.constant 0 : index
    %c0_8 = arith.constant 0 : index
    %12 = vector.load %arg4[%c0_6, %c0_7, %c0_8] : memref<4x64x64xf32, #tpu.memory_space<vmem>>, vector<1x64x64xf32>
    %13 = vector.shape_cast %12 : vector<1x64x64xf32> to vector<64x64xf32>
    %14 = vector.shape_cast %13 : vector<64x64xf32> to vector<1x64x64xf32>
    %15 = vector.broadcast %14 : vector<1x64x64xf32> to vector<4x64x64xf32>
    %16 = arith.addf %11, %15 : vector<4x64x64xf32>
    %cst_9 = arith.constant dense<0xFF800000> : vector<4x64xf32>
    %17 = vector.multi_reduction <maximumf>, %16, %cst_9 [2] : vector<4x64x64xf32> to vector<4x64xf32>
    %18 = vector.shape_cast %17 : vector<4x64xf32> to vector<4x64x1xf32>
    %19 = vector.broadcast %18 : vector<4x64x1xf32> to vector<4x64x64xf32>
    %20 = arith.subf %16, %19 : vector<4x64x64xf32>
    %21 = math.exp %20 : vector<4x64x64xf32>
    %cst_10 = arith.constant dense<0.000000e+00> : vector<4x64xf32>
    %22 = vector.multi_reduction <add>, %21, %cst_10 [2] : vector<4x64x64xf32> to vector<4x64xf32>
    %23 = vector.shape_cast %22 : vector<4x64xf32> to vector<4x64x1xf32>
    %24 = tpu.reciprocal %23 {approx = true} : vector<4x64x1xf32> -> vector<4x64x1xf32>
    %25 = vector.broadcast %24 : vector<4x64x1xf32> to vector<4x64x64xf32>
    %26 = arith.mulf %21, %25 : vector<4x64x64xf32>
    %27 = arith.truncf %26 : vector<4x64x64xf32> to vector<4x64x64xbf16>
    "tpu.trace_start"() <{level = 10 : i32, message = "bnm,bmd->bnd"}> : () -> ()
    %cst_11 = arith.constant dense<0.000000e+00> : vector<4x64x8xf32>
    %28 = tpu.matmul %27, %10, %cst_11 {dimension_numbers = #tpu.dot_dimension_numbers<[2], [1], [1], [2], [0, 0, 0, 1, 1, 2], [0], [0]>} : vector<4x64x64xbf16>, vector<4x64x8xbf16>, vector<4x64x8xf32> -> vector<4x64x8xf32>
    "tpu.trace_stop"() : () -> ()
    %29 = vector.extract_strided_slice %7 {offsets = [0, 0, 8], sizes = [4, 64, 8], strides = [1, 1, 1]} : vector<4x64x96xbf16> to vector<4x64x8xbf16>
    %30 = vector.extract_strided_slice %7 {offsets = [0, 0, 40], sizes = [4, 64, 8], strides = [1, 1, 1]} : vector<4x64x96xbf16> to vector<4x64x8xbf16>
    %31 = vector.extract_strided_slice %7 {offsets = [0, 0, 72], sizes = [4, 64, 8], strides = [1, 1, 1]} : vector<4x64x96xbf16> to vector<4x64x8xbf16>
    "tpu.trace_start"() <{level = 10 : i32, message = "bnd,bmd->bnm"}> : () -> ()
    %cst_12 = arith.constant dense<0.000000e+00> : vector<4x64x64xf32>
    %32 = tpu.matmul %29, %30, %cst_12 {dimension_numbers = #tpu.dot_dimension_numbers<[2], [2], [1], [1], [0, 0, 0, 1, 1, 1], [0], [0]>} : vector<4x64x8xbf16>, vector<4x64x8xbf16>, vector<4x64x64xf32> -> vector<4x64x64xf32>
    "tpu.trace_stop"() : () -> ()
    %c1 = arith.constant 1 : index
    %c0_13 = arith.constant 0 : index
    %c0_14 = arith.constant 0 : index
    %33 = vector.load %arg4[%c1, %c0_13, %c0_14] : memref<4x64x64xf32, #tpu.memory_space<vmem>>, vector<1x64x64xf32>
    %34 = vector.shape_cast %33 : vector<1x64x64xf32> to vector<64x64xf32>
    %35 = vector.shape_cast %34 : vector<64x64xf32> to vector<1x64x64xf32>
    %36 = vector.broadcast %35 : vector<1x64x64xf32> to vector<4x64x64xf32>
    %37 = arith.addf %32, %36 : vector<4x64x64xf32>
    %cst_15 = arith.constant dense<0xFF800000> : vector<4x64xf32>
    %38 = vector.multi_reduction <maximumf>, %37, %cst_15 [2] : vector<4x64x64xf32> to vector<4x64xf32>
    %39 = vector.shape_cast %38 : vector<4x64xf32> to vector<4x64x1xf32>
    %40 = vector.broadcast %39 : vector<4x64x1xf32> to vector<4x64x64xf32>
    %41 = arith.subf %37, %40 : vector<4x64x64xf32>
    %42 = math.exp %41 : vector<4x64x64xf32>
    %cst_16 = arith.constant dense<0.000000e+00> : vector<4x64xf32>
    %43 = vector.multi_reduction <add>, %42, %cst_16 [2] : vector<4x64x64xf32> to vector<4x64xf32>
    %44 = vector.shape_cast %43 : vector<4x64xf32> to vector<4x64x1xf32>
    %45 = tpu.reciprocal %44 {approx = true} : vector<4x64x1xf32> -> vector<4x64x1xf32>
    %46 = vector.broadcast %45 : vector<4x64x1xf32> to vector<4x64x64xf32>
    %47 = arith.mulf %42, %46 : vector<4x64x64xf32>
    %48 = arith.truncf %47 : vector<4x64x64xf32> to vector<4x64x64xbf16>
    "tpu.trace_start"() <{level = 10 : i32, message = "bnm,bmd->bnd"}> : () -> ()
    %cst_17 = arith.constant dense<0.000000e+00> : vector<4x64x8xf32>
    %49 = tpu.matmul %48, %31, %cst_17 {dimension_numbers = #tpu.dot_dimension_numbers<[2], [1], [1], [2], [0, 0, 0, 1, 1, 2], [0], [0]>} : vector<4x64x64xbf16>, vector<4x64x8xbf16>, vector<4x64x8xf32> -> vector<4x64x8xf32>
    "tpu.trace_stop"() : () -> ()
    %50 = vector.extract_strided_slice %7 {offsets = [0, 0, 16], sizes = [4, 64, 8], strides = [1, 1, 1]} : vector<4x64x96xbf16> to vector<4x64x8xbf16>
    %51 = vector.extract_strided_slice %7 {offsets = [0, 0, 48], sizes = [4, 64, 8], strides = [1, 1, 1]} : vector<4x64x96xbf16> to vector<4x64x8xbf16>
    %52 = vector.extract_strided_slice %7 {offsets = [0, 0, 80], sizes = [4, 64, 8], strides = [1, 1, 1]} : vector<4x64x96xbf16> to vector<4x64x8xbf16>
    "tpu.trace_start"() <{level = 10 : i32, message = "bnd,bmd->bnm"}> : () -> ()
    %cst_18 = arith.constant dense<0.000000e+00> : vector<4x64x64xf32>
    %53 = tpu.matmul %50, %51, %cst_18 {dimension_numbers = #tpu.dot_dimension_numbers<[2], [2], [1], [1], [0, 0, 0, 1, 1, 1], [0], [0]>} : vector<4x64x8xbf16>, vector<4x64x8xbf16>, vector<4x64x64xf32> -> vector<4x64x64xf32>
    "tpu.trace_stop"() : () -> ()
    %c2 = arith.constant 2 : index
    %c0_19 = arith.constant 0 : index
    %c0_20 = arith.constant 0 : index
    %54 = vector.load %arg4[%c2, %c0_19, %c0_20] : memref<4x64x64xf32, #tpu.memory_space<vmem>>, vector<1x64x64xf32>
    %55 = vector.shape_cast %54 : vector<1x64x64xf32> to vector<64x64xf32>
    %56 = vector.shape_cast %55 : vector<64x64xf32> to vector<1x64x64xf32>
    %57 = vector.broadcast %56 : vector<1x64x64xf32> to vector<4x64x64xf32>
    %58 = arith.addf %53, %57 : vector<4x64x64xf32>
    %cst_21 = arith.constant dense<0xFF800000> : vector<4x64xf32>
    %59 = vector.multi_reduction <maximumf>, %58, %cst_21 [2] : vector<4x64x64xf32> to vector<4x64xf32>
    %60 = vector.shape_cast %59 : vector<4x64xf32> to vector<4x64x1xf32>
    %61 = vector.broadcast %60 : vector<4x64x1xf32> to vector<4x64x64xf32>
    %62 = arith.subf %58, %61 : vector<4x64x64xf32>
    %63 = math.exp %62 : vector<4x64x64xf32>
    %cst_22 = arith.constant dense<0.000000e+00> : vector<4x64xf32>
    %64 = vector.multi_reduction <add>, %63, %cst_22 [2] : vector<4x64x64xf32> to vector<4x64xf32>
    %65 = vector.shape_cast %64 : vector<4x64xf32> to vector<4x64x1xf32>
    %66 = tpu.reciprocal %65 {approx = true} : vector<4x64x1xf32> -> vector<4x64x1xf32>
    %67 = vector.broadcast %66 : vector<4x64x1xf32> to vector<4x64x64xf32>
    %68 = arith.mulf %63, %67 : vector<4x64x64xf32>
    %69 = arith.truncf %68 : vector<4x64x64xf32> to vector<4x64x64xbf16>
    "tpu.trace_start"() <{level = 10 : i32, message = "bnm,bmd->bnd"}> : () -> ()
    %cst_23 = arith.constant dense<0.000000e+00> : vector<4x64x8xf32>
    %70 = tpu.matmul %69, %52, %cst_23 {dimension_numbers = #tpu.dot_dimension_numbers<[2], [1], [1], [2], [0, 0, 0, 1, 1, 2], [0], [0]>} : vector<4x64x64xbf16>, vector<4x64x8xbf16>, vector<4x64x8xf32> -> vector<4x64x8xf32>
    "tpu.trace_stop"() : () -> ()
    %71 = vector.extract_strided_slice %7 {offsets = [0, 0, 24], sizes = [4, 64, 8], strides = [1, 1, 1]} : vector<4x64x96xbf16> to vector<4x64x8xbf16>
    %72 = vector.extract_strided_slice %7 {offsets = [0, 0, 56], sizes = [4, 64, 8], strides = [1, 1, 1]} : vector<4x64x96xbf16> to vector<4x64x8xbf16>
    %73 = vector.extract_strided_slice %7 {offsets = [0, 0, 88], sizes = [4, 64, 8], strides = [1, 1, 1]} : vector<4x64x96xbf16> to vector<4x64x8xbf16>
    "tpu.trace_start"() <{level = 10 : i32, message = "bnd,bmd->bnm"}> : () -> ()
    %cst_24 = arith.constant dense<0.000000e+00> : vector<4x64x64xf32>
    %74 = tpu.matmul %71, %72, %cst_24 {dimension_numbers = #tpu.dot_dimension_numbers<[2], [2], [1], [1], [0, 0, 0, 1, 1, 1], [0], [0]>} : vector<4x64x8xbf16>, vector<4x64x8xbf16>, vector<4x64x64xf32> -> vector<4x64x64xf32>
    "tpu.trace_stop"() : () -> ()
    %c3 = arith.constant 3 : index
    %c0_25 = arith.constant 0 : index
    %c0_26 = arith.constant 0 : index
    %75 = vector.load %arg4[%c3, %c0_25, %c0_26] : memref<4x64x64xf32, #tpu.memory_space<vmem>>, vector<1x64x64xf32>
    %76 = vector.shape_cast %75 : vector<1x64x64xf32> to vector<64x64xf32>
    %77 = vector.shape_cast %76 : vector<64x64xf32> to vector<1x64x64xf32>
    %78 = vector.broadcast %77 : vector<1x64x64xf32> to vector<4x64x64xf32>
    %79 = arith.addf %74, %78 : vector<4x64x64xf32>
    %cst_27 = arith.constant dense<0xFF800000> : vector<4x64xf32>
    %80 = vector.multi_reduction <maximumf>, %79, %cst_27 [2] : vector<4x64x64xf32> to vector<4x64xf32>
    %81 = vector.shape_cast %80 : vector<4x64xf32> to vector<4x64x1xf32>
    %82 = vector.broadcast %81 : vector<4x64x1xf32> to vector<4x64x64xf32>
    %83 = arith.subf %79, %82 : vector<4x64x64xf32>
    %84 = math.exp %83 : vector<4x64x64xf32>
    %cst_28 = arith.constant dense<0.000000e+00> : vector<4x64xf32>
    %85 = vector.multi_reduction <add>, %84, %cst_28 [2] : vector<4x64x64xf32> to vector<4x64xf32>
    %86 = vector.shape_cast %85 : vector<4x64xf32> to vector<4x64x1xf32>
    %87 = tpu.reciprocal %86 {approx = true} : vector<4x64x1xf32> -> vector<4x64x1xf32>
    %88 = vector.broadcast %87 : vector<4x64x1xf32> to vector<4x64x64xf32>
    %89 = arith.mulf %84, %88 : vector<4x64x64xf32>
    %90 = arith.truncf %89 : vector<4x64x64xf32> to vector<4x64x64xbf16>
    "tpu.trace_start"() <{level = 10 : i32, message = "bnm,bmd->bnd"}> : () -> ()
    %cst_29 = arith.constant dense<0.000000e+00> : vector<4x64x8xf32>
    %91 = tpu.matmul %90, %73, %cst_29 {dimension_numbers = #tpu.dot_dimension_numbers<[2], [1], [1], [2], [0, 0, 0, 1, 1, 2], [0], [0]>} : vector<4x64x64xbf16>, vector<4x64x8xbf16>, vector<4x64x8xf32> -> vector<4x64x8xf32>
    "tpu.trace_stop"() : () -> ()
    %92 = tpu.concatenate %28, %49, %70, %91 in 2 : vector<4x64x8xf32>, vector<4x64x8xf32>, vector<4x64x8xf32>, vector<4x64x8xf32> -> vector<4x64x32xf32>
    %93 = vector.shape_cast %92 : vector<4x64x32xf32> to vector<256x32xf32>
    %94 = arith.truncf %93 : vector<256x32xf32> to vector<256x32xbf16>
    %c0_30 = arith.constant 0 : index
    %c0_31 = arith.constant 0 : index
    %95 = vector.load %arg5[%c0_30, %c0_31] : memref<32x32xbf16, #tpu.memory_space<vmem>>, vector<32x32xbf16>
    %cst_32 = arith.constant dense<0.000000e+00> : vector<256x32xf32>
    %96 = tpu.matmul %94, %95, %cst_32 {dimension_numbers = #tpu.dot_dimension_numbers<[1], [0], [0], [1], [0, 0, 1, 1], [], []>} : vector<256x32xbf16>, vector<32x32xbf16>, vector<256x32xf32> -> vector<256x32xf32>
    %c0_33 = arith.constant 0 : index
    %c0_34 = arith.constant 0 : index
    %97 = vector.load %arg6[%c0_33, %c0_34] : memref<1x32xf32, #tpu.memory_space<vmem>>, vector<1x32xf32>
    %98 = vector.broadcast %97 : vector<1x32xf32> to vector<256x32xf32>
    %99 = arith.addf %96, %98 : vector<256x32xf32>
    %c0_35 = arith.constant 0 : index
    %c0_36 = arith.constant 0 : index
    %100 = vector.load %arg7[%c0_35, %c0_36] : memref<256x32xf32, #tpu.memory_space<vmem>>, vector<256x32xf32>
    tpu.vector_store %arg7[%c0_35, %c0_36], %99 {strides = array<i32>} : memref<256x32xf32, #tpu.memory_space<vmem>>, vector<256x32xf32>,
    return
  }
  func.func @transform_0(%arg0: i32) -> (i32, i32) {
    %c0_i32 = arith.constant 0 : i32
    %c0_i32_0 = arith.constant 0 : i32
    return %arg0, %c0_i32 : i32, i32
  }
  func.func @transform_1(%arg0: i32) -> (i32, i32) {
    %c0_i32 = arith.constant 0 : i32
    %c0_i32_0 = arith.constant 0 : i32
    %c0_i32_1 = arith.constant 0 : i32
    return %c0_i32, %c0_i32_0 : i32, i32
  }
  func.func @transform_2(%arg0: i32) -> (i32, i32) {
    %c0_i32 = arith.constant 0 : i32
    %c0_i32_0 = arith.constant 0 : i32
    %c0_i32_1 = arith.constant 0 : i32
    return %c0_i32, %c0_i32_0 : i32, i32
  }
  func.func @transform_3(%arg0: i32) -> (i32, i32, i32) {
    %c0_i32 = arith.constant 0 : i32
    %c0_i32_0 = arith.constant 0 : i32
    %c0_i32_1 = arith.constant 0 : i32
    %c0_i32_2 = arith.constant 0 : i32
    return %c0_i32, %c0_i32_0, %c0_i32_1 : i32, i32, i32
  }
  func.func @transform_4(%arg0: i32) -> (i32, i32) {
    %c0_i32 = arith.constant 0 : i32
    %c0_i32_0 = arith.constant 0 : i32
    %c0_i32_1 = arith.constant 0 : i32
    return %c0_i32, %c0_i32_0 : i32, i32
  }
  func.func @transform_5(%arg0: i32) -> (i32, i32) {
    %c0_i32 = arith.constant 0 : i32
    %c0_i32_0 = arith.constant 0 : i32
    %c0_i32_1 = arith.constant 0 : i32
    return %c0_i32, %c0_i32_0 : i32, i32
  }
  func.func @transform_6(%arg0: i32) -> (i32, i32) {
    %c0_i32 = arith.constant 0 : i32
    %c0_i32_0 = arith.constant 0 : i32
    return %arg0, %c0_i32 : i32, i32
  }
}

</mosaic_0001>

<llo_original>
// kernel: tpu_custom_call.1
$region0: #{tpu_custom_call.1}
  #allocation0 [shape = 'u32[]', space=smem, size = 0x4, offset = 0x4, fixed_abs, tag = 'smem constant byte address 0x4 - core index']
  #allocation1 [shape = 'u32[144,128]{1,0:T(1,128)}', space=vmem, size = 0x12000, scoped, tag = 'internal scratch']
  %s0 = inlined_call_operand.hbm [shape: bf16[256,32], index: 0, kind: input, shape index: {}]
  %s1 = inlined_call_operand.hbm [shape: bf16[32,96], index: 1, kind: input, shape index: {}]
  %s2 = inlined_call_operand.hbm [shape: f32[1,96], index: 2, kind: input, shape index: {}]
  %s3 = inlined_call_operand.hbm [shape: f32[4,64,64], index: 3, kind: input, shape index: {}]
  %s4 = inlined_call_operand.hbm [shape: bf16[32,32], index: 4, kind: input, shape index: {}]
  %s5 = inlined_call_operand.hbm [shape: f32[1,32], index: 5, kind: input, shape index: {}]
  %s6 = inlined_call_operand.hbm [shape: f32[256,32], index: 6, kind: output, shape index: {}]
  %s7 = sld [smem:[#allocation0]]
  $region58: #{tpu_custom_call.1} parent=0
    _
  %s9 = ssub.s32 1, %s7
  %s10 = scalar_select 0, %s9, %s7
  $region1: #{tpu_custom_call.1} parent=0
    #allocation2 [shape = 'u8[65536]{0}', space=vmem, size = 0x10000, scoped, tag = 'input window, operand 0, single buffered']
    #allocation3 [shape = 's32[1]{0}', space=sflag, size = 0x4, scoped, tag = 'scoped memory for tpu_custom_call.1']
    #allocation4 [shape = 's32[1]{0}', space=sflag, size = 0x4, scoped, tag = 'scoped memory for tpu_custom_call.1']
    #allocation5 [shape = 'u8[8192]{0}', space=vmem, size = 0x2000, scoped, tag = 'input window, operand 1, single buffered']
    #allocation6 [shape = 's32[1]{0}', space=sflag, size = 0x4, scoped, tag = 'scoped memory for tpu_custom_call.1']
    #allocation7 [shape = 'u8[512]{0}', space=vmem, size = 0x400, scoped, tag = 'input window, operand 2, single buffered']
    #allocation8 [shape = 'u8[131072]{0}', space=vmem, size = 0x20000, scoped, tag = 'input window, operand 3, single buffered']
    #allocation9 [shape = 's32[1]{0}', space=sflag, size = 0x4, scoped, tag = 'scoped memory for tpu_custom_call.1']
    #allocation10 [shape = 'u8[8192]{0}', space=vmem, size = 0x2000, scoped, tag = 'input window, operand 4, single buffered']
    #allocation11 [shape = 'u8[512]{0}', space=vmem, size = 0x400, scoped, tag = 'input window, operand 5, single buffered']
    #allocation12 [shape = 's32[1]{0}', space=sflag, size = 0x4, scoped, tag = 'scoped memory for tpu_custom_call.1']
    #allocation13 [shape = 'u8[131072]{0}', space=vmem, size = 0x20000, scoped, tag = 'output window, operand 0, single buffered']
    %11 = vsyncpa [#allocation3], 0
    %12 = vsyncpa [#allocation6], 0
    %13 = vsyncpa [#allocation9], 0
    %14 = vsyncpa [#allocation12], 0
    %15 = vsyncpa [#allocation4], 0
    // Predicated region
    $region2: #{tpu_custom_call.1} parent=1 // pred_check
      _
    $region3: #{tpu_custom_call.1} parent=1 // pred_check_branch
      %17 = sbr.rel (0) target = $region5
    $region4: #{tpu_custom_call.1} parent=1 // pred_region
      %s19 = ssub.s32 2048, 2048
      %20 = vsyncadd [#allocation3], %s19
      %s21 = sshll.u32 [#allocation2], 4
      %s22 = int_to_ptr.vmem [resolvable:$true] %s21
      %27 = dma.hbm_to_vmem [thread:$0]  %s0, 2048, %s22, [#allocation3], 64, 64, 4
    $region5: #{tpu_custom_call.1} parent=1 // pred_fallthru
      _
    // Predicated region
    $region6: #{tpu_custom_call.1} parent=1 // pred_check
      _
    $region7: #{tpu_custom_call.1} parent=1 // pred_check_branch
      %29 = sbr.rel (0) target = $region9
    $region8: #{tpu_custom_call.1} parent=1 // pred_region
      %s31 = ssub.s32 256, 256
      %32 = vsyncadd [#allocation6], %s31
      %s33 = sshll.u32 [#allocation5], 4
      %s34 = int_to_ptr.vmem [resolvable:$true] %s33
      %39 = dma.hbm_to_vmem [thread:$0]  %s1, 256, %s34, [#allocation6], 64, 64, 4
    $region9: #{tpu_custom_call.1} parent=1 // pred_fallthru
      _
    // Predicated region
    $region10: #{tpu_custom_call.1} parent=1 // pred_check
      _
    $region11: #{tpu_custom_call.1} parent=1 // pred_check_branch
      %41 = sbr.rel (0) target = $region13
    $region12: #{tpu_custom_call.1} parent=1 // pred_region
      %s43 = ssub.s32 16, 16
      %44 = vsyncadd [#allocation6], %s43
      %s46 = sshll.u32 [#allocation7], 4
      %s47 = int_to_ptr.vmem [resolvable:$true] %s46
      %49 = dma.hbm_to_vmem [thread:$0]  %s2, 16, %s47, [#allocation6]
    $region13: #{tpu_custom_call.1} parent=1 // pred_fallthru
      _
    // Predicated region
    $region14: #{tpu_custom_call.1} parent=1 // pred_check
      _
    $region15: #{tpu_custom_call.1} parent=1 // pred_check_branch
      %51 = sbr.rel (0) target = $region17
    $region16: #{tpu_custom_call.1} parent=1 // pred_region
      %s53 = ssub.s32 4096, 4096
      %54 = vsyncadd [#allocation9], %s53
      %s55 = sshll.u32 [#allocation8], 4
      %s56 = int_to_ptr.vmem [resolvable:$true] %s55
      %61 = dma.hbm_to_vmem [thread:$0]  %s3, 4096, %s56, [#allocation9], 128, 128, 8
    $region17: #{tpu_custom_call.1} parent=1 // pred_fallthru
      _
    // Predicated region
    $region18: #{tpu_custom_call.1} parent=1 // pred_check
      _
    $region19: #{tpu_custom_call.1} parent=1 // pred_check_branch
      %63 = sbr.rel (0) target = $region21
    $region20: #{tpu_custom_call.1} parent=1 // pred_region
      %s65 = ssub.s32 256, 256
      %66 = vsyncadd [#allocation9], %s65
      %s67 = sshll.u32 [#allocation10], 4
      %s68 = int_to_ptr.vmem [resolvable:$true] %s67
      %73 = dma.hbm_to_vmem [thread:$0]  %s4, 256, %s68, [#allocation9], 64, 64, 4
    $region21: #{tpu_custom_call.1} parent=1 // pred_fallthru
      _
    // Predicated region
    $region22: #{tpu_custom_call.1} parent=1 // pred_check
      _
    $region23: #{tpu_custom_call.1} parent=1 // pred_check_branch
      %75 = sbr.rel (0) target = $region25
    $region24: #{tpu_custom_call.1} parent=1 // pred_region
      %s77 = ssub.s32 16, 16
      %78 = vsyncadd [#allocation12], %s77
      %s80 = sshll.u32 [#allocation11], 4
      %s81 = int_to_ptr.vmem [resolvable:$true] %s80
      %83 = dma.hbm_to_vmem [thread:$0]  %s5, 16, %s81, [#allocation12]
    $region25: #{tpu_custom_call.1} parent=1 // pred_fallthru
      _
    // Predicated region
    $region26: #{tpu_custom_call.1} parent=1 // pred_check
      _
    $region27: #{tpu_custom_call.1} parent=1 // pred_check_branch
      %85 = sbr.rel (0) target = $region29
    $region28: #{tpu_custom_call.1} parent=1 // pred_region
      %86 = dma.done [#allocation3], 2048
    $region29: #{tpu_custom_call.1} parent=1 // pred_fallthru
      _
    // Predicated region
    $region30: #{tpu_custom_call.1} parent=1 // pred_check
      _
    $region31: #{tpu_custom_call.1} parent=1 // pred_check_branch
      %88 = sbr.rel (0) target = $region33
    $region32: #{tpu_custom_call.1} parent=1 // pred_region
      %89 = dma.done [#allocation6], 256
    $region33: #{tpu_custom_call.1} parent=1 // pred_fallthru
      _
    // Predicated region
    $region34: #{tpu_custom_call.1} parent=1 // pred_check
      _
    $region35: #{tpu_custom_call.1} parent=1 // pred_check_branch
      %91 = sbr.rel (0) target = $region37
    $region36: #{tpu_custom_call.1} parent=1 // pred_region
      %92 = dma.done [#allocation6], 16
    $region37: #{tpu_custom_call.1} parent=1 // pred_fallthru
      _
    // Predicated region
    $region38: #{tpu_custom_call.1} parent=1 // pred_check
      _
    $region39: #{tpu_custom_call.1} parent=1 // pred_check_branch
      %94 = sbr.rel (0) target = $region41
    $region40: #{tpu_custom_call.1} parent=1 // pred_region
      %95 = dma.done [#allocation9], 4096
    $region41: #{tpu_custom_call.1} parent=1 // pred_fallthru
      _
    // Predicated region
    $region42: #{tpu_custom_call.1} parent=1 // pred_check
      _
    $region43: #{tpu_custom_call.1} parent=1 // pred_check_branch
      %97 = sbr.rel (0) target = $region45
    $region44: #{tpu_custom_call.1} parent=1 // pred_region
      %98 = dma.done [#allocation9], 256
    $region45: #{tpu_custom_call.1} parent=1 // pred_fallthru
      _
    // Predicated region
    $region46: #{tpu_custom_call.1} parent=1 // pred_check
      _
    $region47: #{tpu_custom_call.1} parent=1 // pred_check_branch
      %100 = sbr.rel (0) target = $region49
    $region48: #{tpu_custom_call.1} parent=1 // pred_region
      %101 = dma.done [#allocation12], 16
    $region49: #{tpu_custom_call.1} parent=1 // pred_fallthru
      _
    %v103 = vld [vmem:[#allocation2] sm:$0xf]
    %v104 = vld [vmem:[#allocation2 + $0x4] sm:$0xf]
    %v105 = vld [vmem:[#allocation2 + $0x8] sm:$0xf]
    %v106 = vld [vmem:[#allocation2 + $0xc] sm:$0xf]
    %v107 = vld [vmem:[#allocation2 + $0x10] sm:$0xf]
    %v108 = vld [vmem:[#allocation2 + $0x14] sm:$0xf]
    %v109 = vld [vmem:[#allocation2 + $0x18] sm:$0xf]
    %v110 = vld [vmem:[#allocation2 + $0x1c] sm:$0xf]
    %v111 = vld [vmem:[#allocation2 + $0x20] sm:$0xf]
    %v112 = vld [vmem:[#allocation2 + $0x24] sm:$0xf]
    %v113 = vld [vmem:[#allocation2 + $0x28] sm:$0xf]
    %v114 = vld [vmem:[#allocation2 + $0x2c] sm:$0xf]
    %v115 = vld [vmem:[#allocation2 + $0x30] sm:$0xf]
    %v116 = vld [vmem:[#allocation2 + $0x34] sm:$0xf]
    %v117 = vld [vmem:[#allocation2 + $0x38] sm:$0xf]
    %v118 = vld [vmem:[#allocation2 + $0x3c] sm:$0xf]
    %v119 = vld [vmem:[#allocation2 + $0x40] sm:$0xf]
    %v120 = vld [vmem:[#allocation2 + $0x44] sm:$0xf]
    %v121 = vld [vmem:[#allocation2 + $0x48] sm:$0xf]
    %v122 = vld [vmem:[#allocation2 + $0x4c] sm:$0xf]
    %v123 = vld [vmem:[#allocation2 + $0x50] sm:$0xf]
    %v124 = vld [vmem:[#allocation2 + $0x54] sm:$0xf]
    %v125 = vld [vmem:[#allocation2 + $0x58] sm:$0xf]
    %v126 = vld [vmem:[#allocation2 + $0x5c] sm:$0xf]
    %v127 = vld [vmem:[#allocation2 + $0x60] sm:$0xf]
    %v128 = vld [vmem:[#allocation2 + $0x64] sm:$0xf]
    %v129 = vld [vmem:[#allocation2 + $0x68] sm:$0xf]
    %v130 = vld [vmem:[#allocation2 + $0x6c] sm:$0xf]
    %v131 = vld [vmem:[#allocation2 + $0x70] sm:$0xf]
    %v132 = vld [vmem:[#allocation2 + $0x74] sm:$0xf]
    %v133 = vld [vmem:[#allocation2 + $0x78] sm:$0xf]
    %v134 = vld [vmem:[#allocation2 + $0x7c] sm:$0xf]
    %v135 = vld [vmem:[#allocation5] sm:$0xf]
    %v136 = vld [vmem:[#allocation5 + $0x4] sm:$0xf]
    %v137 = vld [vmem:[#allocation5 + $0x8] sm:$0xf]
    %v138 = vld [vmem:[#allocation5 + $0xc] sm:$0xf]
    %v139 = vld [vmem:[#allocation7] sm:$0x1]
    %v141 = vlaneseq
    %v142 = vshrl.u32 %v141, 7
    %v143 = vsub.s32 0, %v142
    %v144 = vrot.slane %v139, %v143
    %v178 = vunpack.c.l.b16 %v103
    %v179 = vunpack.c.l.b16 %v104
    %v180 = vunpack.c.l.b16 %v105
    %v181 = vunpack.c.l.b16 %v106
    %v182 = vunpack.c.l.b16 %v107
    %v183 = vunpack.c.l.b16 %v108
    %v184 = vunpack.c.l.b16 %v109
    %v185 = vunpack.c.l.b16 %v110
    %v186 = vunpack.c.l.b16 %v111
    %v187 = vunpack.c.l.b16 %v112
    %v188 = vunpack.c.l.b16 %v113
    %v189 = vunpack.c.l.b16 %v114
    %v190 = vunpack.c.l.b16 %v115
    %v191 = vunpack.c.l.b16 %v116
    %v192 = vunpack.c.l.b16 %v117
    %v193 = vunpack.c.l.b16 %v118
    %v194 = vunpack.c.l.b16 %v119
    %v195 = vunpack.c.l.b16 %v120
    %v196 = vunpack.c.l.b16 %v121
    %v197 = vunpack.c.l.b16 %v122
    %v198 = vunpack.c.l.b16 %v123
    %v199 = vunpack.c.l.b16 %v124
    %v200 = vunpack.c.l.b16 %v125
    %v201 = vunpack.c.l.b16 %v126
    %v202 = vunpack.c.l.b16 %v127
    %v203 = vunpack.c.l.b16 %v128
    %v204 = vunpack.c.l.b16 %v129
    %v205 = vunpack.c.l.b16 %v130
    %v206 = vunpack.c.l.b16 %v131
    %v207 = vunpack.c.l.b16 %v132
    %v208 = vunpack.c.l.b16 %v133
    %v209 = vunpack.c.l.b16 %v134
    %v210 = vpack.c.b16 %v179, %v178
    %v211 = vpack.c.b16 %v181, %v180
    %v212 = vpack.c.b16 %v183, %v182
    %v213 = vpack.c.b16 %v185, %v184
    %v214 = vpack.c.b16 %v187, %v186
    %v215 = vpack.c.b16 %v189, %v188
    %v216 = vpack.c.b16 %v191, %v190
    %v217 = vpack.c.b16 %v193, %v192
    %v218 = vpack.c.b16 %v195, %v194
    %v219 = vpack.c.b16 %v197, %v196
    %v220 = vpack.c.b16 %v199, %v198
    %v221 = vpack.c.b16 %v201, %v200
    %v222 = vpack.c.b16 %v203, %v202
    %v223 = vpack.c.b16 %v205, %v204
    %v224 = vpack.c.b16 %v207, %v206
    %v225 = vpack.c.b16 %v209, %v208
    %v230 = vunpack.c.l.b16 %v135
    %v231 = vunpack.c.l.b16 %v136
    %v232 = vunpack.c.l.b16 %v137
    %v233 = vunpack.c.l.b16 %v138
    %v234 = vpack.c.b16 %v231, %v230
    %v235 = vpack.c.b16 %v233, %v232
    %vm238 = vcmask 261120
    %v240 = vsel %vm238, %v210, 0
    %v243 = vsel %vm238, %v211, 0
    %v246 = vsel %vm238, %v212, 0
    %v249 = vsel %vm238, %v213, 0
    %v252 = vsel %vm238, %v214, 0
    %v255 = vsel %vm238, %v215, 0
    %v258 = vsel %vm238, %v216, 0
    %v261 = vsel %vm238, %v217, 0
    %v264 = vsel %vm238, %v218, 0
    %v267 = vsel %vm238, %v219, 0
    %v270 = vsel %vm238, %v220, 0
    %v273 = vsel %vm238, %v221, 0
    %v276 = vsel %vm238, %v222, 0
    %v279 = vsel %vm238, %v223, 0
    %v282 = vsel %vm238, %v224, 0
    %v285 = vsel %vm238, %v225, 0
    %287 = vmatprep.subr.bf16.mxu0 0
    %288 = vmatpush1.bf16.msra.mxu0 %v234
    %289 = vmatprep.subr.bf16.mxu0 0
    %290 = vmatpush1.bf16.msra.mxu0 %v235
    %291 = vmatprep.subr.bf16.mxu0 0
    %292 = vmatpush1.bf16.msra.mxu0 0
    %293 = vmatprep.subr.bf16.mxu0 0
    %294 = vmatpush1.bf16.msra.mxu0 0
    %295 = vmatprep.subr.bf16.mxu0 0
    %296 = vmatpush1.bf16.msra.mxu0 0
    %297 = vmatprep.subr.bf16.mxu0 0
    %298 = vmatpush1.bf16.msra.mxu0 0
    %299 = vmatprep.subr.bf16.mxu0 0
    %300 = vmatpush1.bf16.msra.mxu0 0
    %301 = vmatprep.subr.bf16.mxu0 0
    %302 = vmatpush1.bf16.msra.mxu0 0
    %303 = vmatprep.subr.bf16.mxu0 0
    %304 = vmatpush1.bf16.msra.mxu0 0
    %305 = vmatprep.subr.bf16.mxu0 0
    %306 = vmatpush1.bf16.msra.mxu0 0
    %307 = vmatprep.subr.bf16.mxu0 0
    %308 = vmatpush1.bf16.msra.mxu0 0
    %309 = vmatprep.subr.bf16.mxu0 0
    %310 = vmatpush1.bf16.msra.mxu0 0
    %311 = vmatprep.subr.bf16.mxu0 0
    %312 = vmatpush1.bf16.msra.mxu0 0
    %313 = vmatprep.subr.bf16.mxu0 0
    %314 = vmatpush1.bf16.msra.mxu0 0
    %315 = vmatprep.subr.bf16.mxu0 0
    %316 = vmatpush1.bf16.msra.mxu0 0
    %317 = vmatprep.subr.bf16.mxu0 0
    %318 = vmatpush1.bf16.msra.mxu0 0
    %319 = vmatprep.mubr.bf16.mxu0 0
    %320 = vmatmul.mubr.bf16.gmra.mrb[0].mxu0 %v240
    %v321 = vpop.f32.mrb[0].mxu0
    %v322 = vadd.f32 %v144, %v321
    %v323 = vpop.f32.mrb[0].mxu0
    %v324 = vpop.f32.mrb[0].mxu0
    %v325 = vadd.f32 %v144, %v324
    %v326 = vpop.f32.mrb[0].mxu0
    %327 = vmatprep.mubr.bf16.mxu0 0
    %328 = vmatmul.mubr.bf16.gmra.mrb[0].mxu0 %v243
    %v329 = vpop.f32.mrb[0].mxu0
    %v330 = vadd.f32 %v144, %v329
    %v331 = vpop.f32.mrb[0].mxu0
    %v332 = vpop.f32.mrb[0].mxu0
    %v333 = vadd.f32 %v144, %v332
    %v334 = vpop.f32.mrb[0].mxu0
    %335 = vmatprep.mubr.bf16.mxu0 0
    %336 = vmatmul.mubr.bf16.gmra.mrb[0].mxu0 %v246
    %v337 = vpop.f32.mrb[0].mxu0
    %v338 = vadd.f32 %v144, %v337
    %v339 = vpop.f32.mrb[0].mxu0
    %v340 = vpop.f32.mrb[0].mxu0
    %v341 = vadd.f32 %v144, %v340
    %v342 = vpop.f32.mrb[0].mxu0
    %343 = vmatprep.mubr.bf16.mxu0 0
    %344 = vmatmul.mubr.bf16.gmra.mrb[0].mxu0 %v249
    %v345 = vpop.f32.mrb[0].mxu0
    %v346 = vadd.f32 %v144, %v345
    %v347 = vpop.f32.mrb[0].mxu0
    %v348 = vpop.f32.mrb[0].mxu0
    %v349 = vadd.f32 %v144, %v348
    %v350 = vpop.f32.mrb[0].mxu0
    %351 = vmatprep.mubr.bf16.mxu0 0
    %352 = vmatmul.mubr.bf16.gmra.mrb[0].mxu0 %v252
    %v353 = vpop.f32.mrb[0].mxu0
    %v354 = vadd.f32 %v144, %v353
    %v355 = vpop.f32.mrb[0].mxu0
    %v356 = vpop.f32.mrb[0].mxu0
    %v357 = vadd.f32 %v144, %v356
    %v358 = vpop.f32.mrb[0].mxu0
    %359 = vmatprep.mubr.bf16.mxu0 0
    %360 = vmatmul.mubr.bf16.gmra.mrb[0].mxu0 %v255
    %v361 = vpop.f32.mrb[0].mxu0
    %v362 = vadd.f32 %v144, %v361
    %v363 = vpop.f32.mrb[0].mxu0
    %v364 = vpop.f32.mrb[0].mxu0
    %v365 = vadd.f32 %v144, %v364
    %v366 = vpop.f32.mrb[0].mxu0
    %367 = vmatprep.mubr.bf16.mxu0 0
    %368 = vmatmul.mubr.bf16.gmra.mrb[0].mxu0 %v258
    %v369 = vpop.f32.mrb[0].mxu0
    %v370 = vadd.f32 %v144, %v369
    %v371 = vpop.f32.mrb[0].mxu0
    %v372 = vpop.f32.mrb[0].mxu0
    %v373 = vadd.f32 %v144, %v372
    %v374 = vpop.f32.mrb[0].mxu0
    %375 = vmatprep.mubr.bf16.mxu0 0
    %376 = vmatmul.mubr.bf16.gmra.mrb[0].mxu0 %v261
    %v377 = vpop.f32.mrb[0].mxu0
    %v378 = vadd.f32 %v144, %v377
    %v379 = vpop.f32.mrb[0].mxu0
    %v380 = vpop.f32.mrb[0].mxu0
    %v381 = vadd.f32 %v144, %v380
    %v382 = vpop.f32.mrb[0].mxu0
    %383 = vmatprep.mubr.bf16.mxu0 0
    %384 = vmatmul.mubr.bf16.gmra.mrb[0].mxu0 %v264
    %v385 = vpop.f32.mrb[0].mxu0
    %v386 = vadd.f32 %v144, %v385
    %v387 = vpop.f32.mrb[0].mxu0
    %v388 = vpop.f32.mrb[0].mxu0
    %v389 = vadd.f32 %v144, %v388
    %v390 = vpop.f32.mrb[0].mxu0
    %391 = vmatprep.mubr.bf16.mxu0 0
    %392 = vmatmul.mubr.bf16.gmra.mrb[0].mxu0 %v267
    %v393 = vpop.f32.mrb[0].mxu0
    %v394 = vadd.f32 %v144, %v393
    %v395 = vpop.f32.mrb[0].mxu0
    %v396 = vpop.f32.mrb[0].mxu0
    %v397 = vadd.f32 %v144, %v396
    %v398 = vpop.f32.mrb[0].mxu0
    %399 = vmatprep.mubr.bf16.mxu0 0
    %400 = vmatmul.mubr.bf16.gmra.mrb[0].mxu0 %v270
    %v401 = vpop.f32.mrb[0].mxu0
    %v402 = vadd.f32 %v144, %v401
    %v403 = vpop.f32.mrb[0].mxu0
    %v404 = vpop.f32.mrb[0].mxu0
    %v405 = vadd.f32 %v144, %v404
    %v406 = vpop.f32.mrb[0].mxu0
    %407 = vmatprep.mubr.bf16.mxu0 0
    %408 = vmatmul.mubr.bf16.gmra.mrb[0].mxu0 %v273
    %v409 = vpop.f32.mrb[0].mxu0
    %v410 = vadd.f32 %v144, %v409
    %v411 = vpop.f32.mrb[0].mxu0
    %v412 = vpop.f32.mrb[0].mxu0
    %v413 = vadd.f32 %v144, %v412
    %v414 = vpop.f32.mrb[0].mxu0
    %415 = vmatprep.mubr.bf16.mxu0 0
    %416 = vmatmul.mubr.bf16.gmra.mrb[0].mxu0 %v276
    %v417 = vpop.f32.mrb[0].mxu0
    %v418 = vadd.f32 %v144, %v417
    %v419 = vpop.f32.mrb[0].mxu0
    %v420 = vpop.f32.mrb[0].mxu0
    %v421 = vadd.f32 %v144, %v420
    %v422 = vpop.f32.mrb[0].mxu0
    %423 = vmatprep.mubr.bf16.mxu0 0
    %424 = vmatmul.mubr.bf16.gmra.mrb[0].mxu0 %v279
    %v425 = vpop.f32.mrb[0].mxu0
    %v426 = vadd.f32 %v144, %v425
    %v427 = vpop.f32.mrb[0].mxu0
    %v428 = vpop.f32.mrb[0].mxu0
    %v429 = vadd.f32 %v144, %v428
    %v430 = vpop.f32.mrb[0].mxu0
    %431 = vmatprep.mubr.bf16.mxu0 0
    %432 = vmatmul.mubr.bf16.gmra.mrb[0].mxu0 %v282
    %v433 = vpop.f32.mrb[0].mxu0
    %v434 = vadd.f32 %v144, %v433
    %v435 = vpop.f32.mrb[0].mxu0
    %v436 = vpop.f32.mrb[0].mxu0
    %v437 = vadd.f32 %v144, %v436
    %v438 = vpop.f32.mrb[0].mxu0
    %439 = vmatprep.mubr.bf16.mxu0 0
    %440 = vmatmul.mubr.bf16.gmra.mrb[0].mxu0 %v285
    %v441 = vpop.f32.mrb[0].mxu0
    %v442 = vadd.f32 %v144, %v441
    %v443 = vpop.f32.mrb[0].mxu0
    %v444 = vpop.f32.mrb[0].mxu0
    %v445 = vadd.f32 %v144, %v444
    %v446 = vpop.f32.mrb[0].mxu0
    %447 = vdwg.mxu0
    %v448 = vpack.c.bf16 %v325, %v322
    %v449 = vpack.c.bf16 %v333, %v330
    %v450 = vpack.c.bf16 %v341, %v338
    %v451 = vpack.c.bf16 %v349, %v346
    %v452 = vpack.c.bf16 %v357, %v354
    %v453 = vpack.c.bf16 %v365, %v362
    %v454 = vpack.c.bf16 %v373, %v370
    %v455 = vpack.c.bf16 %v381, %v378
    %v456 = vpack.c.bf16 %v389, %v386
    %v457 = vpack.c.bf16 %v397, %v394
    %v458 = vpack.c.bf16 %v405, %v402
    %v459 = vpack.c.bf16 %v413, %v410
    %v460 = vpack.c.bf16 %v421, %v418
    %v461 = vpack.c.bf16 %v429, %v426
    %v462 = vpack.c.bf16 %v437, %v434
    %v463 = vpack.c.bf16 %v445, %v442
    %v464 = vld [vmem:[#allocation8] sm:$0xff]
    %v465 = vld [vmem:[#allocation8 + $0x8] sm:$0xff]
    %v466 = vld [vmem:[#allocation8 + $0x10] sm:$0xff]
    %v467 = vld [vmem:[#allocation8 + $0x18] sm:$0xff]
    %v468 = vld [vmem:[#allocation8 + $0x20] sm:$0xff]
    %v469 = vld [vmem:[#allocation8 + $0x28] sm:$0xff]
    %v470 = vld [vmem:[#allocation8 + $0x30] sm:$0xff]
    %v471 = vld [vmem:[#allocation8 + $0x38] sm:$0xff]
    %476 = vrot.lane.b32.xlu0 %v448, 96
    %v477 = vpop.permute.xlu0 %476
    %478 = vrot.lane.b32.xlu0 %v449, 96
    %v479 = vpop.permute.xlu0 %478
    %480 = vrot.lane.b32.xlu0 %v450, 96
    %v481 = vpop.permute.xlu0 %480
    %482 = vrot.lane.b32.xlu0 %v451, 96
    %v483 = vpop.permute.xlu0 %482
    %vm484 = vcmask 64512
    %v486 = vsel %vm484, %v448, 0
    %v489 = vsel %vm484, %v449, 0
    %v492 = vsel %vm484, %v450, 0
    %v495 = vsel %vm484, %v451, 0
    %v498 = vsel %vm484, %v477, 0
    %v501 = vsel %vm484, %v479, 0
    %v504 = vsel %vm484, %v481, 0
    %v507 = vsel %vm484, %v483, 0
    %509 = vmatprep.subr.bf16.mxu0 0
    %510 = vmatpush1.bf16.xpose.msra.mxu0 %v498
    %511 = vmatprep.subr.bf16.mxu0 0
    %512 = vmatpush1.bf16.xpose.msra.mxu0 %v501
    %513 = vmatprep.subr.bf16.mxu0 0
    %514 = vmatpush1.bf16.xpose.msra.mxu0 %v504
    %515 = vmatprep.subr.bf16.mxu0 0
    %516 = vmatpush1.bf16.xpose.msra.mxu0 %v507
    %517 = vmatprep.subr.bf16.mxu0 0
    %518 = vmatpush1.bf16.xpose.msra.mxu0 0
    %519 = vmatprep.subr.bf16.mxu0 0
    %520 = vmatpush1.bf16.xpose.msra.mxu0 0
    %521 = vmatprep.subr.bf16.mxu0 0
    %522 = vmatpush1.bf16.xpose.msra.mxu0 0
    %523 = vmatprep.subr.bf16.mxu0 0
    %524 = vmatpush1.bf16.xpose.msra.mxu0 0
    %525 = vmatprep.subr.bf16.mxu0 0
    %526 = vmatpush1.bf16.xpose.msra.mxu0 0
    %527 = vmatprep.subr.bf16.mxu0 0
    %528 = vmatpush1.bf16.xpose.msra.mxu0 0
    %529 = vmatprep.subr.bf16.mxu0 0
    %530 = vmatpush1.bf16.xpose.msra.mxu0 0
    %531 = vmatprep.subr.bf16.mxu0 0
    %532 = vmatpush1.bf16.xpose.msra.mxu0 0
    %533 = vmatprep.subr.bf16.mxu0 0
    %534 = vmatpush1.bf16.xpose.msra.mxu0 0
    %535 = vmatprep.subr.bf16.mxu0 0
    %536 = vmatpush1.bf16.xpose.msra.mxu0 0
    %537 = vmatprep.subr.bf16.mxu0 0
    %538 = vmatpush1.bf16.xpose.msra.mxu0 0
    %539 = vmatprep.subr.bf16.mxu0 0
    %540 = vmatpush1.bf16.xpose.msra.mxu0 0
    %541 = vmatprep.mubr.bf16.mxu0 0
    %542 = vmatmul.mubr.bf16.gmra.mrb[0].mxu0 %v486
    %v543 = vpop.f32.mrb[0].mxu0
    %v544 = vadd.f32 %v464, %v543
    %v545 = vpop.f32.mrb[0].mxu0
    %v546 = vpop.f32.mrb[0].mxu0
    %v547 = vadd.f32 %v465, %v546
    %v548 = vpop.f32.mrb[0].mxu0
    %549 = vmatprep.mubr.bf16.mxu0 0
    %550 = vmatmul.mubr.bf16.gmra.mrb[0].mxu0 %v489
    %v551 = vpop.f32.mrb[0].mxu0
    %v552 = vadd.f32 %v466, %v551
    %v553 = vpop.f32.mrb[0].mxu0
    %v554 = vpop.f32.mrb[0].mxu0
    %v555 = vadd.f32 %v467, %v554
    %v556 = vpop.f32.mrb[0].mxu0
    %557 = vmatprep.mubr.bf16.mxu0 0
    %558 = vmatmul.mubr.bf16.gmra.mrb[0].mxu0 %v492
    %v559 = vpop.f32.mrb[0].mxu0
    %v560 = vadd.f32 %v468, %v559
    %v561 = vpop.f32.mrb[0].mxu0
    %v562 = vpop.f32.mrb[0].mxu0
    %v563 = vadd.f32 %v469, %v562
    %v564 = vpop.f32.mrb[0].mxu0
    %565 = vmatprep.mubr.bf16.mxu0 0
    %566 = vmatmul.mubr.bf16.gmra.mrb[0].mxu0 %v495
    %v567 = vpop.f32.mrb[0].mxu0
    %v568 = vadd.f32 %v470, %v567
    %v569 = vpop.f32.mrb[0].mxu0
    %v570 = vpop.f32.mrb[0].mxu0
    %v571 = vadd.f32 %v471, %v570
    %v572 = vpop.f32.mrb[0].mxu0
    %573 = vdwg.mxu0
    %578 = vrot.lane.b32.xlu0 %v452, 96
    %v579 = vpop.permute.xlu0 %578
    %580 = vrot.lane.b32.xlu0 %v453, 96
    %v581 = vpop.permute.xlu0 %580
    %582 = vrot.lane.b32.xlu0 %v454, 96
    %v583 = vpop.permute.xlu0 %582
    %584 = vrot.lane.b32.xlu0 %v455, 96
    %v585 = vpop.permute.xlu0 %584
    %v587 = vsel %vm484, %v452, 0
    %v590 = vsel %vm484, %v453, 0
    %v593 = vsel %vm484, %v454, 0
    %v596 = vsel %vm484, %v455, 0
    %v599 = vsel %vm484, %v579, 0
    %v602 = vsel %vm484, %v581, 0
    %v605 = vsel %vm484, %v583, 0
    %v608 = vsel %vm484, %v585, 0
    %610 = vmatprep.subr.bf16.mxu0 0
    %611 = vmatpush1.bf16.xpose.msra.mxu0 %v599
    %612 = vmatprep.subr.bf16.mxu0 0
    %613 = vmatpush1.bf16.xpose.msra.mxu0 %v602
    %614 = vmatprep.subr.bf16.mxu0 0
    %615 = vmatpush1.bf16.xpose.msra.mxu0 %v605
    %616 = vmatprep.subr.bf16.mxu0 0
    %617 = vmatpush1.bf16.xpose.msra.mxu0 %v608
    %618 = vmatprep.subr.bf16.mxu0 0
    %619 = vmatpush1.bf16.xpose.msra.mxu0 0
    %620 = vmatprep.subr.bf16.mxu0 0
    %621 = vmatpush1.bf16.xpose.msra.mxu0 0
    %622 = vmatprep.subr.bf16.mxu0 0
    %623 = vmatpush1.bf16.xpose.msra.mxu0 0
    %624 = vmatprep.subr.bf16.mxu0 0
    %625 = vmatpush1.bf16.xpose.msra.mxu0 0
    %626 = vmatprep.subr.bf16.mxu0 0
    %627 = vmatpush1.bf16.xpose.msra.mxu0 0
    %628 = vmatprep.subr.bf16.mxu0 0
    %629 = vmatpush1.bf16.xpose.msra.mxu0 0
    %630 = vmatprep.subr.bf16.mxu0 0
    %631 = vmatpush1.bf16.xpose.msra.mxu0 0
    %632 = vmatprep.subr.bf16.mxu0 0
    %633 = vmatpush1.bf16.xpose.msra.mxu0 0
    %634 = vmatprep.subr.bf16.mxu0 0
    %635 = vmatpush1.bf16.xpose.msra.mxu0 0
    %636 = vmatprep.subr.bf16.mxu0 0
    %637 = vmatpush1.bf16.xpose.msra.mxu0 0
    %638 = vmatprep.subr.bf16.mxu0 0
    %639 = vmatpush1.bf16.xpose.msra.mxu0 0
    %640 = vmatprep.subr.bf16.mxu0 0
    %641 = vmatpush1.bf16.xpose.msra.mxu0 0
    %642 = vmatprep.mubr.bf16.mxu0 0
    %643 = vmatmul.mubr.bf16.gmra.mrb[0].mxu0 %v587
    %v644 = vpop.f32.mrb[0].mxu0
    %v645 = vadd.f32 %v464, %v644
    %v646 = vpop.f32.mrb[0].mxu0
    %v647 = vpop.f32.mrb[0].mxu0
    %v648 = vadd.f32 %v465, %v647
    %v649 = vpop.f32.mrb[0].mxu0
    %650 = vmatprep.mubr.bf16.mxu0 0
    %651 = vmatmul.mubr.bf16.gmra.mrb[0].mxu0 %v590
    %v652 = vpop.f32.mrb[0].mxu0
    %v653 = vadd.f32 %v466, %v652
    %v654 = vpop.f32.mrb[0].mxu0
    %v655 = vpop.f32.mrb[0].mxu0
    %v656 = vadd.f32 %v467, %v655
    %v657 = vpop.f32.mrb[0].mxu0
    %658 = vmatprep.mubr.bf16.mxu0 0
    %659 = vmatmul.mubr.bf16.gmra.mrb[0].mxu0 %v593
    %v660 = vpop.f32.mrb[0].mxu0
    %v661 = vadd.f32 %v468, %v660
    %v662 = vpop.f32.mrb[0].mxu0
    %v663 = vpop.f32.mrb[0].mxu0
    %v664 = vadd.f32 %v469, %v663
    %v665 = vpop.f32.mrb[0].mxu0
    %666 = vmatprep.mubr.bf16.mxu0 0
    %667 = vmatmul.mubr.bf16.gmra.mrb[0].mxu0 %v596
    %v668 = vpop.f32.mrb[0].mxu0
    %v669 = vadd.f32 %v470, %v668
    %v670 = vpop.f32.mrb[0].mxu0
    %v671 = vpop.f32.mrb[0].mxu0
    %v672 = vadd.f32 %v471, %v671
    %v673 = vpop.f32.mrb[0].mxu0
    %674 = vdwg.mxu0
    %679 = vrot.lane.b32.xlu0 %v456, 96
    %v680 = vpop.permute.xlu0 %679
    %681 = vrot.lane.b32.xlu0 %v457, 96
    %v682 = vpop.permute.xlu0 %681
    %683 = vrot.lane.b32.xlu0 %v458, 96
    %v684 = vpop.permute.xlu0 %683
    %685 = vrot.lane.b32.xlu0 %v459, 96
    %v686 = vpop.permute.xlu0 %685
    %v688 = vsel %vm484, %v456, 0
    %v691 = vsel %vm484, %v457, 0
    %v694 = vsel %vm484, %v458, 0
    %v697 = vsel %vm484, %v459, 0
    %v700 = vsel %vm484, %v680, 0
    %v703 = vsel %vm484, %v682, 0
    %v706 = vsel %vm484, %v684, 0
    %v709 = vsel %vm484, %v686, 0
    %711 = vmatprep.subr.bf16.mxu0 0
    %712 = vmatpush1.bf16.xpose.msra.mxu0 %v700
    %713 = vmatprep.subr.bf16.mxu0 0
    %714 = vmatpush1.bf16.xpose.msra.mxu0 %v703
    %715 = vmatprep.subr.bf16.mxu0 0
    %716 = vmatpush1.bf16.xpose.msra.mxu0 %v706
    %717 = vmatprep.subr.bf16.mxu0 0
    %718 = vmatpush1.bf16.xpose.msra.mxu0 %v709
    %719 = vmatprep.subr.bf16.mxu0 0
    %720 = vmatpush1.bf16.xpose.msra.mxu0 0
    %721 = vmatprep.subr.bf16.mxu0 0
    %722 = vmatpush1.bf16.xpose.msra.mxu0 0
    %723 = vmatprep.subr.bf16.mxu0 0
    %724 = vmatpush1.bf16.xpose.msra.mxu0 0
    %725 = vmatprep.subr.bf16.mxu0 0
    %726 = vmatpush1.bf16.xpose.msra.mxu0 0
    %727 = vmatprep.subr.bf16.mxu0 0
    %728 = vmatpush1.bf16.xpose.msra.mxu0 0
    %729 = vmatprep.subr.bf16.mxu0 0
    %730 = vmatpush1.bf16.xpose.msra.mxu0 0
    %731 = vmatprep.subr.bf16.mxu0 0
    %732 = vmatpush1.bf16.xpose.msra.mxu0 0
    %733 = vmatprep.subr.bf16.mxu0 0
    %734 = vmatpush1.bf16.xpose.msra.mxu0 0
    %735 = vmatprep.subr.bf16.mxu0 0
    %736 = vmatpush1.bf16.xpose.msra.mxu0 0
    %737 = vmatprep.subr.bf16.mxu0 0
    %738 = vmatpush1.bf16.xpose.msra.mxu0 0
    %739 = vmatprep.subr.bf16.mxu0 0
    %740 = vmatpush1.bf16.xpose.msra.mxu0 0
    %741 = vmatprep.subr.bf16.mxu0 0
    %742 = vmatpush1.bf16.xpose.msra.mxu0 0
    %743 = vmatprep.mubr.bf16.mxu0 0
    %744 = vmatmul.mubr.bf16.gmra.mrb[0].mxu0 %v688
    %v745 = vpop.f32.mrb[0].mxu0
    %v746 = vadd.f32 %v464, %v745
    %v747 = vpop.f32.mrb[0].mxu0
    %v748 = vpop.f32.mrb[0].mxu0
    %v749 = vadd.f32 %v465, %v748
    %v750 = vpop.f32.mrb[0].mxu0
    %751 = vmatprep.mubr.bf16.mxu0 0
    %752 = vmatmul.mubr.bf16.gmra.mrb[0].mxu0 %v691
    %v753 = vpop.f32.mrb[0].mxu0
    %v754 = vadd.f32 %v466, %v753
    %v755 = vpop.f32.mrb[0].mxu0
    %v756 = vpop.f32.mrb[0].mxu0
    %v757 = vadd.f32 %v467, %v756
    %v758 = vpop.f32.mrb[0].mxu0
    %759 = vmatprep.mubr.bf16.mxu0 0
    %760 = vmatmul.mubr.bf16.gmra.mrb[0].mxu0 %v694
    %v761 = vpop.f32.mrb[0].mxu0
    %v762 = vadd.f32 %v468, %v761
    %v763 = vpop.f32.mrb[0].mxu0
    %v764 = vpop.f32.mrb[0].mxu0
    %v765 = vadd.f32 %v469, %v764
    %v766 = vpop.f32.mrb[0].mxu0
    %767 = vmatprep.mubr.bf16.mxu0 0
    %768 = vmatmul.mubr.bf16.gmra.mrb[0].mxu0 %v697
    %v769 = vpop.f32.mrb[0].mxu0
    %v770 = vadd.f32 %v470, %v769
    %v771 = vpop.f32.mrb[0].mxu0
    %v772 = vpop.f32.mrb[0].mxu0
    %v773 = vadd.f32 %v471, %v772
    %v774 = vpop.f32.mrb[0].mxu0
    %775 = vdwg.mxu0
    %780 = vrot.lane.b32.xlu0 %v460, 96
    %v781 = vpop.permute.xlu0 %780
    %782 = vrot.lane.b32.xlu0 %v461, 96
    %v783 = vpop.permute.xlu0 %782
    %784 = vrot.lane.b32.xlu0 %v462, 96
    %v785 = vpop.permute.xlu0 %784
    %786 = vrot.lane.b32.xlu0 %v463, 96
    %v787 = vpop.permute.xlu0 %786
    %v789 = vsel %vm484, %v460, 0
    %v792 = vsel %vm484, %v461, 0
    %v795 = vsel %vm484, %v462, 0
    %v798 = vsel %vm484, %v463, 0
    %v801 = vsel %vm484, %v781, 0
    %v804 = vsel %vm484, %v783, 0
    %v807 = vsel %vm484, %v785, 0
    %v810 = vsel %vm484, %v787, 0
    %812 = vmatprep.subr.bf16.mxu0 0
    %813 = vmatpush1.bf16.xpose.msra.mxu0 %v801
    %814 = vmatprep.subr.bf16.mxu0 0
    %815 = vmatpush1.bf16.xpose.msra.mxu0 %v804
    %816 = vmatprep.subr.bf16.mxu0 0
    %817 = vmatpush1.bf16.xpose.msra.mxu0 %v807
    %818 = vmatprep.subr.bf16.mxu0 0
    %819 = vmatpush1.bf16.xpose.msra.mxu0 %v810
    %820 = vmatprep.subr.bf16.mxu0 0
    %821 = vmatpush1.bf16.xpose.msra.mxu0 0
    %822 = vmatprep.subr.bf16.mxu0 0
    %823 = vmatpush1.bf16.xpose.msra.mxu0 0
    %824 = vmatprep.subr.bf16.mxu0 0
    %825 = vmatpush1.bf16.xpose.msra.mxu0 0
    %826 = vmatprep.subr.bf16.mxu0 0
    %827 = vmatpush1.bf16.xpose.msra.mxu0 0
    %828 = vmatprep.subr.bf16.mxu0 0
    %829 = vmatpush1.bf16.xpose.msra.mxu0 0
    %830 = vmatprep.subr.bf16.mxu0 0
    %831 = vmatpush1.bf16.xpose.msra.mxu0 0
    %832 = vmatprep.subr.bf16.mxu0 0
    %833 = vmatpush1.bf16.xpose.msra.mxu0 0
    %834 = vmatprep.subr.bf16.mxu0 0
    %835 = vmatpush1.bf16.xpose.msra.mxu0 0
    %836 = vmatprep.subr.bf16.mxu0 0
    %837 = vmatpush1.bf16.xpose.msra.mxu0 0
    %838 = vmatprep.subr.bf16.mxu0 0
    %839 = vmatpush1.bf16.xpose.msra.mxu0 0
    %840 = vmatprep.subr.bf16.mxu0 0
    %841 = vmatpush1.bf16.xpose.msra.mxu0 0
    %842 = vmatprep.subr.bf16.mxu0 0
    %843 = vmatpush1.bf16.xpose.msra.mxu0 0
    %844 = vmatprep.mubr.bf16.mxu0 0
    %845 = vmatmul.mubr.bf16.gmra.mrb[0].mxu0 %v789
    %v846 = vpop.f32.mrb[0].mxu0
    %v847 = vadd.f32 %v464, %v846
    %v848 = vpop.f32.mrb[0].mxu0
    %v849 = vpop.f32.mrb[0].mxu0
    %v850 = vadd.f32 %v465, %v849
    %v851 = vpop.f32.mrb[0].mxu0
    %852 = vmatprep.mubr.bf16.mxu0 0
    %853 = vmatmul.mubr.bf16.gmra.mrb[0].mxu0 %v792
    %v854 = vpop.f32.mrb[0].mxu0
    %v855 = vadd.f32 %v466, %v854
    %v856 = vpop.f32.mrb[0].mxu0
    %v857 = vpop.f32.mrb[0].mxu0
    %v858 = vadd.f32 %v467, %v857
    %v859 = vpop.f32.mrb[0].mxu0
    %860 = vmatprep.mubr.bf16.mxu0 0
    %861 = vmatmul.mubr.bf16.gmra.mrb[0].mxu0 %v795
    %v862 = vpop.f32.mrb[0].mxu0
    %v863 = vadd.f32 %v468, %v862
    %v864 = vpop.f32.mrb[0].mxu0
    %v865 = vpop.f32.mrb[0].mxu0
    %v866 = vadd.f32 %v469, %v865
    %v867 = vpop.f32.mrb[0].mxu0
    %868 = vmatprep.mubr.bf16.mxu0 0
    %869 = vmatmul.mubr.bf16.gmra.mrb[0].mxu0 %v798
    %v870 = vpop.f32.mrb[0].mxu0
    %v871 = vadd.f32 %v470, %v870
    %v872 = vpop.f32.mrb[0].mxu0
    %v873 = vpop.f32.mrb[0].mxu0
    %v874 = vadd.f32 %v471, %v873
    %v875 = vpop.f32.mrb[0].mxu0
    %876 = vdwg.mxu0
    %vm877 = vcmask 523264
    %v878 = vsel %vm877, %v544, -inf
    %879 = vmax.xlane.f32.xlu0 %v878
    %v880 = vpop.xlane.xlu0 %879
    %v881 = vsel %vm877, %v547, -inf
    %882 = vmax.xlane.f32.xlu0 %v881
    %v883 = vpop.xlane.xlu0 %882
    %v884 = vsel %vm877, %v552, -inf
    %885 = vmax.xlane.f32.xlu0 %v884
    %v886 = vpop.xlane.xlu0 %885
    %v887 = vsel %vm877, %v555, -inf
    %888 = vmax.xlane.f32.xlu0 %v887
    %v889 = vpop.xlane.xlu0 %888
    %v890 = vsel %vm877, %v560, -inf
    %891 = vmax.xlane.f32.xlu0 %v890
    %v892 = vpop.xlane.xlu0 %891
    %v893 = vsel %vm877, %v563, -inf
    %894 = vmax.xlane.f32.xlu0 %v893
    %v895 = vpop.xlane.xlu0 %894
    %v896 = vsel %vm877, %v568, -inf
    %897 = vmax.xlane.f32.xlu0 %v896
    %v898 = vpop.xlane.xlu0 %897
    %v899 = vsel %vm877, %v571, -inf
    %900 = vmax.xlane.f32.xlu0 %v899
    %v901 = vpop.xlane.xlu0 %900
    %v902 = vsel %vm877, %v645, -inf
    %903 = vmax.xlane.f32.xlu0 %v902
    %v904 = vpop.xlane.xlu0 %903
    %v905 = vsel %vm877, %v648, -inf
    %906 = vmax.xlane.f32.xlu0 %v905
    %v907 = vpop.xlane.xlu0 %906
    %v908 = vsel %vm877, %v653, -inf
    %909 = vmax.xlane.f32.xlu0 %v908
    %v910 = vpop.xlane.xlu0 %909
    %v911 = vsel %vm877, %v656, -inf
    %912 = vmax.xlane.f32.xlu0 %v911
    %v913 = vpop.xlane.xlu0 %912
    %v914 = vsel %vm877, %v661, -inf
    %915 = vmax.xlane.f32.xlu0 %v914
    %v916 = vpop.xlane.xlu0 %915
    %v917 = vsel %vm877, %v664, -inf
    %918 = vmax.xlane.f32.xlu0 %v917
    %v919 = vpop.xlane.xlu0 %918
    %v920 = vsel %vm877, %v669, -inf
    %921 = vmax.xlane.f32.xlu0 %v920
    %v922 = vpop.xlane.xlu0 %921
    %v923 = vsel %vm877, %v672, -inf
    %924 = vmax.xlane.f32.xlu0 %v923
    %v925 = vpop.xlane.xlu0 %924
    %v926 = vsel %vm877, %v746, -inf
    %927 = vmax.xlane.f32.xlu0 %v926
    %v928 = vpop.xlane.xlu0 %927
    %v929 = vsel %vm877, %v749, -inf
    %930 = vmax.xlane.f32.xlu0 %v929
    %v931 = vpop.xlane.xlu0 %930
    %v932 = vsel %vm877, %v754, -inf
    %933 = vmax.xlane.f32.xlu0 %v932
    %v934 = vpop.xlane.xlu0 %933
    %v935 = vsel %vm877, %v757, -inf
    %936 = vmax.xlane.f32.xlu0 %v935
    %v937 = vpop.xlane.xlu0 %936
    %v938 = vsel %vm877, %v762, -inf
    %939 = vmax.xlane.f32.xlu0 %v938
    %v940 = vpop.xlane.xlu0 %939
    %v941 = vsel %vm877, %v765, -inf
    %942 = vmax.xlane.f32.xlu0 %v941
    %v943 = vpop.xlane.xlu0 %942
    %v944 = vsel %vm877, %v770, -inf
    %945 = vmax.xlane.f32.xlu0 %v944
    %v946 = vpop.xlane.xlu0 %945
    %v947 = vsel %vm877, %v773, -inf
    %948 = vmax.xlane.f32.xlu0 %v947
    %v949 = vpop.xlane.xlu0 %948
    %v950 = vsel %vm877, %v847, -inf
    %951 = vmax.xlane.f32.xlu0 %v950
    %v952 = vpop.xlane.xlu0 %951
    %v953 = vsel %vm877, %v850, -inf
    %954 = vmax.xlane.f32.xlu0 %v953
    %v955 = vpop.xlane.xlu0 %954
    %v956 = vsel %vm877, %v855, -inf
    %957 = vmax.xlane.f32.xlu0 %v956
    %v958 = vpop.xlane.xlu0 %957
    %v959 = vsel %vm877, %v858, -inf
    %960 = vmax.xlane.f32.xlu0 %v959
    %v961 = vpop.xlane.xlu0 %960
    %v962 = vsel %vm877, %v863, -inf
    %963 = vmax.xlane.f32.xlu0 %v962
    %v964 = vpop.xlane.xlu0 %963
    %v965 = vsel %vm877, %v866, -inf
    %966 = vmax.xlane.f32.xlu0 %v965
    %v967 = vpop.xlane.xlu0 %966
    %v968 = vsel %vm877, %v871, -inf
    %969 = vmax.xlane.f32.xlu0 %v968
    %v970 = vpop.xlane.xlu0 %969
    %v971 = vsel %vm877, %v874, -inf
    %972 = vmax.xlane.f32.xlu0 %v971
    %v973 = vpop.xlane.xlu0 %972
    %v974 = vsub.f32 %v544, %v880
    %v975 = vsub.f32 %v547, %v883
    %v976 = vsub.f32 %v552, %v886
    %v977 = vsub.f32 %v555, %v889
    %v978 = vsub.f32 %v560, %v892
    %v979 = vsub.f32 %v563, %v895
    %v980 = vsub.f32 %v568, %v898
    %v981 = vsub.f32 %v571, %v901
    %v982 = vsub.f32 %v645, %v904
    %v983 = vsub.f32 %v648, %v907
    %v984 = vsub.f32 %v653, %v910
    %v985 = vsub.f32 %v656, %v913
    %v986 = vsub.f32 %v661, %v916
    %v987 = vsub.f32 %v664, %v919
    %v988 = vsub.f32 %v669, %v922
    %v989 = vsub.f32 %v672, %v925
    %v990 = vsub.f32 %v746, %v928
    %v991 = vsub.f32 %v749, %v931
    %v992 = vsub.f32 %v754, %v934
    %v993 = vsub.f32 %v757, %v937
    %v994 = vsub.f32 %v762, %v940
    %v995 = vsub.f32 %v765, %v943
    %v996 = vsub.f32 %v770, %v946
    %v997 = vsub.f32 %v773, %v949
    %v998 = vsub.f32 %v847, %v952
    %v999 = vsub.f32 %v850, %v955
    %v1000 = vsub.f32 %v855, %v958
    %v1001 = vsub.f32 %v858, %v961
    %v1002 = vsub.f32 %v863, %v964
    %v1003 = vsub.f32 %v866, %v967
    %v1004 = vsub.f32 %v871, %v970
    %v1005 = vsub.f32 %v874, %v973
    %v1006 = vmul.f32 %v974, 1.442695
    %v1007 = vpow.pop %v1006
    %v1008 = vmul.f32 %v975, 1.442695
    %v1009 = vpow.pop %v1008
    %v1010 = vmul.f32 %v976, 1.442695
    %v1011 = vpow.pop %v1010
    %v1012 = vmul.f32 %v977, 1.442695
    %v1013 = vpow.pop %v1012
    %v1014 = vmul.f32 %v978, 1.442695
    %v1015 = vpow.pop %v1014
    %v1016 = vmul.f32 %v979, 1.442695
    %v1017 = vpow.pop %v1016
    %v1018 = vmul.f32 %v980, 1.442695
    %v1019 = vpow.pop %v1018
    %v1020 = vmul.f32 %v981, 1.442695
    %v1021 = vpow.pop %v1020
    %v1022 = vmul.f32 %v982, 1.442695
    %v1023 = vpow.pop %v1022
    %v1024 = vmul.f32 %v983, 1.442695
    %v1025 = vpow.pop %v1024
    %v1026 = vmul.f32 %v984, 1.442695
    %v1027 = vpow.pop %v1026
    %v1028 = vmul.f32 %v985, 1.442695
    %v1029 = vpow.pop %v1028
    %v1030 = vmul.f32 %v986, 1.442695
    %v1031 = vpow.pop %v1030
    %v1032 = vmul.f32 %v987, 1.442695
    %v1033 = vpow.pop %v1032
    %v1034 = vmul.f32 %v988, 1.442695
    %v1035 = vpow.pop %v1034
    %v1036 = vmul.f32 %v989, 1.442695
    %v1037 = vpow.pop %v1036
    %v1038 = vmul.f32 %v990, 1.442695
    %v1039 = vpow.pop %v1038
    %v1040 = vmul.f32 %v991, 1.442695
    %v1041 = vpow.pop %v1040
    %v1042 = vmul.f32 %v992, 1.442695
    %v1043 = vpow.pop %v1042
    %v1044 = vmul.f32 %v993, 1.442695
    %v1045 = vpow.pop %v1044
    %v1046 = vmul.f32 %v994, 1.442695
    %v1047 = vpow.pop %v1046
    %v1048 = vmul.f32 %v995, 1.442695
    %v1049 = vpow.pop %v1048
    %v1050 = vmul.f32 %v996, 1.442695
    %v1051 = vpow.pop %v1050
    %v1052 = vmul.f32 %v997, 1.442695
    %v1053 = vpow.pop %v1052
    %v1054 = vmul.f32 %v998, 1.442695
    %v1055 = vpow.pop %v1054
    %v1056 = vmul.f32 %v999, 1.442695
    %v1057 = vpow.pop %v1056
    %v1058 = vmul.f32 %v1000, 1.442695
    %v1059 = vpow.pop %v1058
    %v1060 = vmul.f32 %v1001, 1.442695
    %v1061 = vpow.pop %v1060
    %v1062 = vmul.f32 %v1002, 1.442695
    %v1063 = vpow.pop %v1062
    %v1064 = vmul.f32 %v1003, 1.442695
    %v1065 = vpow.pop %v1064
    %v1066 = vmul.f32 %v1004, 1.442695
    %v1067 = vpow.pop %v1066
    %v1068 = vmul.f32 %v1005, 1.442695
    %v1069 = vpow.pop %v1068
    %v1070 = vsel %vm877, %v1007, 0.0
    %1071 = vadd.xlane.f32.xlu0 %v1070
    %v1072 = vpop.xlane.xlu0 %1071
    %v1073 = vsel %vm877, %v1009, 0.0
    %1074 = vadd.xlane.f32.xlu0 %v1073
    %v1075 = vpop.xlane.xlu0 %1074
    %v1076 = vsel %vm877, %v1011, 0.0
    %1077 = vadd.xlane.f32.xlu0 %v1076
    %v1078 = vpop.xlane.xlu0 %1077
    %v1079 = vsel %vm877, %v1013, 0.0
    %1080 = vadd.xlane.f32.xlu0 %v1079
    %v1081 = vpop.xlane.xlu0 %1080
    %v1082 = vsel %vm877, %v1015, 0.0
    %1083 = vadd.xlane.f32.xlu0 %v1082
    %v1084 = vpop.xlane.xlu0 %1083
    %v1085 = vsel %vm877, %v1017, 0.0
    %1086 = vadd.xlane.f32.xlu0 %v1085
    %v1087 = vpop.xlane.xlu0 %1086
    %v1088 = vsel %vm877, %v1019, 0.0
    %1089 = vadd.xlane.f32.xlu0 %v1088
    %v1090 = vpop.xlane.xlu0 %1089
    %v1091 = vsel %vm877, %v1021, 0.0
    %1092 = vadd.xlane.f32.xlu0 %v1091
    %v1093 = vpop.xlane.xlu0 %1092
    %v1094 = vsel %vm877, %v1023, 0.0
    %1095 = vadd.xlane.f32.xlu0 %v1094
    %v1096 = vpop.xlane.xlu0 %1095
    %v1097 = vsel %vm877, %v1025, 0.0
    %1098 = vadd.xlane.f32.xlu0 %v1097
    %v1099 = vpop.xlane.xlu0 %1098
    %v1100 = vsel %vm877, %v1027, 0.0
    %1101 = vadd.xlane.f32.xlu0 %v1100
    %v1102 = vpop.xlane.xlu0 %1101
    %v1103 = vsel %vm877, %v1029, 0.0
    %1104 = vadd.xlane.f32.xlu0 %v1103
    %v1105 = vpop.xlane.xlu0 %1104
    %v1106 = vsel %vm877, %v1031, 0.0
    %1107 = vadd.xlane.f32.xlu0 %v1106
    %v1108 = vpop.xlane.xlu0 %1107
    %v1109 = vsel %vm877, %v1033, 0.0
    %1110 = vadd.xlane.f32.xlu0 %v1109
    %v1111 = vpop.xlane.xlu0 %1110
    %v1112 = vsel %vm877, %v1035, 0.0
    %1113 = vadd.xlane.f32.xlu0 %v1112
    %v1114 = vpop.xlane.xlu0 %1113
    %v1115 = vsel %vm877, %v1037, 0.0
    %1116 = vadd.xlane.f32.xlu0 %v1115
    %v1117 = vpop.xlane.xlu0 %1116
    %v1118 = vsel %vm877, %v1039, 0.0
    %1119 = vadd.xlane.f32.xlu0 %v1118
    %v1120 = vpop.xlane.xlu0 %1119
    %v1121 = vsel %vm877, %v1041, 0.0
    %1122 = vadd.xlane.f32.xlu0 %v1121
    %v1123 = vpop.xlane.xlu0 %1122
    %v1124 = vsel %vm877, %v1043, 0.0
    %1125 = vadd.xlane.f32.xlu0 %v1124
    %v1126 = vpop.xlane.xlu0 %1125
    %v1127 = vsel %vm877, %v1045, 0.0
    %1128 = vadd.xlane.f32.xlu0 %v1127
    %v1129 = vpop.xlane.xlu0 %1128
    %v1130 = vsel %vm877, %v1047, 0.0
    %1131 = vadd.xlane.f32.xlu0 %v1130
    %v1132 = vpop.xlane.xlu0 %1131
    %v1133 = vsel %vm877, %v1049, 0.0
    %1134 = vadd.xlane.f32.xlu0 %v1133
    %v1135 = vpop.xlane.xlu0 %1134
    %v1136 = vsel %vm877, %v1051, 0.0
    %1137 = vadd.xlane.f32.xlu0 %v1136
    %v1138 = vpop.xlane.xlu0 %1137
    %v1139 = vsel %vm877, %v1053, 0.0
    %1140 = vadd.xlane.f32.xlu0 %v1139
    %v1141 = vpop.xlane.xlu0 %1140
    %v1142 = vsel %vm877, %v1055, 0.0
    %1143 = vadd.xlane.f32.xlu0 %v1142
    %v1144 = vpop.xlane.xlu0 %1143
    %v1145 = vsel %vm877, %v1057, 0.0
    %1146 = vadd.xlane.f32.xlu0 %v1145
    %v1147 = vpop.xlane.xlu0 %1146
    %v1148 = vsel %vm877, %v1059, 0.0
    %1149 = vadd.xlane.f32.xlu0 %v1148
    %v1150 = vpop.xlane.xlu0 %1149
    %v1151 = vsel %vm877, %v1061, 0.0
    %1152 = vadd.xlane.f32.xlu0 %v1151
    %v1153 = vpop.xlane.xlu0 %1152
    %v1154 = vsel %vm877, %v1063, 0.0
    %1155 = vadd.xlane.f32.xlu0 %v1154
    %v1156 = vpop.xlane.xlu0 %1155
    %v1157 = vsel %vm877, %v1065, 0.0
    %1158 = vadd.xlane.f32.xlu0 %v1157
    %v1159 = vpop.xlane.xlu0 %1158
    %v1160 = vsel %vm877, %v1067, 0.0
    %1161 = vadd.xlane.f32.xlu0 %v1160
    %v1162 = vpop.xlane.xlu0 %1161
    %v1163 = vsel %vm877, %v1069, 0.0
    %1164 = vadd.xlane.f32.xlu0 %v1163
    %v1165 = vpop.xlane.xlu0 %1164
    %v1166 = vrcp.pop %v1072
    %v1167 = vrcp.pop %v1075
    %v1168 = vrcp.pop %v1078
    %v1169 = vrcp.pop %v1081
    %v1170 = vrcp.pop %v1084
    %v1171 = vrcp.pop %v1087
    %v1172 = vrcp.pop %v1090
    %v1173 = vrcp.pop %v1093
    %v1174 = vrcp.pop %v1096
    %v1175 = vrcp.pop %v1099
    %v1176 = vrcp.pop %v1102
    %v1177 = vrcp.pop %v1105
    %v1178 = vrcp.pop %v1108
    %v1179 = vrcp.pop %v1111
    %v1180 = vrcp.pop %v1114
    %v1181 = vrcp.pop %v1117
    %v1182 = vrcp.pop %v1120
    %v1183 = vrcp.pop %v1123
    %v1184 = vrcp.pop %v1126
    %v1185 = vrcp.pop %v1129
    %v1186 = vrcp.pop %v1132
    %v1187 = vrcp.pop %v1135
    %v1188 = vrcp.pop %v1138
    %v1189 = vrcp.pop %v1141
    %v1190 = vrcp.pop %v1144
    %v1191 = vrcp.pop %v1147
    %v1192 = vrcp.pop %v1150
    %v1193 = vrcp.pop %v1153
    %v1194 = vrcp.pop %v1156
    %v1195 = vrcp.pop %v1159
    %v1196 = vrcp.pop %v1162
    %v1197 = vrcp.pop %v1165
    %v1198 = vmul.f32 %v1007, %v1166
    %v1199 = vmul.f32 %v1009, %v1167
    %v1200 = vmul.f32 %v1011, %v1168
    %v1201 = vmul.f32 %v1013, %v1169
    %v1202 = vmul.f32 %v1015, %v1170
    %v1203 = vmul.f32 %v1017, %v1171
    %v1204 = vmul.f32 %v1019, %v1172
    %v1205 = vmul.f32 %v1021, %v1173
    %v1206 = vmul.f32 %v1023, %v1174
    %v1207 = vmul.f32 %v1025, %v1175
    %v1208 = vmul.f32 %v1027, %v1176
    %v1209 = vmul.f32 %v1029, %v1177
    %v1210 = vmul.f32 %v1031, %v1178
    %v1211 = vmul.f32 %v1033, %v1179
    %v1212 = vmul.f32 %v1035, %v1180
    %v1213 = vmul.f32 %v1037, %v1181
    %v1214 = vmul.f32 %v1039, %v1182
    %v1215 = vmul.f32 %v1041, %v1183
    %v1216 = vmul.f32 %v1043, %v1184
    %v1217 = vmul.f32 %v1045, %v1185
    %v1218 = vmul.f32 %v1047, %v1186
    %v1219 = vmul.f32 %v1049, %v1187
    %v1220 = vmul.f32 %v1051, %v1188
    %v1221 = vmul.f32 %v1053, %v1189
    %v1222 = vmul.f32 %v1055, %v1190
    %v1223 = vmul.f32 %v1057, %v1191
    %v1224 = vmul.f32 %v1059, %v1192
    %v1225 = vmul.f32 %v1061, %v1193
    %v1226 = vmul.f32 %v1063, %v1194
    %v1227 = vmul.f32 %v1065, %v1195
    %v1228 = vmul.f32 %v1067, %v1196
    %v1229 = vmul.f32 %v1069, %v1197
    %v1230 = vpack.c.bf16 %v1199, %v1198
    %v1231 = vpack.c.bf16 %v1201, %v1200
    %v1232 = vpack.c.bf16 %v1203, %v1202
    %v1233 = vpack.c.bf16 %v1205, %v1204
    %v1234 = vpack.c.bf16 %v1207, %v1206
    %v1235 = vpack.c.bf16 %v1209, %v1208
    %v1236 = vpack.c.bf16 %v1211, %v1210
    %v1237 = vpack.c.bf16 %v1213, %v1212
    %v1238 = vpack.c.bf16 %v1215, %v1214
    %v1239 = vpack.c.bf16 %v1217, %v1216
    %v1240 = vpack.c.bf16 %v1219, %v1218
    %v1241 = vpack.c.bf16 %v1221, %v1220
    %v1242 = vpack.c.bf16 %v1223, %v1222
    %v1243 = vpack.c.bf16 %v1225, %v1224
    %v1244 = vpack.c.bf16 %v1227, %v1226
    %v1245 = vpack.c.bf16 %v1229, %v1228
    %1246 = vrot.lane.b32.xlu0 %v448, 64
    %v1247 = vpop.permute.xlu0 %1246
    %1248 = vrot.lane.b32.xlu0 %v449, 64
    %v1249 = vpop.permute.xlu0 %1248
    %1250 = vrot.lane.b32.xlu0 %v450, 64
    %v1251 = vpop.permute.xlu0 %1250
    %1252 = vrot.lane.b32.xlu0 %v451, 64
    %v1253 = vpop.permute.xlu0 %1252
    %v1259 = vsel %vm877, %v1230, 0
    %v1262 = vsel %vm877, %v1231, 0
    %v1265 = vsel %vm877, %v1232, 0
    %v1268 = vsel %vm877, %v1233, 0
    %1270 = vmatprep.subr.bf16.mxu0 0
    %1271 = vmatpush1.bf16.msra.mxu0 %v1247
    %1272 = vmatprep.subr.bf16.mxu0 0
    %1273 = vmatpush1.bf16.msra.mxu0 %v1249
    %1274 = vmatprep.subr.bf16.mxu0 0
    %1275 = vmatpush1.bf16.msra.mxu0 %v1251
    %1276 = vmatprep.subr.bf16.mxu0 0
    %1277 = vmatpush1.bf16.msra.mxu0 %v1253
    %1278 = vmatprep.subr.bf16.mxu0 0
    %1279 = vmatpush1.bf16.msra.mxu0 0
    %1280 = vmatprep.subr.bf16.mxu0 0
    %1281 = vmatpush1.bf16.msra.mxu0 0
    %1282 = vmatprep.subr.bf16.mxu0 0
    %1283 = vmatpush1.bf16.msra.mxu0 0
    %1284 = vmatprep.subr.bf16.mxu0 0
    %1285 = vmatpush1.bf16.msra.mxu0 0
    %1286 = vmatprep.subr.bf16.mxu0 0
    %1287 = vmatpush1.bf16.msra.mxu0 0
    %1288 = vmatprep.subr.bf16.mxu0 0
    %1289 = vmatpush1.bf16.msra.mxu0 0
    %1290 = vmatprep.subr.bf16.mxu0 0
    %1291 = vmatpush1.bf16.msra.mxu0 0
    %1292 = vmatprep.subr.bf16.mxu0 0
    %1293 = vmatpush1.bf16.msra.mxu0 0
    %1294 = vmatprep.subr.bf16.mxu0 0
    %1295 = vmatpush1.bf16.msra.mxu0 0
    %1296 = vmatprep.subr.bf16.mxu0 0
    %1297 = vmatpush1.bf16.msra.mxu0 0
    %1298 = vmatprep.subr.bf16.mxu0 0
    %1299 = vmatpush1.bf16.msra.mxu0 0
    %1300 = vmatprep.subr.bf16.mxu0 0
    %1301 = vmatpush1.bf16.msra.mxu0 0
    %1302 = vmatprep.mubr.bf16.mxu0 0
    %1303 = vmatmul.mubr.bf16.gmra.mrb[0].mxu0 %v1259
    %v1304 = vpop.f32.mrb[0].mxu0
    %v1305 = vadd.f32 0.0, %v1304
    %v1306 = vpop.f32.mrb[0].mxu0
    %v1307 = vpop.f32.mrb[0].mxu0
    %v1308 = vadd.f32 0.0, %v1307
    %v1309 = vpop.f32.mrb[0].mxu0
    %1310 = vmatprep.mubr.bf16.mxu0 0
    %1311 = vmatmul.mubr.bf16.gmra.mrb[0].mxu0 %v1262
    %v1312 = vpop.f32.mrb[0].mxu0
    %v1313 = vadd.f32 0.0, %v1312
    %v1314 = vpop.f32.mrb[0].mxu0
    %v1315 = vpop.f32.mrb[0].mxu0
    %v1316 = vadd.f32 0.0, %v1315
    %v1317 = vpop.f32.mrb[0].mxu0
    %1318 = vmatprep.mubr.bf16.mxu0 0
    %1319 = vmatmul.mubr.bf16.gmra.mrb[0].mxu0 %v1265
    %v1320 = vpop.f32.mrb[0].mxu0
    %v1321 = vadd.f32 0.0, %v1320
    %v1322 = vpop.f32.mrb[0].mxu0
    %v1323 = vpop.f32.mrb[0].mxu0
    %v1324 = vadd.f32 0.0, %v1323
    %v1325 = vpop.f32.mrb[0].mxu0
    %1326 = vmatprep.mubr.bf16.mxu0 0
    %1327 = vmatmul.mubr.bf16.gmra.mrb[0].mxu0 %v1268
    %v1328 = vpop.f32.mrb[0].mxu0
    %v1329 = vadd.f32 0.0, %v1328
    %v1330 = vpop.f32.mrb[0].mxu0
    %v1331 = vpop.f32.mrb[0].mxu0
    %v1332 = vadd.f32 0.0, %v1331
    %v1333 = vpop.f32.mrb[0].mxu0
    %1334 = vdwg.mxu0
    %1335 = vrot.lane.b32.xlu0 %v452, 64
    %v1336 = vpop.permute.xlu0 %1335
    %1337 = vrot.lane.b32.xlu0 %v453, 64
    %v1338 = vpop.permute.xlu0 %1337
    %1339 = vrot.lane.b32.xlu0 %v454, 64
    %v1340 = vpop.permute.xlu0 %1339
    %1341 = vrot.lane.b32.xlu0 %v455, 64
    %v1342 = vpop.permute.xlu0 %1341
    %v1348 = vsel %vm877, %v1234, 0
    %v1351 = vsel %vm877, %v1235, 0
    %v1354 = vsel %vm877, %v1236, 0
    %v1357 = vsel %vm877, %v1237, 0
    %1359 = vmatprep.subr.bf16.mxu0 0
    %1360 = vmatpush1.bf16.msra.mxu0 %v1336
    %1361 = vmatprep.subr.bf16.mxu0 0
    %1362 = vmatpush1.bf16.msra.mxu0 %v1338
    %1363 = vmatprep.subr.bf16.mxu0 0
    %1364 = vmatpush1.bf16.msra.mxu0 %v1340
    %1365 = vmatprep.subr.bf16.mxu0 0
    %1366 = vmatpush1.bf16.msra.mxu0 %v1342
    %1367 = vmatprep.subr.bf16.mxu0 0
    %1368 = vmatpush1.bf16.msra.mxu0 0
    %1369 = vmatprep.subr.bf16.mxu0 0
    %1370 = vmatpush1.bf16.msra.mxu0 0
    %1371 = vmatprep.subr.bf16.mxu0 0
    %1372 = vmatpush1.bf16.msra.mxu0 0
    %1373 = vmatprep.subr.bf16.mxu0 0
    %1374 = vmatpush1.bf16.msra.mxu0 0
    %1375 = vmatprep.subr.bf16.mxu0 0
    %1376 = vmatpush1.bf16.msra.mxu0 0
    %1377 = vmatprep.subr.bf16.mxu0 0
    %1378 = vmatpush1.bf16.msra.mxu0 0
    %1379 = vmatprep.subr.bf16.mxu0 0
    %1380 = vmatpush1.bf16.msra.mxu0 0
    %1381 = vmatprep.subr.bf16.mxu0 0
    %1382 = vmatpush1.bf16.msra.mxu0 0
    %1383 = vmatprep.subr.bf16.mxu0 0
    %1384 = vmatpush1.bf16.msra.mxu0 0
    %1385 = vmatprep.subr.bf16.mxu0 0
    %1386 = vmatpush1.bf16.msra.mxu0 0
    %1387 = vmatprep.subr.bf16.mxu0 0
    %1388 = vmatpush1.bf16.msra.mxu0 0
    %1389 = vmatprep.subr.bf16.mxu0 0
    %1390 = vmatpush1.bf16.msra.mxu0 0
    %1391 = vmatprep.mubr.bf16.mxu0 0
    %1392 = vmatmul.mubr.bf16.gmra.mrb[0].mxu0 %v1348
    %v1393 = vpop.f32.mrb[0].mxu0
    %v1394 = vadd.f32 0.0, %v1393
    %v1395 = vpop.f32.mrb[0].mxu0
    %v1396 = vpop.f32.mrb[0].mxu0
    %v1397 = vadd.f32 0.0, %v1396
    %v1398 = vpop.f32.mrb[0].mxu0
    %1399 = vmatprep.mubr.bf16.mxu0 0
    %1400 = vmatmul.mubr.bf16.gmra.mrb[0].mxu0 %v1351
    %v1401 = vpop.f32.mrb[0].mxu0
    %v1402 = vadd.f32 0.0, %v1401
    %v1403 = vpop.f32.mrb[0].mxu0
    %v1404 = vpop.f32.mrb[0].mxu0
    %v1405 = vadd.f32 0.0, %v1404
    %v1406 = vpop.f32.mrb[0].mxu0
    %1407 = vmatprep.mubr.bf16.mxu0 0
    %1408 = vmatmul.mubr.bf16.gmra.mrb[0].mxu0 %v1354
    %v1409 = vpop.f32.mrb[0].mxu0
    %v1410 = vadd.f32 0.0, %v1409
    %v1411 = vpop.f32.mrb[0].mxu0
    %v1412 = vpop.f32.mrb[0].mxu0
    %v1413 = vadd.f32 0.0, %v1412
    %v1414 = vpop.f32.mrb[0].mxu0
    %1415 = vmatprep.mubr.bf16.mxu0 0
    %1416 = vmatmul.mubr.bf16.gmra.mrb[0].mxu0 %v1357
    %v1417 = vpop.f32.mrb[0].mxu0
    %v1418 = vadd.f32 0.0, %v1417
    %v1419 = vpop.f32.mrb[0].mxu0
    %v1420 = vpop.f32.mrb[0].mxu0
    %v1421 = vadd.f32 0.0, %v1420
    %v1422 = vpop.f32.mrb[0].mxu0
    %1423 = vdwg.mxu0
    %1424 = vrot.lane.b32.xlu0 %v456, 64
    %v1425 = vpop.permute.xlu0 %1424
    %1426 = vrot.lane.b32.xlu0 %v457, 64
    %v1427 = vpop.permute.xlu0 %1426
    %1428 = vrot.lane.b32.xlu0 %v458, 64
    %v1429 = vpop.permute.xlu0 %1428
    %1430 = vrot.lane.b32.xlu0 %v459, 64
    %v1431 = vpop.permute.xlu0 %1430
    %v1437 = vsel %vm877, %v1238, 0
    %v1440 = vsel %vm877, %v1239, 0
    %v1443 = vsel %vm877, %v1240, 0
    %v1446 = vsel %vm877, %v1241, 0
    %1448 = vmatprep.subr.bf16.mxu0 0
    %1449 = vmatpush1.bf16.msra.mxu0 %v1425
    %1450 = vmatprep.subr.bf16.mxu0 0
    %1451 = vmatpush1.bf16.msra.mxu0 %v1427
    %1452 = vmatprep.subr.bf16.mxu0 0
    %1453 = vmatpush1.bf16.msra.mxu0 %v1429
    %1454 = vmatprep.subr.bf16.mxu0 0
    %1455 = vmatpush1.bf16.msra.mxu0 %v1431
    %1456 = vmatprep.subr.bf16.mxu0 0
    %1457 = vmatpush1.bf16.msra.mxu0 0
    %1458 = vmatprep.subr.bf16.mxu0 0
    %1459 = vmatpush1.bf16.msra.mxu0 0
    %1460 = vmatprep.subr.bf16.mxu0 0
    %1461 = vmatpush1.bf16.msra.mxu0 0
    %1462 = vmatprep.subr.bf16.mxu0 0
    %1463 = vmatpush1.bf16.msra.mxu0 0
    %1464 = vmatprep.subr.bf16.mxu0 0
    %1465 = vmatpush1.bf16.msra.mxu0 0
    %1466 = vmatprep.subr.bf16.mxu0 0
    %1467 = vmatpush1.bf16.msra.mxu0 0
    %1468 = vmatprep.subr.bf16.mxu0 0
    %1469 = vmatpush1.bf16.msra.mxu0 0
    %1470 = vmatprep.subr.bf16.mxu0 0
    %1471 = vmatpush1.bf16.msra.mxu0 0
    %1472 = vmatprep.subr.bf16.mxu0 0
    %1473 = vmatpush1.bf16.msra.mxu0 0
    %1474 = vmatprep.subr.bf16.mxu0 0
    %1475 = vmatpush1.bf16.msra.mxu0 0
    %1476 = vmatprep.subr.bf16.mxu0 0
    %1477 = vmatpush1.bf16.msra.mxu0 0
    %1478 = vmatprep.subr.bf16.mxu0 0
    %1479 = vmatpush1.bf16.msra.mxu0 0
    %1480 = vmatprep.mubr.bf16.mxu0 0
    %1481 = vmatmul.mubr.bf16.gmra.mrb[0].mxu0 %v1437
    %v1482 = vpop.f32.mrb[0].mxu0
    %v1483 = vadd.f32 0.0, %v1482
    %v1484 = vpop.f32.mrb[0].mxu0
    %v1485 = vpop.f32.mrb[0].mxu0
    %v1486 = vadd.f32 0.0, %v1485
    %v1487 = vpop.f32.mrb[0].mxu0
    %1488 = vmatprep.mubr.bf16.mxu0 0
    %1489 = vmatmul.mubr.bf16.gmra.mrb[0].mxu0 %v1440
    %v1490 = vpop.f32.mrb[0].mxu0
    %v1491 = vadd.f32 0.0, %v1490
    %v1492 = vpop.f32.mrb[0].mxu0
    %v1493 = vpop.f32.mrb[0].mxu0
    %v1494 = vadd.f32 0.0, %v1493
    %v1495 = vpop.f32.mrb[0].mxu0
    %1496 = vmatprep.mubr.bf16.mxu0 0
    %1497 = vmatmul.mubr.bf16.gmra.mrb[0].mxu0 %v1443
    %v1498 = vpop.f32.mrb[0].mxu0
    %v1499 = vadd.f32 0.0, %v1498
    %v1500 = vpop.f32.mrb[0].mxu0
    %v1501 = vpop.f32.mrb[0].mxu0
    %v1502 = vadd.f32 0.0, %v1501
    %v1503 = vpop.f32.mrb[0].mxu0
    %1504 = vmatprep.mubr.bf16.mxu0 0
    %1505 = vmatmul.mubr.bf16.gmra.mrb[0].mxu0 %v1446
    %v1506 = vpop.f32.mrb[0].mxu0
    %v1507 = vadd.f32 0.0, %v1506
    %v1508 = vpop.f32.mrb[0].mxu0
    %v1509 = vpop.f32.mrb[0].mxu0
    %v1510 = vadd.f32 0.0, %v1509
    %v1511 = vpop.f32.mrb[0].mxu0
    %1512 = vdwg.mxu0
    %1513 = vrot.lane.b32.xlu0 %v460, 64
    %v1514 = vpop.permute.xlu0 %1513
    %1515 = vrot.lane.b32.xlu0 %v461, 64
    %v1516 = vpop.permute.xlu0 %1515
    %1517 = vrot.lane.b32.xlu0 %v462, 64
    %v1518 = vpop.permute.xlu0 %1517
    %1519 = vrot.lane.b32.xlu0 %v463, 64
    %v1520 = vpop.permute.xlu0 %1519
    %v1526 = vsel %vm877, %v1242, 0
    %v1529 = vsel %vm877, %v1243, 0
    %v1532 = vsel %vm877, %v1244, 0
    %v1535 = vsel %vm877, %v1245, 0
    %1537 = vmatprep.subr.bf16.mxu0 0
    %1538 = vmatpush1.bf16.msra.mxu0 %v1514
    %1539 = vmatprep.subr.bf16.mxu0 0
    %1540 = vmatpush1.bf16.msra.mxu0 %v1516
    %1541 = vmatprep.subr.bf16.mxu0 0
    %1542 = vmatpush1.bf16.msra.mxu0 %v1518
    %1543 = vmatprep.subr.bf16.mxu0 0
    %1544 = vmatpush1.bf16.msra.mxu0 %v1520
    %1545 = vmatprep.subr.bf16.mxu0 0
    %1546 = vmatpush1.bf16.msra.mxu0 0
    %1547 = vmatprep.subr.bf16.mxu0 0
    %1548 = vmatpush1.bf16.msra.mxu0 0
    %1549 = vmatprep.subr.bf16.mxu0 0
    %1550 = vmatpush1.bf16.msra.mxu0 0
    %1551 = vmatprep.subr.bf16.mxu0 0
    %1552 = vmatpush1.bf16.msra.mxu0 0
    %1553 = vmatprep.subr.bf16.mxu0 0
    %1554 = vmatpush1.bf16.msra.mxu0 0
    %1555 = vmatprep.subr.bf16.mxu0 0
    %1556 = vmatpush1.bf16.msra.mxu0 0
    %1557 = vmatprep.subr.bf16.mxu0 0
    %1558 = vmatpush1.bf16.msra.mxu0 0
    %1559 = vmatprep.subr.bf16.mxu0 0
    %1560 = vmatpush1.bf16.msra.mxu0 0
    %1561 = vmatprep.subr.bf16.mxu0 0
    %1562 = vmatpush1.bf16.msra.mxu0 0
    %1563 = vmatprep.subr.bf16.mxu0 0
    %1564 = vmatpush1.bf16.msra.mxu0 0
    %1565 = vmatprep.subr.bf16.mxu0 0
    %1566 = vmatpush1.bf16.msra.mxu0 0
    %1567 = vmatprep.subr.bf16.mxu0 0
    %1568 = vmatpush1.bf16.msra.mxu0 0
    %1569 = vmatprep.mubr.bf16.mxu0 0
    %1570 = vmatmul.mubr.bf16.gmra.mrb[0].mxu0 %v1526
    %v1571 = vpop.f32.mrb[0].mxu0
    %v1572 = vadd.f32 0.0, %v1571
    %v1573 = vpop.f32.mrb[0].mxu0
    %v1574 = vpop.f32.mrb[0].mxu0
    %v1575 = vadd.f32 0.0, %v1574
    %v1576 = vpop.f32.mrb[0].mxu0
    %1577 = vmatprep.mubr.bf16.mxu0 0
    %1578 = vmatmul.mubr.bf16.gmra.mrb[0].mxu0 %v1529
    %v1579 = vpop.f32.mrb[0].mxu0
    %v1580 = vadd.f32 0.0, %v1579
    %v1581 = vpop.f32.mrb[0].mxu0
    %v1582 = vpop.f32.mrb[0].mxu0
    %v1583 = vadd.f32 0.0, %v1582
    %v1584 = vpop.f32.mrb[0].mxu0
    %1585 = vmatprep.mubr.bf16.mxu0 0
    %1586 = vmatmul.mubr.bf16.gmra.mrb[0].mxu0 %v1532
    %v1587 = vpop.f32.mrb[0].mxu0
    %v1588 = vadd.f32 0.0, %v1587
    %v1589 = vpop.f32.mrb[0].mxu0
    %v1590 = vpop.f32.mrb[0].mxu0
    %v1591 = vadd.f32 0.0, %v1590
    %v1592 = vpop.f32.mrb[0].mxu0
    %1593 = vmatprep.mubr.bf16.mxu0 0
    %1594 = vmatmul.mubr.bf16.gmra.mrb[0].mxu0 %v1535
    %v1595 = vpop.f32.mrb[0].mxu0
    %v1596 = vadd.f32 0.0, %v1595
    %v1597 = vpop.f32.mrb[0].mxu0
    %v1598 = vpop.f32.mrb[0].mxu0
    %v1599 = vadd.f32 0.0, %v1598
    %v1600 = vpop.f32.mrb[0].mxu0
    %1601 = vdwg.mxu0
    %s1602 = scalar_lea.vmem [#allocation8], 64
    %v1603 = vld [vmem:[%s1602] sm:$0xff]
    %v1604 = vld [vmem:[%s1602 + $0x8] sm:$0xff]
    %v1605 = vld [vmem:[%s1602 + $0x10] sm:$0xff]
    %v1606 = vld [vmem:[%s1602 + $0x18] sm:$0xff]
    %v1607 = vld [vmem:[%s1602 + $0x20] sm:$0xff]
    %v1608 = vld [vmem:[%s1602 + $0x28] sm:$0xff]
    %v1609 = vld [vmem:[%s1602 + $0x30] sm:$0xff]
    %v1610 = vld [vmem:[%s1602 + $0x38] sm:$0xff]
    %1611 = vrot.lane.b32.xlu0 %v448, 120
    %v1612 = vpop.permute.xlu0 %1611
    %1613 = vrot.lane.b32.xlu0 %v449, 120
    %v1614 = vpop.permute.xlu0 %1613
    %1615 = vrot.lane.b32.xlu0 %v450, 120
    %v1616 = vpop.permute.xlu0 %1615
    %1617 = vrot.lane.b32.xlu0 %v451, 120
    %v1618 = vpop.permute.xlu0 %1617
    %1619 = vrot.lane.b32.xlu0 %v448, 88
    %v1620 = vpop.permute.xlu0 %1619
    %1621 = vrot.lane.b32.xlu0 %v449, 88
    %v1622 = vpop.permute.xlu0 %1621
    %1623 = vrot.lane.b32.xlu0 %v450, 88
    %v1624 = vpop.permute.xlu0 %1623
    %1625 = vrot.lane.b32.xlu0 %v451, 88
    %v1626 = vpop.permute.xlu0 %1625
    %v1628 = vsel %vm484, %v1612, 0
    %v1631 = vsel %vm484, %v1614, 0
    %v1634 = vsel %vm484, %v1616, 0
    %v1637 = vsel %vm484, %v1618, 0
    %v1640 = vsel %vm484, %v1620, 0
    %v1643 = vsel %vm484, %v1622, 0
    %v1646 = vsel %vm484, %v1624, 0
    %v1649 = vsel %vm484, %v1626, 0
    %1651 = vmatprep.subr.bf16.mxu0 0
    %1652 = vmatpush1.bf16.xpose.msra.mxu0 %v1640
    %1653 = vmatprep.subr.bf16.mxu0 0
    %1654 = vmatpush1.bf16.xpose.msra.mxu0 %v1643
    %1655 = vmatprep.subr.bf16.mxu0 0
    %1656 = vmatpush1.bf16.xpose.msra.mxu0 %v1646
    %1657 = vmatprep.subr.bf16.mxu0 0
    %1658 = vmatpush1.bf16.xpose.msra.mxu0 %v1649
    %1659 = vmatprep.subr.bf16.mxu0 0
    %1660 = vmatpush1.bf16.xpose.msra.mxu0 0
    %1661 = vmatprep.subr.bf16.mxu0 0
    %1662 = vmatpush1.bf16.xpose.msra.mxu0 0
    %1663 = vmatprep.subr.bf16.mxu0 0
    %1664 = vmatpush1.bf16.xpose.msra.mxu0 0
    %1665 = vmatprep.subr.bf16.mxu0 0
    %1666 = vmatpush1.bf16.xpose.msra.mxu0 0
    %1667 = vmatprep.subr.bf16.mxu0 0
    %1668 = vmatpush1.bf16.xpose.msra.mxu0 0
    %1669 = vmatprep.subr.bf16.mxu0 0
    %1670 = vmatpush1.bf16.xpose.msra.mxu0 0
    %1671 = vmatprep.subr.bf16.mxu0 0
    %1672 = vmatpush1.bf16.xpose.msra.mxu0 0
    %1673 = vmatprep.subr.bf16.mxu0 0
    %1674 = vmatpush1.bf16.xpose.msra.mxu0 0
    %1675 = vmatprep.subr.bf16.mxu0 0
    %1676 = vmatpush1.bf16.xpose.msra.mxu0 0
    %1677 = vmatprep.subr.bf16.mxu0 0
    %1678 = vmatpush1.bf16.xpose.msra.mxu0 0
    %1679 = vmatprep.subr.bf16.mxu0 0
    %1680 = vmatpush1.bf16.xpose.msra.mxu0 0
    %1681 = vmatprep.subr.bf16.mxu0 0
    %1682 = vmatpush1.bf16.xpose.msra.mxu0 0
    %1683 = vmatprep.mubr.bf16.mxu0 0
    %1684 = vmatmul.mubr.bf16.gmra.mrb[0].mxu0 %v1628
    %v1685 = vpop.f32.mrb[0].mxu0
    %v1686 = vadd.f32 %v1603, %v1685
    %v1687 = vpop.f32.mrb[0].mxu0
    %v1688 = vpop.f32.mrb[0].mxu0
    %v1689 = vadd.f32 %v1604, %v1688
    %v1690 = vpop.f32.mrb[0].mxu0
    %1691 = vmatprep.mubr.bf16.mxu0 0
    %1692 = vmatmul.mubr.bf16.gmra.mrb[0].mxu0 %v1631
    %v1693 = vpop.f32.mrb[0].mxu0
    %v1694 = vadd.f32 %v1605, %v1693
    %v1695 = vpop.f32.mrb[0].mxu0
    %v1696 = vpop.f32.mrb[0].mxu0
    %v1697 = vadd.f32 %v1606, %v1696
    %v1698 = vpop.f32.mrb[0].mxu0
    %1699 = vmatprep.mubr.bf16.mxu0 0
    %1700 = vmatmul.mubr.bf16.gmra.mrb[0].mxu0 %v1634
    %v1701 = vpop.f32.mrb[0].mxu0
    %v1702 = vadd.f32 %v1607, %v1701
    %v1703 = vpop.f32.mrb[0].mxu0
    %v1704 = vpop.f32.mrb[0].mxu0
    %v1705 = vadd.f32 %v1608, %v1704
    %v1706 = vpop.f32.mrb[0].mxu0
    %1707 = vmatprep.mubr.bf16.mxu0 0
    %1708 = vmatmul.mubr.bf16.gmra.mrb[0].mxu0 %v1637
    %v1709 = vpop.f32.mrb[0].mxu0
    %v1710 = vadd.f32 %v1609, %v1709
    %v1711 = vpop.f32.mrb[0].mxu0
    %v1712 = vpop.f32.mrb[0].mxu0
    %v1713 = vadd.f32 %v1610, %v1712
    %v1714 = vpop.f32.mrb[0].mxu0
    %1715 = vdwg.mxu0
    %1716 = vrot.lane.b32.xlu0 %v452, 120
    %v1717 = vpop.permute.xlu0 %1716
    %1718 = vrot.lane.b32.xlu0 %v453, 120
    %v1719 = vpop.permute.xlu0 %1718
    %1720 = vrot.lane.b32.xlu0 %v454, 120
    %v1721 = vpop.permute.xlu0 %1720
    %1722 = vrot.lane.b32.xlu0 %v455, 120
    %v1723 = vpop.permute.xlu0 %1722
    %1724 = vrot.lane.b32.xlu0 %v452, 88
    %v1725 = vpop.permute.xlu0 %1724
    %1726 = vrot.lane.b32.xlu0 %v453, 88
    %v1727 = vpop.permute.xlu0 %1726
    %1728 = vrot.lane.b32.xlu0 %v454, 88
    %v1729 = vpop.permute.xlu0 %1728
    %1730 = vrot.lane.b32.xlu0 %v455, 88
    %v1731 = vpop.permute.xlu0 %1730
    %v1733 = vsel %vm484, %v1717, 0
    %v1736 = vsel %vm484, %v1719, 0
    %v1739 = vsel %vm484, %v1721, 0
    %v1742 = vsel %vm484, %v1723, 0
    %v1745 = vsel %vm484, %v1725, 0
    %v1748 = vsel %vm484, %v1727, 0
    %v1751 = vsel %vm484, %v1729, 0
    %v1754 = vsel %vm484, %v1731, 0
    %1756 = vmatprep.subr.bf16.mxu0 0
    %1757 = vmatpush1.bf16.xpose.msra.mxu0 %v1745
    %1758 = vmatprep.subr.bf16.mxu0 0
    %1759 = vmatpush1.bf16.xpose.msra.mxu0 %v1748
    %1760 = vmatprep.subr.bf16.mxu0 0
    %1761 = vmatpush1.bf16.xpose.msra.mxu0 %v1751
    %1762 = vmatprep.subr.bf16.mxu0 0
    %1763 = vmatpush1.bf16.xpose.msra.mxu0 %v1754
    %1764 = vmatprep.subr.bf16.mxu0 0
    %1765 = vmatpush1.bf16.xpose.msra.mxu0 0
    %1766 = vmatprep.subr.bf16.mxu0 0
    %1767 = vmatpush1.bf16.xpose.msra.mxu0 0
    %1768 = vmatprep.subr.bf16.mxu0 0
    %1769 = vmatpush1.bf16.xpose.msra.mxu0 0
    %1770 = vmatprep.subr.bf16.mxu0 0
    %1771 = vmatpush1.bf16.xpose.msra.mxu0 0
    %1772 = vmatprep.subr.bf16.mxu0 0
    %1773 = vmatpush1.bf16.xpose.msra.mxu0 0
    %1774 = vmatprep.subr.bf16.mxu0 0
    %1775 = vmatpush1.bf16.xpose.msra.mxu0 0
    %1776 = vmatprep.subr.bf16.mxu0 0
    %1777 = vmatpush1.bf16.xpose.msra.mxu0 0
    %1778 = vmatprep.subr.bf16.mxu0 0
    %1779 = vmatpush1.bf16.xpose.msra.mxu0 0
    %1780 = vmatprep.subr.bf16.mxu0 0
    %1781 = vmatpush1.bf16.xpose.msra.mxu0 0
    %1782 = vmatprep.subr.bf16.mxu0 0
    %1783 = vmatpush1.bf16.xpose.msra.mxu0 0
    %1784 = vmatprep.subr.bf16.mxu0 0
    %1785 = vmatpush1.bf16.xpose.msra.mxu0 0
    %1786 = vmatprep.subr.bf16.mxu0 0
    %1787 = vmatpush1.bf16.xpose.msra.mxu0 0
    %1788 = vmatprep.mubr.bf16.mxu0 0
    %1789 = vmatmul.mubr.bf16.gmra.mrb[0].mxu0 %v1733
    %v1790 = vpop.f32.mrb[0].mxu0
    %v1791 = vadd.f32 %v1603, %v1790
    %v1792 = vpop.f32.mrb[0].mxu0
    %v1793 = vpop.f32.mrb[0].mxu0
    %v1794 = vadd.f32 %v1604, %v1793
    %v1795 = vpop.f32.mrb[0].mxu0
    %1796 = vmatprep.mubr.bf16.mxu0 0
    %1797 = vmatmul.mubr.bf16.gmra.mrb[0].mxu0 %v1736
    %v1798 = vpop.f32.mrb[0].mxu0
    %v1799 = vadd.f32 %v1605, %v1798
    %v1800 = vpop.f32.mrb[0].mxu0
    %v1801 = vpop.f32.mrb[0].mxu0
    %v1802 = vadd.f32 %v1606, %v1801
    %v1803 = vpop.f32.mrb[0].mxu0
    %1804 = vmatprep.mubr.bf16.mxu0 0
    %1805 = vmatmul.mubr.bf16.gmra.mrb[0].mxu0 %v1739
    %v1806 = vpop.f32.mrb[0].mxu0
    %v1807 = vadd.f32 %v1607, %v1806
    %v1808 = vpop.f32.mrb[0].mxu0
    %v1809 = vpop.f32.mrb[0].mxu0
    %v1810 = vadd.f32 %v1608, %v1809
    %v1811 = vpop.f32.mrb[0].mxu0
    %1812 = vmatprep.mubr.bf16.mxu0 0
    %1813 = vmatmul.mubr.bf16.gmra.mrb[0].mxu0 %v1742
    %v1814 = vpop.f32.mrb[0].mxu0
    %v1815 = vadd.f32 %v1609, %v1814
    %v1816 = vpop.f32.mrb[0].mxu0
    %v1817 = vpop.f32.mrb[0].mxu0
    %v1818 = vadd.f32 %v1610, %v1817
    %v1819 = vpop.f32.mrb[0].mxu0
    %1820 = vdwg.mxu0
    %1821 = vrot.lane.b32.xlu0 %v456, 120
    %v1822 = vpop.permute.xlu0 %1821
    %1823 = vrot.lane.b32.xlu0 %v457, 120
    %v1824 = vpop.permute.xlu0 %1823
    %1825 = vrot.lane.b32.xlu0 %v458, 120
    %v1826 = vpop.permute.xlu0 %1825
    %1827 = vrot.lane.b32.xlu0 %v459, 120
    %v1828 = vpop.permute.xlu0 %1827
    %1829 = vrot.lane.b32.xlu0 %v456, 88
    %v1830 = vpop.permute.xlu0 %1829
    %1831 = vrot.lane.b32.xlu0 %v457, 88
    %v1832 = vpop.permute.xlu0 %1831
    %1833 = vrot.lane.b32.xlu0 %v458, 88
    %v1834 = vpop.permute.xlu0 %1833
    %1835 = vrot.lane.b32.xlu0 %v459, 88
    %v1836 = vpop.permute.xlu0 %1835
    %v1838 = vsel %vm484, %v1822, 0
    %v1841 = vsel %vm484, %v1824, 0
    %v1844 = vsel %vm484, %v1826, 0
    %v1847 = vsel %vm484, %v1828, 0
    %v1850 = vsel %vm484, %v1830, 0
    %v1853 = vsel %vm484, %v1832, 0
    %v1856 = vsel %vm484, %v1834, 0
    %v1859 = vsel %vm484, %v1836, 0
    %1861 = vmatprep.subr.bf16.mxu0 0
    %1862 = vmatpush1.bf16.xpose.msra.mxu0 %v1850
    %1863 = vmatprep.subr.bf16.mxu0 0
    %1864 = vmatpush1.bf16.xpose.msra.mxu0 %v1853
    %1865 = vmatprep.subr.bf16.mxu0 0
    %1866 = vmatpush1.bf16.xpose.msra.mxu0 %v1856
    %1867 = vmatprep.subr.bf16.mxu0 0
    %1868 = vmatpush1.bf16.xpose.msra.mxu0 %v1859
    %1869 = vmatprep.subr.bf16.mxu0 0
    %1870 = vmatpush1.bf16.xpose.msra.mxu0 0
    %1871 = vmatprep.subr.bf16.mxu0 0
    %1872 = vmatpush1.bf16.xpose.msra.mxu0 0
    %1873 = vmatprep.subr.bf16.mxu0 0
    %1874 = vmatpush1.bf16.xpose.msra.mxu0 0
    %1875 = vmatprep.subr.bf16.mxu0 0
    %1876 = vmatpush1.bf16.xpose.msra.mxu0 0
    %1877 = vmatprep.subr.bf16.mxu0 0
    %1878 = vmatpush1.bf16.xpose.msra.mxu0 0
    %1879 = vmatprep.subr.bf16.mxu0 0
    %1880 = vmatpush1.bf16.xpose.msra.mxu0 0
    %1881 = vmatprep.subr.bf16.mxu0 0
    %1882 = vmatpush1.bf16.xpose.msra.mxu0 0
    %1883 = vmatprep.subr.bf16.mxu0 0
    %1884 = vmatpush1.bf16.xpose.msra.mxu0 0
    %1885 = vmatprep.subr.bf16.mxu0 0
    %1886 = vmatpush1.bf16.xpose.msra.mxu0 0
    %1887 = vmatprep.subr.bf16.mxu0 0
    %1888 = vmatpush1.bf16.xpose.msra.mxu0 0
    %1889 = vmatprep.subr.bf16.mxu0 0
    %1890 = vmatpush1.bf16.xpose.msra.mxu0 0
    %1891 = vmatprep.subr.bf16.mxu0 0
    %1892 = vmatpush1.bf16.xpose.msra.mxu0 0
    %1893 = vmatprep.mubr.bf16.mxu0 0
    %1894 = vmatmul.mubr.bf16.gmra.mrb[0].mxu0 %v1838
    %v1895 = vpop.f32.mrb[0].mxu0
    %v1896 = vadd.f32 %v1603, %v1895
    %v1897 = vpop.f32.mrb[0].mxu0
    %v1898 = vpop.f32.mrb[0].mxu0
    %v1899 = vadd.f32 %v1604, %v1898
    %v1900 = vpop.f32.mrb[0].mxu0
    %1901 = vmatprep.mubr.bf16.mxu0 0
    %1902 = vmatmul.mubr.bf16.gmra.mrb[0].mxu0 %v1841
    %v1903 = vpop.f32.mrb[0].mxu0
    %v1904 = vadd.f32 %v1605, %v1903
    %v1905 = vpop.f32.mrb[0].mxu0
    %v1906 = vpop.f32.mrb[0].mxu0
    %v1907 = vadd.f32 %v1606, %v1906
    %v1908 = vpop.f32.mrb[0].mxu0
    %1909 = vmatprep.mubr.bf16.mxu0 0
    %1910 = vmatmul.mubr.bf16.gmra.mrb[0].mxu0 %v1844
    %v1911 = vpop.f32.mrb[0].mxu0
    %v1912 = vadd.f32 %v1607, %v1911
    %v1913 = vpop.f32.mrb[0].mxu0
    %v1914 = vpop.f32.mrb[0].mxu0
    %v1915 = vadd.f32 %v1608, %v1914
    %v1916 = vpop.f32.mrb[0].mxu0
    %1917 = vmatprep.mubr.bf16.mxu0 0
    %1918 = vmatmul.mubr.bf16.gmra.mrb[0].mxu0 %v1847
    %v1919 = vpop.f32.mrb[0].mxu0
    %v1920 = vadd.f32 %v1609, %v1919
    %v1921 = vpop.f32.mrb[0].mxu0
    %v1922 = vpop.f32.mrb[0].mxu0
    %v1923 = vadd.f32 %v1610, %v1922
    %v1924 = vpop.f32.mrb[0].mxu0
    %1925 = vdwg.mxu0
    %1926 = vrot.lane.b32.xlu0 %v460, 120
    %v1927 = vpop.permute.xlu0 %1926
    %1928 = vrot.lane.b32.xlu0 %v461, 120
    %v1929 = vpop.permute.xlu0 %1928
    %1930 = vrot.lane.b32.xlu0 %v462, 120
    %v1931 = vpop.permute.xlu0 %1930
    %1932 = vrot.lane.b32.xlu0 %v463, 120
    %v1933 = vpop.permute.xlu0 %1932
    %1934 = vrot.lane.b32.xlu0 %v460, 88
    %v1935 = vpop.permute.xlu0 %1934
    %1936 = vrot.lane.b32.xlu0 %v461, 88
    %v1937 = vpop.permute.xlu0 %1936
    %1938 = vrot.lane.b32.xlu0 %v462, 88
    %v1939 = vpop.permute.xlu0 %1938
    %1940 = vrot.lane.b32.xlu0 %v463, 88
    %v1941 = vpop.permute.xlu0 %1940
    %v1943 = vsel %vm484, %v1927, 0
    %v1946 = vsel %vm484, %v1929, 0
    %v1949 = vsel %vm484, %v1931, 0
    %v1952 = vsel %vm484, %v1933, 0
    %v1955 = vsel %vm484, %v1935, 0
    %v1958 = vsel %vm484, %v1937, 0
    %v1961 = vsel %vm484, %v1939, 0
    %v1964 = vsel %vm484, %v1941, 0
    %1966 = vmatprep.subr.bf16.mxu0 0
    %1967 = vmatpush1.bf16.xpose.msra.mxu0 %v1955
    %1968 = vmatprep.subr.bf16.mxu0 0
    %1969 = vmatpush1.bf16.xpose.msra.mxu0 %v1958
    %1970 = vmatprep.subr.bf16.mxu0 0
    %1971 = vmatpush1.bf16.xpose.msra.mxu0 %v1961
    %1972 = vmatprep.subr.bf16.mxu0 0
    %1973 = vmatpush1.bf16.xpose.msra.mxu0 %v1964
    %1974 = vmatprep.subr.bf16.mxu0 0
    %1975 = vmatpush1.bf16.xpose.msra.mxu0 0
    %1976 = vmatprep.subr.bf16.mxu0 0
    %1977 = vmatpush1.bf16.xpose.msra.mxu0 0
    %1978 = vmatprep.subr.bf16.mxu0 0
    %1979 = vmatpush1.bf16.xpose.msra.mxu0 0
    %1980 = vmatprep.subr.bf16.mxu0 0
    %1981 = vmatpush1.bf16.xpose.msra.mxu0 0
    %1982 = vmatprep.subr.bf16.mxu0 0
    %1983 = vmatpush1.bf16.xpose.msra.mxu0 0
    %1984 = vmatprep.subr.bf16.mxu0 0
    %1985 = vmatpush1.bf16.xpose.msra.mxu0 0
    %1986 = vmatprep.subr.bf16.mxu0 0
    %1987 = vmatpush1.bf16.xpose.msra.mxu0 0
    %1988 = vmatprep.subr.bf16.mxu0 0
    %1989 = vmatpush1.bf16.xpose.msra.mxu0 0
    %1990 = vmatprep.subr.bf16.mxu0 0
    %1991 = vmatpush1.bf16.xpose.msra.mxu0 0
    %1992 = vmatprep.subr.bf16.mxu0 0
    %1993 = vmatpush1.bf16.xpose.msra.mxu0 0
    %1994 = vmatprep.subr.bf16.mxu0 0
    %1995 = vmatpush1.bf16.xpose.msra.mxu0 0
    %1996 = vmatprep.subr.bf16.mxu0 0
    %1997 = vmatpush1.bf16.xpose.msra.mxu0 0
    %1998 = vmatprep.mubr.bf16.mxu0 0
    %1999 = vmatmul.mubr.bf16.gmra.mrb[0].mxu0 %v1943
    %v2000 = vpop.f32.mrb[0].mxu0
    %v2001 = vadd.f32 %v1603, %v2000
    %v2002 = vpop.f32.mrb[0].mxu0
    %v2003 = vpop.f32.mrb[0].mxu0
    %v2004 = vadd.f32 %v1604, %v2003
    %v2005 = vpop.f32.mrb[0].mxu0
    %2006 = vmatprep.mubr.bf16.mxu0 0
    %2007 = vmatmul.mubr.bf16.gmra.mrb[0].mxu0 %v1946
    %v2008 = vpop.f32.mrb[0].mxu0
    %v2009 = vadd.f32 %v1605, %v2008
    %v2010 = vpop.f32.mrb[0].mxu0
    %v2011 = vpop.f32.mrb[0].mxu0
    %v2012 = vadd.f32 %v1606, %v2011
    %v2013 = vpop.f32.mrb[0].mxu0
    %2014 = vmatprep.mubr.bf16.mxu0 0
    %2015 = vmatmul.mubr.bf16.gmra.mrb[0].mxu0 %v1949
    %v2016 = vpop.f32.mrb[0].mxu0
    %v2017 = vadd.f32 %v1607, %v2016
    %v2018 = vpop.f32.mrb[0].mxu0
    %v2019 = vpop.f32.mrb[0].mxu0
    %v2020 = vadd.f32 %v1608, %v2019
    %v2021 = vpop.f32.mrb[0].mxu0
    %2022 = vmatprep.mubr.bf16.mxu0 0
    %2023 = vmatmul.mubr.bf16.gmra.mrb[0].mxu0 %v1952
    %v2024 = vpop.f32.mrb[0].mxu0
    %v2025 = vadd.f32 %v1609, %v2024
    %v2026 = vpop.f32.mrb[0].mxu0
    %v2027 = vpop.f32.mrb[0].mxu0
    %v2028 = vadd.f32 %v1610, %v2027
    %v2029 = vpop.f32.mrb[0].mxu0
    %2030 = vdwg.mxu0
    %v2031 = vsel %vm877, %v1686, -inf
    %2032 = vmax.xlane.f32.xlu0 %v2031
    %v2033 = vpop.xlane.xlu0 %2032
    %v2034 = vsel %vm877, %v1689, -inf
    %2035 = vmax.xlane.f32.xlu0 %v2034
    %v2036 = vpop.xlane.xlu0 %2035
    %v2037 = vsel %vm877, %v1694, -inf
    %2038 = vmax.xlane.f32.xlu0 %v2037
    %v2039 = vpop.xlane.xlu0 %2038
    %v2040 = vsel %vm877, %v1697, -inf
    %2041 = vmax.xlane.f32.xlu0 %v2040
    %v2042 = vpop.xlane.xlu0 %2041
    %v2043 = vsel %vm877, %v1702, -inf
    %2044 = vmax.xlane.f32.xlu0 %v2043
    %v2045 = vpop.xlane.xlu0 %2044
    %v2046 = vsel %vm877, %v1705, -inf
    %2047 = vmax.xlane.f32.xlu0 %v2046
    %v2048 = vpop.xlane.xlu0 %2047
    %v2049 = vsel %vm877, %v1710, -inf
    %2050 = vmax.xlane.f32.xlu0 %v2049
    %v2051 = vpop.xlane.xlu0 %2050
    %v2052 = vsel %vm877, %v1713, -inf
    %2053 = vmax.xlane.f32.xlu0 %v2052
    %v2054 = vpop.xlane.xlu0 %2053
    %v2055 = vsel %vm877, %v1791, -inf
    %2056 = vmax.xlane.f32.xlu0 %v2055
    %v2057 = vpop.xlane.xlu0 %2056
    %v2058 = vsel %vm877, %v1794, -inf
    %2059 = vmax.xlane.f32.xlu0 %v2058
    %v2060 = vpop.xlane.xlu0 %2059
    %v2061 = vsel %vm877, %v1799, -inf
    %2062 = vmax.xlane.f32.xlu0 %v2061
    %v2063 = vpop.xlane.xlu0 %2062
    %v2064 = vsel %vm877, %v1802, -inf
    %2065 = vmax.xlane.f32.xlu0 %v2064
    %v2066 = vpop.xlane.xlu0 %2065
    %v2067 = vsel %vm877, %v1807, -inf
    %2068 = vmax.xlane.f32.xlu0 %v2067
    %v2069 = vpop.xlane.xlu0 %2068
    %v2070 = vsel %vm877, %v1810, -inf
    %2071 = vmax.xlane.f32.xlu0 %v2070
    %v2072 = vpop.xlane.xlu0 %2071
    %v2073 = vsel %vm877, %v1815, -inf
    %2074 = vmax.xlane.f32.xlu0 %v2073
    %v2075 = vpop.xlane.xlu0 %2074
    %v2076 = vsel %vm877, %v1818, -inf
    %2077 = vmax.xlane.f32.xlu0 %v2076
    %v2078 = vpop.xlane.xlu0 %2077
    %v2079 = vsel %vm877, %v1896, -inf
    %2080 = vmax.xlane.f32.xlu0 %v2079
    %v2081 = vpop.xlane.xlu0 %2080
    %v2082 = vsel %vm877, %v1899, -inf
    %2083 = vmax.xlane.f32.xlu0 %v2082
    %v2084 = vpop.xlane.xlu0 %2083
    %v2085 = vsel %vm877, %v1904, -inf
    %2086 = vmax.xlane.f32.xlu0 %v2085
    %v2087 = vpop.xlane.xlu0 %2086
    %v2088 = vsel %vm877, %v1907, -inf
    %2089 = vmax.xlane.f32.xlu0 %v2088
    %v2090 = vpop.xlane.xlu0 %2089
    %v2091 = vsel %vm877, %v1912, -inf
    %2092 = vmax.xlane.f32.xlu0 %v2091
    %v2093 = vpop.xlane.xlu0 %2092
    %v2094 = vsel %vm877, %v1915, -inf
    %2095 = vmax.xlane.f32.xlu0 %v2094
    %v2096 = vpop.xlane.xlu0 %2095
    %v2097 = vsel %vm877, %v1920, -inf
    %2098 = vmax.xlane.f32.xlu0 %v2097
    %v2099 = vpop.xlane.xlu0 %2098
    %v2100 = vsel %vm877, %v1923, -inf
    %2101 = vmax.xlane.f32.xlu0 %v2100
    %v2102 = vpop.xlane.xlu0 %2101
    %v2103 = vsel %vm877, %v2001, -inf
    %2104 = vmax.xlane.f32.xlu0 %v2103
    %v2105 = vpop.xlane.xlu0 %2104
    %v2106 = vsel %vm877, %v2004, -inf
    %2107 = vmax.xlane.f32.xlu0 %v2106
    %v2108 = vpop.xlane.xlu0 %2107
    %v2109 = vsel %vm877, %v2009, -inf
    %2110 = vmax.xlane.f32.xlu0 %v2109
    %v2111 = vpop.xlane.xlu0 %2110
    %v2112 = vsel %vm877, %v2012, -inf
    %2113 = vmax.xlane.f32.xlu0 %v2112
    %v2114 = vpop.xlane.xlu0 %2113
    %v2115 = vsel %vm877, %v2017, -inf
    %2116 = vmax.xlane.f32.xlu0 %v2115
    %v2117 = vpop.xlane.xlu0 %2116
    %v2118 = vsel %vm877, %v2020, -inf
    %2119 = vmax.xlane.f32.xlu0 %v2118
    %v2120 = vpop.xlane.xlu0 %2119
    %v2121 = vsel %vm877, %v2025, -inf
    %2122 = vmax.xlane.f32.xlu0 %v2121
    %v2123 = vpop.xlane.xlu0 %2122
    %v2124 = vsel %vm877, %v2028, -inf
    %2125 = vmax.xlane.f32.xlu0 %v2124
    %v2126 = vpop.xlane.xlu0 %2125
    %v2127 = vsub.f32 %v1686, %v2033
    %v2128 = vsub.f32 %v1689, %v2036
    %v2129 = vsub.f32 %v1694, %v2039
    %v2130 = vsub.f32 %v1697, %v2042
    %v2131 = vsub.f32 %v1702, %v2045
    %v2132 = vsub.f32 %v1705, %v2048
    %v2133 = vsub.f32 %v1710, %v2051
    %v2134 = vsub.f32 %v1713, %v2054
    %v2135 = vsub.f32 %v1791, %v2057
    %v2136 = vsub.f32 %v1794, %v2060
    %v2137 = vsub.f32 %v1799, %v2063
    %v2138 = vsub.f32 %v1802, %v2066
    %v2139 = vsub.f32 %v1807, %v2069
    %v2140 = vsub.f32 %v1810, %v2072
    %v2141 = vsub.f32 %v1815, %v2075
    %v2142 = vsub.f32 %v1818, %v2078
    %v2143 = vsub.f32 %v1896, %v2081
    %v2144 = vsub.f32 %v1899, %v2084
    %v2145 = vsub.f32 %v1904, %v2087
    %v2146 = vsub.f32 %v1907, %v2090
    %v2147 = vsub.f32 %v1912, %v2093
    %v2148 = vsub.f32 %v1915, %v2096
    %v2149 = vsub.f32 %v1920, %v2099
    %v2150 = vsub.f32 %v1923, %v2102
    %v2151 = vsub.f32 %v2001, %v2105
    %v2152 = vsub.f32 %v2004, %v2108
    %v2153 = vsub.f32 %v2009, %v2111
    %v2154 = vsub.f32 %v2012, %v2114
    %v2155 = vsub.f32 %v2017, %v2117
    %v2156 = vsub.f32 %v2020, %v2120
    %v2157 = vsub.f32 %v2025, %v2123
    %v2158 = vsub.f32 %v2028, %v2126
    %v2159 = vmul.f32 %v2127, 1.442695
    %v2160 = vpow.pop %v2159
    %v2161 = vmul.f32 %v2128, 1.442695
    %v2162 = vpow.pop %v2161
    %v2163 = vmul.f32 %v2129, 1.442695
    %v2164 = vpow.pop %v2163
    %v2165 = vmul.f32 %v2130, 1.442695
    %v2166 = vpow.pop %v2165
    %v2167 = vmul.f32 %v2131, 1.442695
    %v2168 = vpow.pop %v2167
    %v2169 = vmul.f32 %v2132, 1.442695
    %v2170 = vpow.pop %v2169
    %v2171 = vmul.f32 %v2133, 1.442695
    %v2172 = vpow.pop %v2171
    %v2173 = vmul.f32 %v2134, 1.442695
    %v2174 = vpow.pop %v2173
    %v2175 = vmul.f32 %v2135, 1.442695
    %v2176 = vpow.pop %v2175
    %v2177 = vmul.f32 %v2136, 1.442695
    %v2178 = vpow.pop %v2177
    %v2179 = vmul.f32 %v2137, 1.442695
    %v2180 = vpow.pop %v2179
    %v2181 = vmul.f32 %v2138, 1.442695
    %v2182 = vpow.pop %v2181
    %v2183 = vmul.f32 %v2139, 1.442695
    %v2184 = vpow.pop %v2183
    %v2185 = vmul.f32 %v2140, 1.442695
    %v2186 = vpow.pop %v2185
    %v2187 = vmul.f32 %v2141, 1.442695
    %v2188 = vpow.pop %v2187
    %v2189 = vmul.f32 %v2142, 1.442695
    %v2190 = vpow.pop %v2189
    %v2191 = vmul.f32 %v2143, 1.442695
    %v2192 = vpow.pop %v2191
    %v2193 = vmul.f32 %v2144, 1.442695
    %v2194 = vpow.pop %v2193
    %v2195 = vmul.f32 %v2145, 1.442695
    %v2196 = vpow.pop %v2195
    %v2197 = vmul.f32 %v2146, 1.442695
    %v2198 = vpow.pop %v2197
    %v2199 = vmul.f32 %v2147, 1.442695
    %v2200 = vpow.pop %v2199
    %v2201 = vmul.f32 %v2148, 1.442695
    %v2202 = vpow.pop %v2201
    %v2203 = vmul.f32 %v2149, 1.442695
    %v2204 = vpow.pop %v2203
    %v2205 = vmul.f32 %v2150, 1.442695
    %v2206 = vpow.pop %v2205
    %v2207 = vmul.f32 %v2151, 1.442695
    %v2208 = vpow.pop %v2207
    %v2209 = vmul.f32 %v2152, 1.442695
    %v2210 = vpow.pop %v2209
    %v2211 = vmul.f32 %v2153, 1.442695
    %v2212 = vpow.pop %v2211
    %v2213 = vmul.f32 %v2154, 1.442695
    %v2214 = vpow.pop %v2213
    %v2215 = vmul.f32 %v2155, 1.442695
    %v2216 = vpow.pop %v2215
    %v2217 = vmul.f32 %v2156, 1.442695
    %v2218 = vpow.pop %v2217
    %v2219 = vmul.f32 %v2157, 1.442695
    %v2220 = vpow.pop %v2219
    %v2221 = vmul.f32 %v2158, 1.442695
    %v2222 = vpow.pop %v2221
    %v2223 = vsel %vm877, %v2160, 0.0
    %2224 = vadd.xlane.f32.xlu0 %v2223
    %v2225 = vpop.xlane.xlu0 %2224
    %v2226 = vsel %vm877, %v2162, 0.0
    %2227 = vadd.xlane.f32.xlu0 %v2226
    %v2228 = vpop.xlane.xlu0 %2227
    %v2229 = vsel %vm877, %v2164, 0.0
    %2230 = vadd.xlane.f32.xlu0 %v2229
    %v2231 = vpop.xlane.xlu0 %2230
    %v2232 = vsel %vm877, %v2166, 0.0
    %2233 = vadd.xlane.f32.xlu0 %v2232
    %v2234 = vpop.xlane.xlu0 %2233
    %v2235 = vsel %vm877, %v2168, 0.0
    %2236 = vadd.xlane.f32.xlu0 %v2235
    %v2237 = vpop.xlane.xlu0 %2236
    %v2238 = vsel %vm877, %v2170, 0.0
    %2239 = vadd.xlane.f32.xlu0 %v2238
    %v2240 = vpop.xlane.xlu0 %2239
    %v2241 = vsel %vm877, %v2172, 0.0
    %2242 = vadd.xlane.f32.xlu0 %v2241
    %v2243 = vpop.xlane.xlu0 %2242
    %v2244 = vsel %vm877, %v2174, 0.0
    %2245 = vadd.xlane.f32.xlu0 %v2244
    %v2246 = vpop.xlane.xlu0 %2245
    %v2247 = vsel %vm877, %v2176, 0.0
    %2248 = vadd.xlane.f32.xlu0 %v2247
    %v2249 = vpop.xlane.xlu0 %2248
    %v2250 = vsel %vm877, %v2178, 0.0
    %2251 = vadd.xlane.f32.xlu0 %v2250
    %v2252 = vpop.xlane.xlu0 %2251
    %v2253 = vsel %vm877, %v2180, 0.0
    %2254 = vadd.xlane.f32.xlu0 %v2253
    %v2255 = vpop.xlane.xlu0 %2254
    %v2256 = vsel %vm877, %v2182, 0.0
    %2257 = vadd.xlane.f32.xlu0 %v2256
    %v2258 = vpop.xlane.xlu0 %2257
    %v2259 = vsel %vm877, %v2184, 0.0
    %2260 = vadd.xlane.f32.xlu0 %v2259
    %v2261 = vpop.xlane.xlu0 %2260
    %v2262 = vsel %vm877, %v2186, 0.0
    %2263 = vadd.xlane.f32.xlu0 %v2262
    %v2264 = vpop.xlane.xlu0 %2263
    %v2265 = vsel %vm877, %v2188, 0.0
    %2266 = vadd.xlane.f32.xlu0 %v2265
    %v2267 = vpop.xlane.xlu0 %2266
    %v2268 = vsel %vm877, %v2190, 0.0
    %2269 = vadd.xlane.f32.xlu0 %v2268
    %v2270 = vpop.xlane.xlu0 %2269
    %v2271 = vsel %vm877, %v2192, 0.0
    %2272 = vadd.xlane.f32.xlu0 %v2271
    %v2273 = vpop.xlane.xlu0 %2272
    %v2274 = vsel %vm877, %v2194, 0.0
    %2275 = vadd.xlane.f32.xlu0 %v2274
    %v2276 = vpop.xlane.xlu0 %2275
    %v2277 = vsel %vm877, %v2196, 0.0
    %2278 = vadd.xlane.f32.xlu0 %v2277
    %v2279 = vpop.xlane.xlu0 %2278
    %v2280 = vsel %vm877, %v2198, 0.0
    %2281 = vadd.xlane.f32.xlu0 %v2280
    %v2282 = vpop.xlane.xlu0 %2281
    %v2283 = vsel %vm877, %v2200, 0.0
    %2284 = vadd.xlane.f32.xlu0 %v2283
    %v2285 = vpop.xlane.xlu0 %2284
    %v2286 = vsel %vm877, %v2202, 0.0
    %2287 = vadd.xlane.f32.xlu0 %v2286
    %v2288 = vpop.xlane.xlu0 %2287
    %v2289 = vsel %vm877, %v2204, 0.0
    %2290 = vadd.xlane.f32.xlu0 %v2289
    %v2291 = vpop.xlane.xlu0 %2290
    %v2292 = vsel %vm877, %v2206, 0.0
    %2293 = vadd.xlane.f32.xlu0 %v2292
    %v2294 = vpop.xlane.xlu0 %2293
    %v2295 = vsel %vm877, %v2208, 0.0
    %2296 = vadd.xlane.f32.xlu0 %v2295
    %v2297 = vpop.xlane.xlu0 %2296
    %v2298 = vsel %vm877, %v2210, 0.0
    %2299 = vadd.xlane.f32.xlu0 %v2298
    %v2300 = vpop.xlane.xlu0 %2299
    %v2301 = vsel %vm877, %v2212, 0.0
    %2302 = vadd.xlane.f32.xlu0 %v2301
    %v2303 = vpop.xlane.xlu0 %2302
    %v2304 = vsel %vm877, %v2214, 0.0
    %2305 = vadd.xlane.f32.xlu0 %v2304
    %v2306 = vpop.xlane.xlu0 %2305
    %v2307 = vsel %vm877, %v2216, 0.0
    %2308 = vadd.xlane.f32.xlu0 %v2307
    %v2309 = vpop.xlane.xlu0 %2308
    %v2310 = vsel %vm877, %v2218, 0.0
    %2311 = vadd.xlane.f32.xlu0 %v2310
    %v2312 = vpop.xlane.xlu0 %2311
    %v2313 = vsel %vm877, %v2220, 0.0
    %2314 = vadd.xlane.f32.xlu0 %v2313
    %v2315 = vpop.xlane.xlu0 %2314
    %v2316 = vsel %vm877, %v2222, 0.0
    %2317 = vadd.xlane.f32.xlu0 %v2316
    %v2318 = vpop.xlane.xlu0 %2317
    %v2319 = vrcp.pop %v2225
    %v2320 = vrcp.pop %v2228
    %v2321 = vrcp.pop %v2231
    %v2322 = vrcp.pop %v2234
    %v2323 = vrcp.pop %v2237
    %v2324 = vrcp.pop %v2240
    %v2325 = vrcp.pop %v2243
    %v2326 = vrcp.pop %v2246
    %v2327 = vrcp.pop %v2249
    %v2328 = vrcp.pop %v2252
    %v2329 = vrcp.pop %v2255
    %v2330 = vrcp.pop %v2258
    %v2331 = vrcp.pop %v2261
    %v2332 = vrcp.pop %v2264
    %v2333 = vrcp.pop %v2267
    %v2334 = vrcp.pop %v2270
    %v2335 = vrcp.pop %v2273
    %v2336 = vrcp.pop %v2276
    %v2337 = vrcp.pop %v2279
    %v2338 = vrcp.pop %v2282
    %v2339 = vrcp.pop %v2285
    %v2340 = vrcp.pop %v2288
    %v2341 = vrcp.pop %v2291
    %v2342 = vrcp.pop %v2294
    %v2343 = vrcp.pop %v2297
    %v2344 = vrcp.pop %v2300
    %v2345 = vrcp.pop %v2303
    %v2346 = vrcp.pop %v2306
    %v2347 = vrcp.pop %v2309
    %v2348 = vrcp.pop %v2312
    %v2349 = vrcp.pop %v2315
    %v2350 = vrcp.pop %v2318
    %v2351 = vmul.f32 %v2160, %v2319
    %v2352 = vmul.f32 %v2162, %v2320
    %v2353 = vmul.f32 %v2164, %v2321
    %v2354 = vmul.f32 %v2166, %v2322
    %v2355 = vmul.f32 %v2168, %v2323
    %v2356 = vmul.f32 %v2170, %v2324
    %v2357 = vmul.f32 %v2172, %v2325
    %v2358 = vmul.f32 %v2174, %v2326
    %v2359 = vmul.f32 %v2176, %v2327
    %v2360 = vmul.f32 %v2178, %v2328
    %v2361 = vmul.f32 %v2180, %v2329
    %v2362 = vmul.f32 %v2182, %v2330
    %v2363 = vmul.f32 %v2184, %v2331
    %v2364 = vmul.f32 %v2186, %v2332
    %v2365 = vmul.f32 %v2188, %v2333
    %v2366 = vmul.f32 %v2190, %v2334
    %v2367 = vmul.f32 %v2192, %v2335
    %v2368 = vmul.f32 %v2194, %v2336
    %v2369 = vmul.f32 %v2196, %v2337
    %v2370 = vmul.f32 %v2198, %v2338
    %v2371 = vmul.f32 %v2200, %v2339
    %v2372 = vmul.f32 %v2202, %v2340
    %v2373 = vmul.f32 %v2204, %v2341
    %v2374 = vmul.f32 %v2206, %v2342
    %v2375 = vmul.f32 %v2208, %v2343
    %v2376 = vmul.f32 %v2210, %v2344
    %v2377 = vmul.f32 %v2212, %v2345
    %v2378 = vmul.f32 %v2214, %v2346
    %v2379 = vmul.f32 %v2216, %v2347
    %v2380 = vmul.f32 %v2218, %v2348
    %v2381 = vmul.f32 %v2220, %v2349
    %v2382 = vmul.f32 %v2222, %v2350
    %v2383 = vpack.c.bf16 %v2352, %v2351
    %v2384 = vpack.c.bf16 %v2354, %v2353
    %v2385 = vpack.c.bf16 %v2356, %v2355
    %v2386 = vpack.c.bf16 %v2358, %v2357
    %v2387 = vpack.c.bf16 %v2360, %v2359
    %v2388 = vpack.c.bf16 %v2362, %v2361
    %v2389 = vpack.c.bf16 %v2364, %v2363
    %v2390 = vpack.c.bf16 %v2366, %v2365
    %v2391 = vpack.c.bf16 %v2368, %v2367
    %v2392 = vpack.c.bf16 %v2370, %v2369
    %v2393 = vpack.c.bf16 %v2372, %v2371
    %v2394 = vpack.c.bf16 %v2374, %v2373
    %v2395 = vpack.c.bf16 %v2376, %v2375
    %v2396 = vpack.c.bf16 %v2378, %v2377
    %v2397 = vpack.c.bf16 %v2380, %v2379
    %v2398 = vpack.c.bf16 %v2382, %v2381
    %2399 = vrot.lane.b32.xlu0 %v448, 56
    %v2400 = vpop.permute.xlu0 %2399
    %2401 = vrot.lane.b32.xlu0 %v449, 56
    %v2402 = vpop.permute.xlu0 %2401
    %2403 = vrot.lane.b32.xlu0 %v450, 56
    %v2404 = vpop.permute.xlu0 %2403
    %2405 = vrot.lane.b32.xlu0 %v451, 56
    %v2406 = vpop.permute.xlu0 %2405
    %v2412 = vsel %vm877, %v2383, 0
    %v2415 = vsel %vm877, %v2384, 0
    %v2418 = vsel %vm877, %v2385, 0
    %v2421 = vsel %vm877, %v2386, 0
    %2423 = vmatprep.subr.bf16.mxu0 0
    %2424 = vmatpush1.bf16.msra.mxu0 %v2400
    %2425 = vmatprep.subr.bf16.mxu0 0
    %2426 = vmatpush1.bf16.msra.mxu0 %v2402
    %2427 = vmatprep.subr.bf16.mxu0 0
    %2428 = vmatpush1.bf16.msra.mxu0 %v2404
    %2429 = vmatprep.subr.bf16.mxu0 0
    %2430 = vmatpush1.bf16.msra.mxu0 %v2406
    %2431 = vmatprep.subr.bf16.mxu0 0
    %2432 = vmatpush1.bf16.msra.mxu0 0
    %2433 = vmatprep.subr.bf16.mxu0 0
    %2434 = vmatpush1.bf16.msra.mxu0 0
    %2435 = vmatprep.subr.bf16.mxu0 0
    %2436 = vmatpush1.bf16.msra.mxu0 0
    %2437 = vmatprep.subr.bf16.mxu0 0
    %2438 = vmatpush1.bf16.msra.mxu0 0
    %2439 = vmatprep.subr.bf16.mxu0 0
    %2440 = vmatpush1.bf16.msra.mxu0 0
    %2441 = vmatprep.subr.bf16.mxu0 0
    %2442 = vmatpush1.bf16.msra.mxu0 0
    %2443 = vmatprep.subr.bf16.mxu0 0
    %2444 = vmatpush1.bf16.msra.mxu0 0
    %2445 = vmatprep.subr.bf16.mxu0 0
    %2446 = vmatpush1.bf16.msra.mxu0 0
    %2447 = vmatprep.subr.bf16.mxu0 0
    %2448 = vmatpush1.bf16.msra.mxu0 0
    %2449 = vmatprep.subr.bf16.mxu0 0
    %2450 = vmatpush1.bf16.msra.mxu0 0
    %2451 = vmatprep.subr.bf16.mxu0 0
    %2452 = vmatpush1.bf16.msra.mxu0 0
    %2453 = vmatprep.subr.bf16.mxu0 0
    %2454 = vmatpush1.bf16.msra.mxu0 0
    %2455 = vmatprep.mubr.bf16.mxu0 0
    %2456 = vmatmul.mubr.bf16.gmra.mrb[0].mxu0 %v2412
    %v2457 = vpop.f32.mrb[0].mxu0
    %v2458 = vadd.f32 0.0, %v2457
    %v2459 = vpop.f32.mrb[0].mxu0
    %v2460 = vpop.f32.mrb[0].mxu0
    %v2461 = vadd.f32 0.0, %v2460
    %v2462 = vpop.f32.mrb[0].mxu0
    %2463 = vmatprep.mubr.bf16.mxu0 0
    %2464 = vmatmul.mubr.bf16.gmra.mrb[0].mxu0 %v2415
    %v2465 = vpop.f32.mrb[0].mxu0
    %v2466 = vadd.f32 0.0, %v2465
    %v2467 = vpop.f32.mrb[0].mxu0
    %v2468 = vpop.f32.mrb[0].mxu0
    %v2469 = vadd.f32 0.0, %v2468
    %v2470 = vpop.f32.mrb[0].mxu0
    %2471 = vmatprep.mubr.bf16.mxu0 0
    %2472 = vmatmul.mubr.bf16.gmra.mrb[0].mxu0 %v2418
    %v2473 = vpop.f32.mrb[0].mxu0
    %v2474 = vadd.f32 0.0, %v2473
    %v2475 = vpop.f32.mrb[0].mxu0
    %v2476 = vpop.f32.mrb[0].mxu0
    %v2477 = vadd.f32 0.0, %v2476
    %v2478 = vpop.f32.mrb[0].mxu0
    %2479 = vmatprep.mubr.bf16.mxu0 0
    %2480 = vmatmul.mubr.bf16.gmra.mrb[0].mxu0 %v2421
    %v2481 = vpop.f32.mrb[0].mxu0
    %v2482 = vadd.f32 0.0, %v2481
    %v2483 = vpop.f32.mrb[0].mxu0
    %v2484 = vpop.f32.mrb[0].mxu0
    %v2485 = vadd.f32 0.0, %v2484
    %v2486 = vpop.f32.mrb[0].mxu0
    %2487 = vdwg.mxu0
    %2488 = vrot.lane.b32.xlu0 %v452, 56
    %v2489 = vpop.permute.xlu0 %2488
    %2490 = vrot.lane.b32.xlu0 %v453, 56
    %v2491 = vpop.permute.xlu0 %2490
    %2492 = vrot.lane.b32.xlu0 %v454, 56
    %v2493 = vpop.permute.xlu0 %2492
    %2494 = vrot.lane.b32.xlu0 %v455, 56
    %v2495 = vpop.permute.xlu0 %2494
    %v2501 = vsel %vm877, %v2387, 0
    %v2504 = vsel %vm877, %v2388, 0
    %v2507 = vsel %vm877, %v2389, 0
    %v2510 = vsel %vm877, %v2390, 0
    %2512 = vmatprep.subr.bf16.mxu0 0
    %2513 = vmatpush1.bf16.msra.mxu0 %v2489
    %2514 = vmatprep.subr.bf16.mxu0 0
    %2515 = vmatpush1.bf16.msra.mxu0 %v2491
    %2516 = vmatprep.subr.bf16.mxu0 0
    %2517 = vmatpush1.bf16.msra.mxu0 %v2493
    %2518 = vmatprep.subr.bf16.mxu0 0
    %2519 = vmatpush1.bf16.msra.mxu0 %v2495
    %2520 = vmatprep.subr.bf16.mxu0 0
    %2521 = vmatpush1.bf16.msra.mxu0 0
    %2522 = vmatprep.subr.bf16.mxu0 0
    %2523 = vmatpush1.bf16.msra.mxu0 0
    %2524 = vmatprep.subr.bf16.mxu0 0
    %2525 = vmatpush1.bf16.msra.mxu0 0
    %2526 = vmatprep.subr.bf16.mxu0 0
    %2527 = vmatpush1.bf16.msra.mxu0 0
    %2528 = vmatprep.subr.bf16.mxu0 0
    %2529 = vmatpush1.bf16.msra.mxu0 0
    %2530 = vmatprep.subr.bf16.mxu0 0
    %2531 = vmatpush1.bf16.msra.mxu0 0
    %2532 = vmatprep.subr.bf16.mxu0 0
    %2533 = vmatpush1.bf16.msra.mxu0 0
    %2534 = vmatprep.subr.bf16.mxu0 0
    %2535 = vmatpush1.bf16.msra.mxu0 0
    %2536 = vmatprep.subr.bf16.mxu0 0
    %2537 = vmatpush1.bf16.msra.mxu0 0
    %2538 = vmatprep.subr.bf16.mxu0 0
    %2539 = vmatpush1.bf16.msra.mxu0 0
    %2540 = vmatprep.subr.bf16.mxu0 0
    %2541 = vmatpush1.bf16.msra.mxu0 0
    %2542 = vmatprep.subr.bf16.mxu0 0
    %2543 = vmatpush1.bf16.msra.mxu0 0
    %2544 = vmatprep.mubr.bf16.mxu0 0
    %2545 = vmatmul.mubr.bf16.gmra.mrb[0].mxu0 %v2501
    %v2546 = vpop.f32.mrb[0].mxu0
    %v2547 = vadd.f32 0.0, %v2546
    %v2548 = vpop.f32.mrb[0].mxu0
    %v2549 = vpop.f32.mrb[0].mxu0
    %v2550 = vadd.f32 0.0, %v2549
    %v2551 = vpop.f32.mrb[0].mxu0
    %2552 = vmatprep.mubr.bf16.mxu0 0
    %2553 = vmatmul.mubr.bf16.gmra.mrb[0].mxu0 %v2504
    %v2554 = vpop.f32.mrb[0].mxu0
    %v2555 = vadd.f32 0.0, %v2554
    %v2556 = vpop.f32.mrb[0].mxu0
    %v2557 = vpop.f32.mrb[0].mxu0
    %v2558 = vadd.f32 0.0, %v2557
    %v2559 = vpop.f32.mrb[0].mxu0
    %2560 = vmatprep.mubr.bf16.mxu0 0
    %2561 = vmatmul.mubr.bf16.gmra.mrb[0].mxu0 %v2507
    %v2562 = vpop.f32.mrb[0].mxu0
    %v2563 = vadd.f32 0.0, %v2562
    %v2564 = vpop.f32.mrb[0].mxu0
    %v2565 = vpop.f32.mrb[0].mxu0
    %v2566 = vadd.f32 0.0, %v2565
    %v2567 = vpop.f32.mrb[0].mxu0
    %2568 = vmatprep.mubr.bf16.mxu0 0
    %2569 = vmatmul.mubr.bf16.gmra.mrb[0].mxu0 %v2510
    %v2570 = vpop.f32.mrb[0].mxu0
    %v2571 = vadd.f32 0.0, %v2570
    %v2572 = vpop.f32.mrb[0].mxu0
    %v2573 = vpop.f32.mrb[0].mxu0
    %v2574 = vadd.f32 0.0, %v2573
    %v2575 = vpop.f32.mrb[0].mxu0
    %2576 = vdwg.mxu0
    %2577 = vrot.lane.b32.xlu0 %v456, 56
    %v2578 = vpop.permute.xlu0 %2577
    %2579 = vrot.lane.b32.xlu0 %v457, 56
    %v2580 = vpop.permute.xlu0 %2579
    %2581 = vrot.lane.b32.xlu0 %v458, 56
    %v2582 = vpop.permute.xlu0 %2581
    %2583 = vrot.lane.b32.xlu0 %v459, 56
    %v2584 = vpop.permute.xlu0 %2583
    %v2590 = vsel %vm877, %v2391, 0
    %v2593 = vsel %vm877, %v2392, 0
    %v2596 = vsel %vm877, %v2393, 0
    %v2599 = vsel %vm877, %v2394, 0
    %2601 = vmatprep.subr.bf16.mxu0 0
    %2602 = vmatpush1.bf16.msra.mxu0 %v2578
    %2603 = vmatprep.subr.bf16.mxu0 0
    %2604 = vmatpush1.bf16.msra.mxu0 %v2580
    %2605 = vmatprep.subr.bf16.mxu0 0
    %2606 = vmatpush1.bf16.msra.mxu0 %v2582
    %2607 = vmatprep.subr.bf16.mxu0 0
    %2608 = vmatpush1.bf16.msra.mxu0 %v2584
    %2609 = vmatprep.subr.bf16.mxu0 0
    %2610 = vmatpush1.bf16.msra.mxu0 0
    %2611 = vmatprep.subr.bf16.mxu0 0
    %2612 = vmatpush1.bf16.msra.mxu0 0
    %2613 = vmatprep.subr.bf16.mxu0 0
    %2614 = vmatpush1.bf16.msra.mxu0 0
    %2615 = vmatprep.subr.bf16.mxu0 0
    %2616 = vmatpush1.bf16.msra.mxu0 0
    %2617 = vmatprep.subr.bf16.mxu0 0
    %2618 = vmatpush1.bf16.msra.mxu0 0
    %2619 = vmatprep.subr.bf16.mxu0 0
    %2620 = vmatpush1.bf16.msra.mxu0 0
    %2621 = vmatprep.subr.bf16.mxu0 0
    %2622 = vmatpush1.bf16.msra.mxu0 0
    %2623 = vmatprep.subr.bf16.mxu0 0
    %2624 = vmatpush1.bf16.msra.mxu0 0
    %2625 = vmatprep.subr.bf16.mxu0 0
    %2626 = vmatpush1.bf16.msra.mxu0 0
    %2627 = vmatprep.subr.bf16.mxu0 0
    %2628 = vmatpush1.bf16.msra.mxu0 0
    %2629 = vmatprep.subr.bf16.mxu0 0
    %2630 = vmatpush1.bf16.msra.mxu0 0
    %2631 = vmatprep.subr.bf16.mxu0 0
    %2632 = vmatpush1.bf16.msra.mxu0 0
    %2633 = vmatprep.mubr.bf16.mxu0 0
    %2634 = vmatmul.mubr.bf16.gmra.mrb[0].mxu0 %v2590
    %v2635 = vpop.f32.mrb[0].mxu0
    %v2636 = vadd.f32 0.0, %v2635
    %v2637 = vpop.f32.mrb[0].mxu0
    %v2638 = vpop.f32.mrb[0].mxu0
    %v2639 = vadd.f32 0.0, %v2638
    %v2640 = vpop.f32.mrb[0].mxu0
    %2641 = vmatprep.mubr.bf16.mxu0 0
    %2642 = vmatmul.mubr.bf16.gmra.mrb[0].mxu0 %v2593
    %v2643 = vpop.f32.mrb[0].mxu0
    %v2644 = vadd.f32 0.0, %v2643
    %v2645 = vpop.f32.mrb[0].mxu0
    %v2646 = vpop.f32.mrb[0].mxu0
    %v2647 = vadd.f32 0.0, %v2646
    %v2648 = vpop.f32.mrb[0].mxu0
    %2649 = vmatprep.mubr.bf16.mxu0 0
    %2650 = vmatmul.mubr.bf16.gmra.mrb[0].mxu0 %v2596
    %v2651 = vpop.f32.mrb[0].mxu0
    %v2652 = vadd.f32 0.0, %v2651
    %v2653 = vpop.f32.mrb[0].mxu0
    %v2654 = vpop.f32.mrb[0].mxu0
    %v2655 = vadd.f32 0.0, %v2654
    %v2656 = vpop.f32.mrb[0].mxu0
    %2657 = vmatprep.mubr.bf16.mxu0 0
    %2658 = vmatmul.mubr.bf16.gmra.mrb[0].mxu0 %v2599
    %v2659 = vpop.f32.mrb[0].mxu0
    %v2660 = vadd.f32 0.0, %v2659
    %v2661 = vpop.f32.mrb[0].mxu0
    %v2662 = vpop.f32.mrb[0].mxu0
    %v2663 = vadd.f32 0.0, %v2662
    %v2664 = vpop.f32.mrb[0].mxu0
    %2665 = vdwg.mxu0
    %2666 = vrot.lane.b32.xlu0 %v460, 56
    %v2667 = vpop.permute.xlu0 %2666
    %2668 = vrot.lane.b32.xlu0 %v461, 56
    %v2669 = vpop.permute.xlu0 %2668
    %2670 = vrot.lane.b32.xlu0 %v462, 56
    %v2671 = vpop.permute.xlu0 %2670
    %2672 = vrot.lane.b32.xlu0 %v463, 56
    %v2673 = vpop.permute.xlu0 %2672
    %v2679 = vsel %vm877, %v2395, 0
    %v2682 = vsel %vm877, %v2396, 0
    %v2685 = vsel %vm877, %v2397, 0
    %v2688 = vsel %vm877, %v2398, 0
    %2690 = vmatprep.subr.bf16.mxu0 0
    %2691 = vmatpush1.bf16.msra.mxu0 %v2667
    %2692 = vmatprep.subr.bf16.mxu0 0
    %2693 = vmatpush1.bf16.msra.mxu0 %v2669
    %2694 = vmatprep.subr.bf16.mxu0 0
    %2695 = vmatpush1.bf16.msra.mxu0 %v2671
    %2696 = vmatprep.subr.bf16.mxu0 0
    %2697 = vmatpush1.bf16.msra.mxu0 %v2673
    %2698 = vmatprep.subr.bf16.mxu0 0
    %2699 = vmatpush1.bf16.msra.mxu0 0
    %2700 = vmatprep.subr.bf16.mxu0 0
    %2701 = vmatpush1.bf16.msra.mxu0 0
    %2702 = vmatprep.subr.bf16.mxu0 0
    %2703 = vmatpush1.bf16.msra.mxu0 0
    %2704 = vmatprep.subr.bf16.mxu0 0
    %2705 = vmatpush1.bf16.msra.mxu0 0
    %2706 = vmatprep.subr.bf16.mxu0 0
    %2707 = vmatpush1.bf16.msra.mxu0 0
    %2708 = vmatprep.subr.bf16.mxu0 0
    %2709 = vmatpush1.bf16.msra.mxu0 0
    %2710 = vmatprep.subr.bf16.mxu0 0
    %2711 = vmatpush1.bf16.msra.mxu0 0
    %2712 = vmatprep.subr.bf16.mxu0 0
    %2713 = vmatpush1.bf16.msra.mxu0 0
    %2714 = vmatprep.subr.bf16.mxu0 0
    %2715 = vmatpush1.bf16.msra.mxu0 0
    %2716 = vmatprep.subr.bf16.mxu0 0
    %2717 = vmatpush1.bf16.msra.mxu0 0
    %2718 = vmatprep.subr.bf16.mxu0 0
    %2719 = vmatpush1.bf16.msra.mxu0 0
    %2720 = vmatprep.subr.bf16.mxu0 0
    %2721 = vmatpush1.bf16.msra.mxu0 0
    %2722 = vmatprep.mubr.bf16.mxu0 0
    %2723 = vmatmul.mubr.bf16.gmra.mrb[0].mxu0 %v2679
    %v2724 = vpop.f32.mrb[0].mxu0
    %v2725 = vadd.f32 0.0, %v2724
    %v2726 = vpop.f32.mrb[0].mxu0
    %v2727 = vpop.f32.mrb[0].mxu0
    %v2728 = vadd.f32 0.0, %v2727
    %v2729 = vpop.f32.mrb[0].mxu0
    %2730 = vmatprep.mubr.bf16.mxu0 0
    %2731 = vmatmul.mubr.bf16.gmra.mrb[0].mxu0 %v2682
    %v2732 = vpop.f32.mrb[0].mxu0
    %v2733 = vadd.f32 0.0, %v2732
    %v2734 = vpop.f32.mrb[0].mxu0
    %v2735 = vpop.f32.mrb[0].mxu0
    %v2736 = vadd.f32 0.0, %v2735
    %v2737 = vpop.f32.mrb[0].mxu0
    %2738 = vmatprep.mubr.bf16.mxu0 0
    %2739 = vmatmul.mubr.bf16.gmra.mrb[0].mxu0 %v2685
    %v2740 = vpop.f32.mrb[0].mxu0
    %v2741 = vadd.f32 0.0, %v2740
    %v2742 = vpop.f32.mrb[0].mxu0
    %v2743 = vpop.f32.mrb[0].mxu0
    %v2744 = vadd.f32 0.0, %v2743
    %v2745 = vpop.f32.mrb[0].mxu0
    %2746 = vmatprep.mubr.bf16.mxu0 0
    %2747 = vmatmul.mubr.bf16.gmra.mrb[0].mxu0 %v2688
    %v2748 = vpop.f32.mrb[0].mxu0
    %v2749 = vadd.f32 0.0, %v2748
    %v2750 = vpop.f32.mrb[0].mxu0
    %v2751 = vpop.f32.mrb[0].mxu0
    %v2752 = vadd.f32 0.0, %v2751
    %v2753 = vpop.f32.mrb[0].mxu0
    %2754 = vdwg.mxu0
    %s2755 = scalar_lea.vmem [#allocation8], 128
    %v2756 = vld [vmem:[%s2755] sm:$0xff]
    %v2757 = vld [vmem:[%s2755 + $0x8] sm:$0xff]
    %v2758 = vld [vmem:[%s2755 + $0x10] sm:$0xff]
    %v2759 = vld [vmem:[%s2755 + $0x18] sm:$0xff]
    %v2760 = vld [vmem:[%s2755 + $0x20] sm:$0xff]
    %v2761 = vld [vmem:[%s2755 + $0x28] sm:$0xff]
    %v2762 = vld [vmem:[%s2755 + $0x30] sm:$0xff]
    %v2763 = vld [vmem:[%s2755 + $0x38] sm:$0xff]
    %2764 = vrot.lane.b32.xlu0 %v448, 112
    %v2765 = vpop.permute.xlu0 %2764
    %2766 = vrot.lane.b32.xlu0 %v449, 112
    %v2767 = vpop.permute.xlu0 %2766
    %2768 = vrot.lane.b32.xlu0 %v450, 112
    %v2769 = vpop.permute.xlu0 %2768
    %2770 = vrot.lane.b32.xlu0 %v451, 112
    %v2771 = vpop.permute.xlu0 %2770
    %2772 = vrot.lane.b32.xlu0 %v448, 80
    %v2773 = vpop.permute.xlu0 %2772
    %2774 = vrot.lane.b32.xlu0 %v449, 80
    %v2775 = vpop.permute.xlu0 %2774
    %2776 = vrot.lane.b32.xlu0 %v450, 80
    %v2777 = vpop.permute.xlu0 %2776
    %2778 = vrot.lane.b32.xlu0 %v451, 80
    %v2779 = vpop.permute.xlu0 %2778
    %v2781 = vsel %vm484, %v2765, 0
    %v2784 = vsel %vm484, %v2767, 0
    %v2787 = vsel %vm484, %v2769, 0
    %v2790 = vsel %vm484, %v2771, 0
    %v2793 = vsel %vm484, %v2773, 0
    %v2796 = vsel %vm484, %v2775, 0
    %v2799 = vsel %vm484, %v2777, 0
    %v2802 = vsel %vm484, %v2779, 0
    %2804 = vmatprep.subr.bf16.mxu0 0
    %2805 = vmatpush1.bf16.xpose.msra.mxu0 %v2793
    %2806 = vmatprep.subr.bf16.mxu0 0
    %2807 = vmatpush1.bf16.xpose.msra.mxu0 %v2796
    %2808 = vmatprep.subr.bf16.mxu0 0
    %2809 = vmatpush1.bf16.xpose.msra.mxu0 %v2799
    %2810 = vmatprep.subr.bf16.mxu0 0
    %2811 = vmatpush1.bf16.xpose.msra.mxu0 %v2802
    %2812 = vmatprep.subr.bf16.mxu0 0
    %2813 = vmatpush1.bf16.xpose.msra.mxu0 0
    %2814 = vmatprep.subr.bf16.mxu0 0
    %2815 = vmatpush1.bf16.xpose.msra.mxu0 0
    %2816 = vmatprep.subr.bf16.mxu0 0
    %2817 = vmatpush1.bf16.xpose.msra.mxu0 0
    %2818 = vmatprep.subr.bf16.mxu0 0
    %2819 = vmatpush1.bf16.xpose.msra.mxu0 0
    %2820 = vmatprep.subr.bf16.mxu0 0
    %2821 = vmatpush1.bf16.xpose.msra.mxu0 0
    %2822 = vmatprep.subr.bf16.mxu0 0
    %2823 = vmatpush1.bf16.xpose.msra.mxu0 0
    %2824 = vmatprep.subr.bf16.mxu0 0
    %2825 = vmatpush1.bf16.xpose.msra.mxu0 0
    %2826 = vmatprep.subr.bf16.mxu0 0
    %2827 = vmatpush1.bf16.xpose.msra.mxu0 0
    %2828 = vmatprep.subr.bf16.mxu0 0
    %2829 = vmatpush1.bf16.xpose.msra.mxu0 0
    %2830 = vmatprep.subr.bf16.mxu0 0
    %2831 = vmatpush1.bf16.xpose.msra.mxu0 0
    %2832 = vmatprep.subr.bf16.mxu0 0
    %2833 = vmatpush1.bf16.xpose.msra.mxu0 0
    %2834 = vmatprep.subr.bf16.mxu0 0
    %2835 = vmatpush1.bf16.xpose.msra.mxu0 0
    %2836 = vmatprep.mubr.bf16.mxu0 0
    %2837 = vmatmul.mubr.bf16.gmra.mrb[0].mxu0 %v2781
    %v2838 = vpop.f32.mrb[0].mxu0
    %v2839 = vadd.f32 %v2756, %v2838
    %v2840 = vpop.f32.mrb[0].mxu0
    %v2841 = vpop.f32.mrb[0].mxu0
    %v2842 = vadd.f32 %v2757, %v2841
    %v2843 = vpop.f32.mrb[0].mxu0
    %2844 = vmatprep.mubr.bf16.mxu0 0
    %2845 = vmatmul.mubr.bf16.gmra.mrb[0].mxu0 %v2784
    %v2846 = vpop.f32.mrb[0].mxu0
    %v2847 = vadd.f32 %v2758, %v2846
    %v2848 = vpop.f32.mrb[0].mxu0
    %v2849 = vpop.f32.mrb[0].mxu0
    %v2850 = vadd.f32 %v2759, %v2849
    %v2851 = vpop.f32.mrb[0].mxu0
    %2852 = vmatprep.mubr.bf16.mxu0 0
    %2853 = vmatmul.mubr.bf16.gmra.mrb[0].mxu0 %v2787
    %v2854 = vpop.f32.mrb[0].mxu0
    %v2855 = vadd.f32 %v2760, %v2854
    %v2856 = vpop.f32.mrb[0].mxu0
    %v2857 = vpop.f32.mrb[0].mxu0
    %v2858 = vadd.f32 %v2761, %v2857
    %v2859 = vpop.f32.mrb[0].mxu0
    %2860 = vmatprep.mubr.bf16.mxu0 0
    %2861 = vmatmul.mubr.bf16.gmra.mrb[0].mxu0 %v2790
    %v2862 = vpop.f32.mrb[0].mxu0
    %v2863 = vadd.f32 %v2762, %v2862
    %v2864 = vpop.f32.mrb[0].mxu0
    %v2865 = vpop.f32.mrb[0].mxu0
    %v2866 = vadd.f32 %v2763, %v2865
    %v2867 = vpop.f32.mrb[0].mxu0
    %2868 = vdwg.mxu0
    %2869 = vrot.lane.b32.xlu0 %v452, 112
    %v2870 = vpop.permute.xlu0 %2869
    %2871 = vrot.lane.b32.xlu0 %v453, 112
    %v2872 = vpop.permute.xlu0 %2871
    %2873 = vrot.lane.b32.xlu0 %v454, 112
    %v2874 = vpop.permute.xlu0 %2873
    %2875 = vrot.lane.b32.xlu0 %v455, 112
    %v2876 = vpop.permute.xlu0 %2875
    %2877 = vrot.lane.b32.xlu0 %v452, 80
    %v2878 = vpop.permute.xlu0 %2877
    %2879 = vrot.lane.b32.xlu0 %v453, 80
    %v2880 = vpop.permute.xlu0 %2879
    %2881 = vrot.lane.b32.xlu0 %v454, 80
    %v2882 = vpop.permute.xlu0 %2881
    %2883 = vrot.lane.b32.xlu0 %v455, 80
    %v2884 = vpop.permute.xlu0 %2883
    %v2886 = vsel %vm484, %v2870, 0
    %v2889 = vsel %vm484, %v2872, 0
    %v2892 = vsel %vm484, %v2874, 0
    %v2895 = vsel %vm484, %v2876, 0
    %v2898 = vsel %vm484, %v2878, 0
    %v2901 = vsel %vm484, %v2880, 0
    %v2904 = vsel %vm484, %v2882, 0
    %v2907 = vsel %vm484, %v2884, 0
    %2909 = vmatprep.subr.bf16.mxu0 0
    %2910 = vmatpush1.bf16.xpose.msra.mxu0 %v2898
    %2911 = vmatprep.subr.bf16.mxu0 0
    %2912 = vmatpush1.bf16.xpose.msra.mxu0 %v2901
    %2913 = vmatprep.subr.bf16.mxu0 0
    %2914 = vmatpush1.bf16.xpose.msra.mxu0 %v2904
    %2915 = vmatprep.subr.bf16.mxu0 0
    %2916 = vmatpush1.bf16.xpose.msra.mxu0 %v2907
    %2917 = vmatprep.subr.bf16.mxu0 0
    %2918 = vmatpush1.bf16.xpose.msra.mxu0 0
    %2919 = vmatprep.subr.bf16.mxu0 0
    %2920 = vmatpush1.bf16.xpose.msra.mxu0 0
    %2921 = vmatprep.subr.bf16.mxu0 0
    %2922 = vmatpush1.bf16.xpose.msra.mxu0 0
    %2923 = vmatprep.subr.bf16.mxu0 0
    %2924 = vmatpush1.bf16.xpose.msra.mxu0 0
    %2925 = vmatprep.subr.bf16.mxu0 0
    %2926 = vmatpush1.bf16.xpose.msra.mxu0 0
    %2927 = vmatprep.subr.bf16.mxu0 0
    %2928 = vmatpush1.bf16.xpose.msra.mxu0 0
    %2929 = vmatprep.subr.bf16.mxu0 0
    %2930 = vmatpush1.bf16.xpose.msra.mxu0 0
    %2931 = vmatprep.subr.bf16.mxu0 0
    %2932 = vmatpush1.bf16.xpose.msra.mxu0 0
    %2933 = vmatprep.subr.bf16.mxu0 0
    %2934 = vmatpush1.bf16.xpose.msra.mxu0 0
    %2935 = vmatprep.subr.bf16.mxu0 0
    %2936 = vmatpush1.bf16.xpose.msra.mxu0 0
    %2937 = vmatprep.subr.bf16.mxu0 0
    %2938 = vmatpush1.bf16.xpose.msra.mxu0 0
    %2939 = vmatprep.subr.bf16.mxu0 0
    %2940 = vmatpush1.bf16.xpose.msra.mxu0 0
    %2941 = vmatprep.mubr.bf16.mxu0 0
    %2942 = vmatmul.mubr.bf16.gmra.mrb[0].mxu0 %v2886
    %v2943 = vpop.f32.mrb[0].mxu0
    %v2944 = vadd.f32 %v2756, %v2943
    %v2945 = vpop.f32.mrb[0].mxu0
    %v2946 = vpop.f32.mrb[0].mxu0
    %v2947 = vadd.f32 %v2757, %v2946
    %v2948 = vpop.f32.mrb[0].mxu0
    %2949 = vmatprep.mubr.bf16.mxu0 0
    %2950 = vmatmul.mubr.bf16.gmra.mrb[0].mxu0 %v2889
    %v2951 = vpop.f32.mrb[0].mxu0
    %v2952 = vadd.f32 %v2758, %v2951
    %v2953 = vpop.f32.mrb[0].mxu0
    %v2954 = vpop.f32.mrb[0].mxu0
    %v2955 = vadd.f32 %v2759, %v2954
    %v2956 = vpop.f32.mrb[0].mxu0
    %2957 = vmatprep.mubr.bf16.mxu0 0
    %2958 = vmatmul.mubr.bf16.gmra.mrb[0].mxu0 %v2892
    %v2959 = vpop.f32.mrb[0].mxu0
    %v2960 = vadd.f32 %v2760, %v2959
    %v2961 = vpop.f32.mrb[0].mxu0
    %v2962 = vpop.f32.mrb[0].mxu0
    %v2963 = vadd.f32 %v2761, %v2962
    %v2964 = vpop.f32.mrb[0].mxu0
    %2965 = vmatprep.mubr.bf16.mxu0 0
    %2966 = vmatmul.mubr.bf16.gmra.mrb[0].mxu0 %v2895
    %v2967 = vpop.f32.mrb[0].mxu0
    %v2968 = vadd.f32 %v2762, %v2967
    %v2969 = vpop.f32.mrb[0].mxu0
    %v2970 = vpop.f32.mrb[0].mxu0
    %v2971 = vadd.f32 %v2763, %v2970
    %v2972 = vpop.f32.mrb[0].mxu0
    %2973 = vdwg.mxu0
    %2974 = vrot.lane.b32.xlu0 %v456, 112
    %v2975 = vpop.permute.xlu0 %2974
    %2976 = vrot.lane.b32.xlu0 %v457, 112
    %v2977 = vpop.permute.xlu0 %2976
    %2978 = vrot.lane.b32.xlu0 %v458, 112
    %v2979 = vpop.permute.xlu0 %2978
    %2980 = vrot.lane.b32.xlu0 %v459, 112
    %v2981 = vpop.permute.xlu0 %2980
    %2982 = vrot.lane.b32.xlu0 %v456, 80
    %v2983 = vpop.permute.xlu0 %2982
    %2984 = vrot.lane.b32.xlu0 %v457, 80
    %v2985 = vpop.permute.xlu0 %2984
    %2986 = vrot.lane.b32.xlu0 %v458, 80
    %v2987 = vpop.permute.xlu0 %2986
    %2988 = vrot.lane.b32.xlu0 %v459, 80
    %v2989 = vpop.permute.xlu0 %2988
    %v2991 = vsel %vm484, %v2975, 0
    %v2994 = vsel %vm484, %v2977, 0
    %v2997 = vsel %vm484, %v2979, 0
    %v3000 = vsel %vm484, %v2981, 0
    %v3003 = vsel %vm484, %v2983, 0
    %v3006 = vsel %vm484, %v2985, 0
    %v3009 = vsel %vm484, %v2987, 0
    %v3012 = vsel %vm484, %v2989, 0
    %3014 = vmatprep.subr.bf16.mxu0 0
    %3015 = vmatpush1.bf16.xpose.msra.mxu0 %v3003
    %3016 = vmatprep.subr.bf16.mxu0 0
    %3017 = vmatpush1.bf16.xpose.msra.mxu0 %v3006
    %3018 = vmatprep.subr.bf16.mxu0 0
    %3019 = vmatpush1.bf16.xpose.msra.mxu0 %v3009
    %3020 = vmatprep.subr.bf16.mxu0 0
    %3021 = vmatpush1.bf16.xpose.msra.mxu0 %v3012
    %3022 = vmatprep.subr.bf16.mxu0 0
    %3023 = vmatpush1.bf16.xpose.msra.mxu0 0
    %3024 = vmatprep.subr.bf16.mxu0 0
    %3025 = vmatpush1.bf16.xpose.msra.mxu0 0
    %3026 = vmatprep.subr.bf16.mxu0 0
    %3027 = vmatpush1.bf16.xpose.msra.mxu0 0
    %3028 = vmatprep.subr.bf16.mxu0 0
    %3029 = vmatpush1.bf16.xpose.msra.mxu0 0
    %3030 = vmatprep.subr.bf16.mxu0 0
    %3031 = vmatpush1.bf16.xpose.msra.mxu0 0
    %3032 = vmatprep.subr.bf16.mxu0 0
    %3033 = vmatpush1.bf16.xpose.msra.mxu0 0
    %3034 = vmatprep.subr.bf16.mxu0 0
    %3035 = vmatpush1.bf16.xpose.msra.mxu0 0
    %3036 = vmatprep.subr.bf16.mxu0 0
    %3037 = vmatpush1.bf16.xpose.msra.mxu0 0
    %3038 = vmatprep.subr.bf16.mxu0 0
    %3039 = vmatpush1.bf16.xpose.msra.mxu0 0
    %3040 = vmatprep.subr.bf16.mxu0 0
    %3041 = vmatpush1.bf16.xpose.msra.mxu0 0
    %3042 = vmatprep.subr.bf16.mxu0 0
    %3043 = vmatpush1.bf16.xpose.msra.mxu0 0
    %3044 = vmatprep.subr.bf16.mxu0 0
    %3045 = vmatpush1.bf16.xpose.msra.mxu0 0
    %3046 = vmatprep.mubr.bf16.mxu0 0
    %3047 = vmatmul.mubr.bf16.gmra.mrb[0].mxu0 %v2991
    %v3048 = vpop.f32.mrb[0].mxu0
    %v3049 = vadd.f32 %v2756, %v3048
    %v3050 = vpop.f32.mrb[0].mxu0
    %v3051 = vpop.f32.mrb[0].mxu0
    %v3052 = vadd.f32 %v2757, %v3051
    %v3053 = vpop.f32.mrb[0].mxu0
    %3054 = vmatprep.mubr.bf16.mxu0 0
    %3055 = vmatmul.mubr.bf16.gmra.mrb[0].mxu0 %v2994
    %v3056 = vpop.f32.mrb[0].mxu0
    %v3057 = vadd.f32 %v2758, %v3056
    %v3058 = vpop.f32.mrb[0].mxu0
    %v3059 = vpop.f32.mrb[0].mxu0
    %v3060 = vadd.f32 %v2759, %v3059
    %v3061 = vpop.f32.mrb[0].mxu0
    %3062 = vmatprep.mubr.bf16.mxu0 0
    %3063 = vmatmul.mubr.bf16.gmra.mrb[0].mxu0 %v2997
    %v3064 = vpop.f32.mrb[0].mxu0
    %v3065 = vadd.f32 %v2760, %v3064
    %v3066 = vpop.f32.mrb[0].mxu0
    %v3067 = vpop.f32.mrb[0].mxu0
    %v3068 = vadd.f32 %v2761, %v3067
    %v3069 = vpop.f32.mrb[0].mxu0
    %3070 = vmatprep.mubr.bf16.mxu0 0
    %3071 = vmatmul.mubr.bf16.gmra.mrb[0].mxu0 %v3000
    %v3072 = vpop.f32.mrb[0].mxu0
    %v3073 = vadd.f32 %v2762, %v3072
    %v3074 = vpop.f32.mrb[0].mxu0
    %v3075 = vpop.f32.mrb[0].mxu0
    %v3076 = vadd.f32 %v2763, %v3075
    %v3077 = vpop.f32.mrb[0].mxu0
    %3078 = vdwg.mxu0
    %3079 = vrot.lane.b32.xlu0 %v460, 112
    %v3080 = vpop.permute.xlu0 %3079
    %3081 = vrot.lane.b32.xlu0 %v461, 112
    %v3082 = vpop.permute.xlu0 %3081
    %3083 = vrot.lane.b32.xlu0 %v462, 112
    %v3084 = vpop.permute.xlu0 %3083
    %3085 = vrot.lane.b32.xlu0 %v463, 112
    %v3086 = vpop.permute.xlu0 %3085
    %3087 = vrot.lane.b32.xlu0 %v460, 80
    %v3088 = vpop.permute.xlu0 %3087
    %3089 = vrot.lane.b32.xlu0 %v461, 80
    %v3090 = vpop.permute.xlu0 %3089
    %3091 = vrot.lane.b32.xlu0 %v462, 80
    %v3092 = vpop.permute.xlu0 %3091
    %3093 = vrot.lane.b32.xlu0 %v463, 80
    %v3094 = vpop.permute.xlu0 %3093
    %v3096 = vsel %vm484, %v3080, 0
    %v3099 = vsel %vm484, %v3082, 0
    %v3102 = vsel %vm484, %v3084, 0
    %v3105 = vsel %vm484, %v3086, 0
    %v3108 = vsel %vm484, %v3088, 0
    %v3111 = vsel %vm484, %v3090, 0
    %v3114 = vsel %vm484, %v3092, 0
    %v3117 = vsel %vm484, %v3094, 0
    %3119 = vmatprep.subr.bf16.mxu0 0
    %3120 = vmatpush1.bf16.xpose.msra.mxu0 %v3108
    %3121 = vmatprep.subr.bf16.mxu0 0
    %3122 = vmatpush1.bf16.xpose.msra.mxu0 %v3111
    %3123 = vmatprep.subr.bf16.mxu0 0
    %3124 = vmatpush1.bf16.xpose.msra.mxu0 %v3114
    %3125 = vmatprep.subr.bf16.mxu0 0
    %3126 = vmatpush1.bf16.xpose.msra.mxu0 %v3117
    %3127 = vmatprep.subr.bf16.mxu0 0
    %3128 = vmatpush1.bf16.xpose.msra.mxu0 0
    %3129 = vmatprep.subr.bf16.mxu0 0
    %3130 = vmatpush1.bf16.xpose.msra.mxu0 0
    %3131 = vmatprep.subr.bf16.mxu0 0
    %3132 = vmatpush1.bf16.xpose.msra.mxu0 0
    %3133 = vmatprep.subr.bf16.mxu0 0
    %3134 = vmatpush1.bf16.xpose.msra.mxu0 0
    %3135 = vmatprep.subr.bf16.mxu0 0
    %3136 = vmatpush1.bf16.xpose.msra.mxu0 0
    %3137 = vmatprep.subr.bf16.mxu0 0
    %3138 = vmatpush1.bf16.xpose.msra.mxu0 0
    %3139 = vmatprep.subr.bf16.mxu0 0
    %3140 = vmatpush1.bf16.xpose.msra.mxu0 0
    %3141 = vmatprep.subr.bf16.mxu0 0
    %3142 = vmatpush1.bf16.xpose.msra.mxu0 0
    %3143 = vmatprep.subr.bf16.mxu0 0
    %3144 = vmatpush1.bf16.xpose.msra.mxu0 0
    %3145 = vmatprep.subr.bf16.mxu0 0
    %3146 = vmatpush1.bf16.xpose.msra.mxu0 0
    %3147 = vmatprep.subr.bf16.mxu0 0
    %3148 = vmatpush1.bf16.xpose.msra.mxu0 0
    %3149 = vmatprep.subr.bf16.mxu0 0
    %3150 = vmatpush1.bf16.xpose.msra.mxu0 0
    %3151 = vmatprep.mubr.bf16.mxu0 0
    %3152 = vmatmul.mubr.bf16.gmra.mrb[0].mxu0 %v3096
    %v3153 = vpop.f32.mrb[0].mxu0
    %v3154 = vadd.f32 %v2756, %v3153
    %v3155 = vpop.f32.mrb[0].mxu0
    %v3156 = vpop.f32.mrb[0].mxu0
    %v3157 = vadd.f32 %v2757, %v3156
    %v3158 = vpop.f32.mrb[0].mxu0
    %3159 = vmatprep.mubr.bf16.mxu0 0
    %3160 = vmatmul.mubr.bf16.gmra.mrb[0].mxu0 %v3099
    %v3161 = vpop.f32.mrb[0].mxu0
    %v3162 = vadd.f32 %v2758, %v3161
    %v3163 = vpop.f32.mrb[0].mxu0
    %v3164 = vpop.f32.mrb[0].mxu0
    %v3165 = vadd.f32 %v2759, %v3164
    %v3166 = vpop.f32.mrb[0].mxu0
    %3167 = vmatprep.mubr.bf16.mxu0 0
    %3168 = vmatmul.mubr.bf16.gmra.mrb[0].mxu0 %v3102
    %v3169 = vpop.f32.mrb[0].mxu0
    %v3170 = vadd.f32 %v2760, %v3169
    %v3171 = vpop.f32.mrb[0].mxu0
    %v3172 = vpop.f32.mrb[0].mxu0
    %v3173 = vadd.f32 %v2761, %v3172
    %v3174 = vpop.f32.mrb[0].mxu0
    %3175 = vmatprep.mubr.bf16.mxu0 0
    %3176 = vmatmul.mubr.bf16.gmra.mrb[0].mxu0 %v3105
    %v3177 = vpop.f32.mrb[0].mxu0
    %v3178 = vadd.f32 %v2762, %v3177
    %v3179 = vpop.f32.mrb[0].mxu0
    %v3180 = vpop.f32.mrb[0].mxu0
    %v3181 = vadd.f32 %v2763, %v3180
    %v3182 = vpop.f32.mrb[0].mxu0
    %3183 = vdwg.mxu0
    %v3184 = vsel %vm877, %v2839, -inf
    %3185 = vmax.xlane.f32.xlu0 %v3184
    %v3186 = vpop.xlane.xlu0 %3185
    %v3187 = vsel %vm877, %v2842, -inf
    %3188 = vmax.xlane.f32.xlu0 %v3187
    %v3189 = vpop.xlane.xlu0 %3188
    %v3190 = vsel %vm877, %v2847, -inf
    %3191 = vmax.xlane.f32.xlu0 %v3190
    %v3192 = vpop.xlane.xlu0 %3191
    %v3193 = vsel %vm877, %v2850, -inf
    %3194 = vmax.xlane.f32.xlu0 %v3193
    %v3195 = vpop.xlane.xlu0 %3194
    %v3196 = vsel %vm877, %v2855, -inf
    %3197 = vmax.xlane.f32.xlu0 %v3196
    %v3198 = vpop.xlane.xlu0 %3197
    %v3199 = vsel %vm877, %v2858, -inf
    %3200 = vmax.xlane.f32.xlu0 %v3199
    %v3201 = vpop.xlane.xlu0 %3200
    %v3202 = vsel %vm877, %v2863, -inf
    %3203 = vmax.xlane.f32.xlu0 %v3202
    %v3204 = vpop.xlane.xlu0 %3203
    %v3205 = vsel %vm877, %v2866, -inf
    %3206 = vmax.xlane.f32.xlu0 %v3205
    %v3207 = vpop.xlane.xlu0 %3206
    %v3208 = vsel %vm877, %v2944, -inf
    %3209 = vmax.xlane.f32.xlu0 %v3208
    %v3210 = vpop.xlane.xlu0 %3209
    %v3211 = vsel %vm877, %v2947, -inf
    %3212 = vmax.xlane.f32.xlu0 %v3211
    %v3213 = vpop.xlane.xlu0 %3212
    %v3214 = vsel %vm877, %v2952, -inf
    %3215 = vmax.xlane.f32.xlu0 %v3214
    %v3216 = vpop.xlane.xlu0 %3215
    %v3217 = vsel %vm877, %v2955, -inf
    %3218 = vmax.xlane.f32.xlu0 %v3217
    %v3219 = vpop.xlane.xlu0 %3218
    %v3220 = vsel %vm877, %v2960, -inf
    %3221 = vmax.xlane.f32.xlu0 %v3220
    %v3222 = vpop.xlane.xlu0 %3221
    %v3223 = vsel %vm877, %v2963, -inf
    %3224 = vmax.xlane.f32.xlu0 %v3223
    %v3225 = vpop.xlane.xlu0 %3224
    %v3226 = vsel %vm877, %v2968, -inf
    %3227 = vmax.xlane.f32.xlu0 %v3226
    %v3228 = vpop.xlane.xlu0 %3227
    %v3229 = vsel %vm877, %v2971, -inf
    %3230 = vmax.xlane.f32.xlu0 %v3229
    %v3231 = vpop.xlane.xlu0 %3230
    %v3232 = vsel %vm877, %v3049, -inf
    %3233 = vmax.xlane.f32.xlu0 %v3232
    %v3234 = vpop.xlane.xlu0 %3233
    %v3235 = vsel %vm877, %v3052, -inf
    %3236 = vmax.xlane.f32.xlu0 %v3235
    %v3237 = vpop.xlane.xlu0 %3236
    %v3238 = vsel %vm877, %v3057, -inf
    %3239 = vmax.xlane.f32.xlu0 %v3238
    %v3240 = vpop.xlane.xlu0 %3239
    %v3241 = vsel %vm877, %v3060, -inf
    %3242 = vmax.xlane.f32.xlu0 %v3241
    %v3243 = vpop.xlane.xlu0 %3242
    %v3244 = vsel %vm877, %v3065, -inf
    %3245 = vmax.xlane.f32.xlu0 %v3244
    %v3246 = vpop.xlane.xlu0 %3245
    %v3247 = vsel %vm877, %v3068, -inf
    %3248 = vmax.xlane.f32.xlu0 %v3247
    %v3249 = vpop.xlane.xlu0 %3248
    %v3250 = vsel %vm877, %v3073, -inf
    %3251 = vmax.xlane.f32.xlu0 %v3250
    %v3252 = vpop.xlane.xlu0 %3251
    %v3253 = vsel %vm877, %v3076, -inf
    %3254 = vmax.xlane.f32.xlu0 %v3253
    %v3255 = vpop.xlane.xlu0 %3254
    %v3256 = vsel %vm877, %v3154, -inf
    %3257 = vmax.xlane.f32.xlu0 %v3256
    %v3258 = vpop.xlane.xlu0 %3257
    %v3259 = vsel %vm877, %v3157, -inf
    %3260 = vmax.xlane.f32.xlu0 %v3259
    %v3261 = vpop.xlane.xlu0 %3260
    %v3262 = vsel %vm877, %v3162, -inf
    %3263 = vmax.xlane.f32.xlu0 %v3262
    %v3264 = vpop.xlane.xlu0 %3263
    %v3265 = vsel %vm877, %v3165, -inf
    %3266 = vmax.xlane.f32.xlu0 %v3265
    %v3267 = vpop.xlane.xlu0 %3266
    %v3268 = vsel %vm877, %v3170, -inf
    %3269 = vmax.xlane.f32.xlu0 %v3268
    %v3270 = vpop.xlane.xlu0 %3269
    %v3271 = vsel %vm877, %v3173, -inf
    %3272 = vmax.xlane.f32.xlu0 %v3271
    %v3273 = vpop.xlane.xlu0 %3272
    %v3274 = vsel %vm877, %v3178, -inf
    %3275 = vmax.xlane.f32.xlu0 %v3274
    %v3276 = vpop.xlane.xlu0 %3275
    %v3277 = vsel %vm877, %v3181, -inf
    %3278 = vmax.xlane.f32.xlu0 %v3277
    %v3279 = vpop.xlane.xlu0 %3278
    %v3280 = vsub.f32 %v2839, %v3186
    %v3281 = vsub.f32 %v2842, %v3189
    %v3282 = vsub.f32 %v2847, %v3192
    %v3283 = vsub.f32 %v2850, %v3195
    %v3284 = vsub.f32 %v2855, %v3198
    %v3285 = vsub.f32 %v2858, %v3201
    %v3286 = vsub.f32 %v2863, %v3204
    %v3287 = vsub.f32 %v2866, %v3207
    %v3288 = vsub.f32 %v2944, %v3210
    %v3289 = vsub.f32 %v2947, %v3213
    %v3290 = vsub.f32 %v2952, %v3216
    %v3291 = vsub.f32 %v2955, %v3219
    %v3292 = vsub.f32 %v2960, %v3222
    %v3293 = vsub.f32 %v2963, %v3225
    %v3294 = vsub.f32 %v2968, %v3228
    %v3295 = vsub.f32 %v2971, %v3231
    %v3296 = vsub.f32 %v3049, %v3234
    %v3297 = vsub.f32 %v3052, %v3237
    %v3298 = vsub.f32 %v3057, %v3240
    %v3299 = vsub.f32 %v3060, %v3243
    %v3300 = vsub.f32 %v3065, %v3246
    %v3301 = vsub.f32 %v3068, %v3249
    %v3302 = vsub.f32 %v3073, %v3252
    %v3303 = vsub.f32 %v3076, %v3255
    %v3304 = vsub.f32 %v3154, %v3258
    %v3305 = vsub.f32 %v3157, %v3261
    %v3306 = vsub.f32 %v3162, %v3264
    %v3307 = vsub.f32 %v3165, %v3267
    %v3308 = vsub.f32 %v3170, %v3270
    %v3309 = vsub.f32 %v3173, %v3273
    %v3310 = vsub.f32 %v3178, %v3276
    %v3311 = vsub.f32 %v3181, %v3279
    %v3312 = vmul.f32 %v3280, 1.442695
    %v3313 = vpow.pop %v3312
    %v3314 = vmul.f32 %v3281, 1.442695
    %v3315 = vpow.pop %v3314
    %v3316 = vmul.f32 %v3282, 1.442695
    %v3317 = vpow.pop %v3316
    %v3318 = vmul.f32 %v3283, 1.442695
    %v3319 = vpow.pop %v3318
    %v3320 = vmul.f32 %v3284, 1.442695
    %v3321 = vpow.pop %v3320
    %v3322 = vmul.f32 %v3285, 1.442695
    %v3323 = vpow.pop %v3322
    %v3324 = vmul.f32 %v3286, 1.442695
    %v3325 = vpow.pop %v3324
    %v3326 = vmul.f32 %v3287, 1.442695
    %v3327 = vpow.pop %v3326
    %v3328 = vmul.f32 %v3288, 1.442695
    %v3329 = vpow.pop %v3328
    %v3330 = vmul.f32 %v3289, 1.442695
    %v3331 = vpow.pop %v3330
    %v3332 = vmul.f32 %v3290, 1.442695
    %v3333 = vpow.pop %v3332
    %v3334 = vmul.f32 %v3291, 1.442695
    %v3335 = vpow.pop %v3334
    %v3336 = vmul.f32 %v3292, 1.442695
    %v3337 = vpow.pop %v3336
    %v3338 = vmul.f32 %v3293, 1.442695
    %v3339 = vpow.pop %v3338
    %v3340 = vmul.f32 %v3294, 1.442695
    %v3341 = vpow.pop %v3340
    %v3342 = vmul.f32 %v3295, 1.442695
    %v3343 = vpow.pop %v3342
    %v3344 = vmul.f32 %v3296, 1.442695
    %v3345 = vpow.pop %v3344
    %v3346 = vmul.f32 %v3297, 1.442695
    %v3347 = vpow.pop %v3346
    %v3348 = vmul.f32 %v3298, 1.442695
    %v3349 = vpow.pop %v3348
    %v3350 = vmul.f32 %v3299, 1.442695
    %v3351 = vpow.pop %v3350
    %v3352 = vmul.f32 %v3300, 1.442695
    %v3353 = vpow.pop %v3352
    %v3354 = vmul.f32 %v3301, 1.442695
    %v3355 = vpow.pop %v3354
    %v3356 = vmul.f32 %v3302, 1.442695
    %v3357 = vpow.pop %v3356
    %v3358 = vmul.f32 %v3303, 1.442695
    %v3359 = vpow.pop %v3358
    %v3360 = vmul.f32 %v3304, 1.442695
    %v3361 = vpow.pop %v3360
    %v3362 = vmul.f32 %v3305, 1.442695
    %v3363 = vpow.pop %v3362
    %v3364 = vmul.f32 %v3306, 1.442695
    %v3365 = vpow.pop %v3364
    %v3366 = vmul.f32 %v3307, 1.442695
    %v3367 = vpow.pop %v3366
    %v3368 = vmul.f32 %v3308, 1.442695
    %v3369 = vpow.pop %v3368
    %v3370 = vmul.f32 %v3309, 1.442695
    %v3371 = vpow.pop %v3370
    %v3372 = vmul.f32 %v3310, 1.442695
    %v3373 = vpow.pop %v3372
    %v3374 = vmul.f32 %v3311, 1.442695
    %v3375 = vpow.pop %v3374
    %v3376 = vsel %vm877, %v3313, 0.0
    %3377 = vadd.xlane.f32.xlu0 %v3376
    %v3378 = vpop.xlane.xlu0 %3377
    %v3379 = vsel %vm877, %v3315, 0.0
    %3380 = vadd.xlane.f32.xlu0 %v3379
    %v3381 = vpop.xlane.xlu0 %3380
    %v3382 = vsel %vm877, %v3317, 0.0
    %3383 = vadd.xlane.f32.xlu0 %v3382
    %v3384 = vpop.xlane.xlu0 %3383
    %v3385 = vsel %vm877, %v3319, 0.0
    %3386 = vadd.xlane.f32.xlu0 %v3385
    %v3387 = vpop.xlane.xlu0 %3386
    %v3388 = vsel %vm877, %v3321, 0.0
    %3389 = vadd.xlane.f32.xlu0 %v3388
    %v3390 = vpop.xlane.xlu0 %3389
    %v3391 = vsel %vm877, %v3323, 0.0
    %3392 = vadd.xlane.f32.xlu0 %v3391
    %v3393 = vpop.xlane.xlu0 %3392
    %v3394 = vsel %vm877, %v3325, 0.0
    %3395 = vadd.xlane.f32.xlu0 %v3394
    %v3396 = vpop.xlane.xlu0 %3395
    %v3397 = vsel %vm877, %v3327, 0.0
    %3398 = vadd.xlane.f32.xlu0 %v3397
    %v3399 = vpop.xlane.xlu0 %3398
    %v3400 = vsel %vm877, %v3329, 0.0
    %3401 = vadd.xlane.f32.xlu0 %v3400
    %v3402 = vpop.xlane.xlu0 %3401
    %v3403 = vsel %vm877, %v3331, 0.0
    %3404 = vadd.xlane.f32.xlu0 %v3403
    %v3405 = vpop.xlane.xlu0 %3404
    %v3406 = vsel %vm877, %v3333, 0.0
    %3407 = vadd.xlane.f32.xlu0 %v3406
    %v3408 = vpop.xlane.xlu0 %3407
    %v3409 = vsel %vm877, %v3335, 0.0
    %3410 = vadd.xlane.f32.xlu0 %v3409
    %v3411 = vpop.xlane.xlu0 %3410
    %v3412 = vsel %vm877, %v3337, 0.0
    %3413 = vadd.xlane.f32.xlu0 %v3412
    %v3414 = vpop.xlane.xlu0 %3413
    %v3415 = vsel %vm877, %v3339, 0.0
    %3416 = vadd.xlane.f32.xlu0 %v3415
    %v3417 = vpop.xlane.xlu0 %3416
    %v3418 = vsel %vm877, %v3341, 0.0
    %3419 = vadd.xlane.f32.xlu0 %v3418
    %v3420 = vpop.xlane.xlu0 %3419
    %v3421 = vsel %vm877, %v3343, 0.0
    %3422 = vadd.xlane.f32.xlu0 %v3421
    %v3423 = vpop.xlane.xlu0 %3422
    %v3424 = vsel %vm877, %v3345, 0.0
    %3425 = vadd.xlane.f32.xlu0 %v3424
    %v3426 = vpop.xlane.xlu0 %3425
    %v3427 = vsel %vm877, %v3347, 0.0
    %3428 = vadd.xlane.f32.xlu0 %v3427
    %v3429 = vpop.xlane.xlu0 %3428
    %v3430 = vsel %vm877, %v3349, 0.0
    %3431 = vadd.xlane.f32.xlu0 %v3430
    %v3432 = vpop.xlane.xlu0 %3431
    %v3433 = vsel %vm877, %v3351, 0.0
    %3434 = vadd.xlane.f32.xlu0 %v3433
    %v3435 = vpop.xlane.xlu0 %3434
    %v3436 = vsel %vm877, %v3353, 0.0
    %3437 = vadd.xlane.f32.xlu0 %v3436
    %v3438 = vpop.xlane.xlu0 %3437
    %v3439 = vsel %vm877, %v3355, 0.0
    %3440 = vadd.xlane.f32.xlu0 %v3439
    %v3441 = vpop.xlane.xlu0 %3440
    %v3442 = vsel %vm877, %v3357, 0.0
    %3443 = vadd.xlane.f32.xlu0 %v3442
    %v3444 = vpop.xlane.xlu0 %3443
    %v3445 = vsel %vm877, %v3359, 0.0
    %3446 = vadd.xlane.f32.xlu0 %v3445
    %v3447 = vpop.xlane.xlu0 %3446
    %v3448 = vsel %vm877, %v3361, 0.0
    %3449 = vadd.xlane.f32.xlu0 %v3448
    %v3450 = vpop.xlane.xlu0 %3449
    %v3451 = vsel %vm877, %v3363, 0.0
    %3452 = vadd.xlane.f32.xlu0 %v3451
    %v3453 = vpop.xlane.xlu0 %3452
    %v3454 = vsel %vm877, %v3365, 0.0
    %3455 = vadd.xlane.f32.xlu0 %v3454
    %v3456 = vpop.xlane.xlu0 %3455
    %v3457 = vsel %vm877, %v3367, 0.0
    %3458 = vadd.xlane.f32.xlu0 %v3457
    %v3459 = vpop.xlane.xlu0 %3458
    %v3460 = vsel %vm877, %v3369, 0.0
    %3461 = vadd.xlane.f32.xlu0 %v3460
    %v3462 = vpop.xlane.xlu0 %3461
    %v3463 = vsel %vm877, %v3371, 0.0
    %3464 = vadd.xlane.f32.xlu0 %v3463
    %v3465 = vpop.xlane.xlu0 %3464
    %v3466 = vsel %vm877, %v3373, 0.0
    %3467 = vadd.xlane.f32.xlu0 %v3466
    %v3468 = vpop.xlane.xlu0 %3467
    %v3469 = vsel %vm877, %v3375, 0.0
    %3470 = vadd.xlane.f32.xlu0 %v3469
    %v3471 = vpop.xlane.xlu0 %3470
    %v3472 = vrcp.pop %v3378
    %v3473 = vrcp.pop %v3381
    %v3474 = vrcp.pop %v3384
    %v3475 = vrcp.pop %v3387
    %v3476 = vrcp.pop %v3390
    %v3477 = vrcp.pop %v3393
    %v3478 = vrcp.pop %v3396
    %v3479 = vrcp.pop %v3399
    %v3480 = vrcp.pop %v3402
    %v3481 = vrcp.pop %v3405
    %v3482 = vrcp.pop %v3408
    %v3483 = vrcp.pop %v3411
    %v3484 = vrcp.pop %v3414
    %v3485 = vrcp.pop %v3417
    %v3486 = vrcp.pop %v3420
    %v3487 = vrcp.pop %v3423
    %v3488 = vrcp.pop %v3426
    %v3489 = vrcp.pop %v3429
    %v3490 = vrcp.pop %v3432
    %v3491 = vrcp.pop %v3435
    %v3492 = vrcp.pop %v3438
    %v3493 = vrcp.pop %v3441
    %v3494 = vrcp.pop %v3444
    %v3495 = vrcp.pop %v3447
    %v3496 = vrcp.pop %v3450
    %v3497 = vrcp.pop %v3453
    %v3498 = vrcp.pop %v3456
    %v3499 = vrcp.pop %v3459
    %v3500 = vrcp.pop %v3462
    %v3501 = vrcp.pop %v3465
    %v3502 = vrcp.pop %v3468
    %v3503 = vrcp.pop %v3471
    %v3504 = vmul.f32 %v3313, %v3472
    %v3505 = vmul.f32 %v3315, %v3473
    %v3506 = vmul.f32 %v3317, %v3474
    %v3507 = vmul.f32 %v3319, %v3475
    %v3508 = vmul.f32 %v3321, %v3476
    %v3509 = vmul.f32 %v3323, %v3477
    %v3510 = vmul.f32 %v3325, %v3478
    %v3511 = vmul.f32 %v3327, %v3479
    %v3512 = vmul.f32 %v3329, %v3480
    %v3513 = vmul.f32 %v3331, %v3481
    %v3514 = vmul.f32 %v3333, %v3482
    %v3515 = vmul.f32 %v3335, %v3483
    %v3516 = vmul.f32 %v3337, %v3484
    %v3517 = vmul.f32 %v3339, %v3485
    %v3518 = vmul.f32 %v3341, %v3486
    %v3519 = vmul.f32 %v3343, %v3487
    %v3520 = vmul.f32 %v3345, %v3488
    %v3521 = vmul.f32 %v3347, %v3489
    %v3522 = vmul.f32 %v3349, %v3490
    %v3523 = vmul.f32 %v3351, %v3491
    %v3524 = vmul.f32 %v3353, %v3492
    %v3525 = vmul.f32 %v3355, %v3493
    %v3526 = vmul.f32 %v3357, %v3494
    %v3527 = vmul.f32 %v3359, %v3495
    %v3528 = vmul.f32 %v3361, %v3496
    %v3529 = vmul.f32 %v3363, %v3497
    %v3530 = vmul.f32 %v3365, %v3498
    %v3531 = vmul.f32 %v3367, %v3499
    %v3532 = vmul.f32 %v3369, %v3500
    %v3533 = vmul.f32 %v3371, %v3501
    %v3534 = vmul.f32 %v3373, %v3502
    %v3535 = vmul.f32 %v3375, %v3503
    %v3536 = vpack.c.bf16 %v3505, %v3504
    %v3537 = vpack.c.bf16 %v3507, %v3506
    %v3538 = vpack.c.bf16 %v3509, %v3508
    %v3539 = vpack.c.bf16 %v3511, %v3510
    %v3540 = vpack.c.bf16 %v3513, %v3512
    %v3541 = vpack.c.bf16 %v3515, %v3514
    %v3542 = vpack.c.bf16 %v3517, %v3516
    %v3543 = vpack.c.bf16 %v3519, %v3518
    %v3544 = vpack.c.bf16 %v3521, %v3520
    %v3545 = vpack.c.bf16 %v3523, %v3522
    %v3546 = vpack.c.bf16 %v3525, %v3524
    %v3547 = vpack.c.bf16 %v3527, %v3526
    %v3548 = vpack.c.bf16 %v3529, %v3528
    %v3549 = vpack.c.bf16 %v3531, %v3530
    %v3550 = vpack.c.bf16 %v3533, %v3532
    %v3551 = vpack.c.bf16 %v3535, %v3534
    %3552 = vrot.lane.b32.xlu0 %v448, 48
    %v3553 = vpop.permute.xlu0 %3552
    %3554 = vrot.lane.b32.xlu0 %v449, 48
    %v3555 = vpop.permute.xlu0 %3554
    %3556 = vrot.lane.b32.xlu0 %v450, 48
    %v3557 = vpop.permute.xlu0 %3556
    %3558 = vrot.lane.b32.xlu0 %v451, 48
    %v3559 = vpop.permute.xlu0 %3558
    %v3565 = vsel %vm877, %v3536, 0
    %v3568 = vsel %vm877, %v3537, 0
    %v3571 = vsel %vm877, %v3538, 0
    %v3574 = vsel %vm877, %v3539, 0
    %3576 = vmatprep.subr.bf16.mxu0 0
    %3577 = vmatpush1.bf16.msra.mxu0 %v3553
    %3578 = vmatprep.subr.bf16.mxu0 0
    %3579 = vmatpush1.bf16.msra.mxu0 %v3555
    %3580 = vmatprep.subr.bf16.mxu0 0
    %3581 = vmatpush1.bf16.msra.mxu0 %v3557
    %3582 = vmatprep.subr.bf16.mxu0 0
    %3583 = vmatpush1.bf16.msra.mxu0 %v3559
    %3584 = vmatprep.subr.bf16.mxu0 0
    %3585 = vmatpush1.bf16.msra.mxu0 0
    %3586 = vmatprep.subr.bf16.mxu0 0
    %3587 = vmatpush1.bf16.msra.mxu0 0
    %3588 = vmatprep.subr.bf16.mxu0 0
    %3589 = vmatpush1.bf16.msra.mxu0 0
    %3590 = vmatprep.subr.bf16.mxu0 0
    %3591 = vmatpush1.bf16.msra.mxu0 0
    %3592 = vmatprep.subr.bf16.mxu0 0
    %3593 = vmatpush1.bf16.msra.mxu0 0
    %3594 = vmatprep.subr.bf16.mxu0 0
    %3595 = vmatpush1.bf16.msra.mxu0 0
    %3596 = vmatprep.subr.bf16.mxu0 0
    %3597 = vmatpush1.bf16.msra.mxu0 0
    %3598 = vmatprep.subr.bf16.mxu0 0
    %3599 = vmatpush1.bf16.msra.mxu0 0
    %3600 = vmatprep.subr.bf16.mxu0 0
    %3601 = vmatpush1.bf16.msra.mxu0 0
    %3602 = vmatprep.subr.bf16.mxu0 0
    %3603 = vmatpush1.bf16.msra.mxu0 0
    %3604 = vmatprep.subr.bf16.mxu0 0
    %3605 = vmatpush1.bf16.msra.mxu0 0
    %3606 = vmatprep.subr.bf16.mxu0 0
    %3607 = vmatpush1.bf16.msra.mxu0 0
    %3608 = vmatprep.mubr.bf16.mxu0 0
    %3609 = vmatmul.mubr.bf16.gmra.mrb[0].mxu0 %v3565
    %v3610 = vpop.f32.mrb[0].mxu0
    %v3611 = vadd.f32 0.0, %v3610
    %v3612 = vpop.f32.mrb[0].mxu0
    %v3613 = vpop.f32.mrb[0].mxu0
    %v3614 = vadd.f32 0.0, %v3613
    %v3615 = vpop.f32.mrb[0].mxu0
    %3616 = vmatprep.mubr.bf16.mxu0 0
    %3617 = vmatmul.mubr.bf16.gmra.mrb[0].mxu0 %v3568
    %v3618 = vpop.f32.mrb[0].mxu0
    %v3619 = vadd.f32 0.0, %v3618
    %v3620 = vpop.f32.mrb[0].mxu0
    %v3621 = vpop.f32.mrb[0].mxu0
    %v3622 = vadd.f32 0.0, %v3621
    %v3623 = vpop.f32.mrb[0].mxu0
    %3624 = vmatprep.mubr.bf16.mxu0 0
    %3625 = vmatmul.mubr.bf16.gmra.mrb[0].mxu0 %v3571
    %v3626 = vpop.f32.mrb[0].mxu0
    %v3627 = vadd.f32 0.0, %v3626
    %v3628 = vpop.f32.mrb[0].mxu0
    %v3629 = vpop.f32.mrb[0].mxu0
    %v3630 = vadd.f32 0.0, %v3629
    %v3631 = vpop.f32.mrb[0].mxu0
    %3632 = vmatprep.mubr.bf16.mxu0 0
    %3633 = vmatmul.mubr.bf16.gmra.mrb[0].mxu0 %v3574
    %v3634 = vpop.f32.mrb[0].mxu0
    %v3635 = vadd.f32 0.0, %v3634
    %v3636 = vpop.f32.mrb[0].mxu0
    %v3637 = vpop.f32.mrb[0].mxu0
    %v3638 = vadd.f32 0.0, %v3637
    %v3639 = vpop.f32.mrb[0].mxu0
    %3640 = vdwg.mxu0
    %3641 = vrot.lane.b32.xlu0 %v452, 48
    %v3642 = vpop.permute.xlu0 %3641
    %3643 = vrot.lane.b32.xlu0 %v453, 48
    %v3644 = vpop.permute.xlu0 %3643
    %3645 = vrot.lane.b32.xlu0 %v454, 48
    %v3646 = vpop.permute.xlu0 %3645
    %3647 = vrot.lane.b32.xlu0 %v455, 48
    %v3648 = vpop.permute.xlu0 %3647
    %v3654 = vsel %vm877, %v3540, 0
    %v3657 = vsel %vm877, %v3541, 0
    %v3660 = vsel %vm877, %v3542, 0
    %v3663 = vsel %vm877, %v3543, 0
    %3665 = vmatprep.subr.bf16.mxu0 0
    %3666 = vmatpush1.bf16.msra.mxu0 %v3642
    %3667 = vmatprep.subr.bf16.mxu0 0
    %3668 = vmatpush1.bf16.msra.mxu0 %v3644
    %3669 = vmatprep.subr.bf16.mxu0 0
    %3670 = vmatpush1.bf16.msra.mxu0 %v3646
    %3671 = vmatprep.subr.bf16.mxu0 0
    %3672 = vmatpush1.bf16.msra.mxu0 %v3648
    %3673 = vmatprep.subr.bf16.mxu0 0
    %3674 = vmatpush1.bf16.msra.mxu0 0
    %3675 = vmatprep.subr.bf16.mxu0 0
    %3676 = vmatpush1.bf16.msra.mxu0 0
    %3677 = vmatprep.subr.bf16.mxu0 0
    %3678 = vmatpush1.bf16.msra.mxu0 0
    %3679 = vmatprep.subr.bf16.mxu0 0
    %3680 = vmatpush1.bf16.msra.mxu0 0
    %3681 = vmatprep.subr.bf16.mxu0 0
    %3682 = vmatpush1.bf16.msra.mxu0 0
    %3683 = vmatprep.subr.bf16.mxu0 0
    %3684 = vmatpush1.bf16.msra.mxu0 0
    %3685 = vmatprep.subr.bf16.mxu0 0
    %3686 = vmatpush1.bf16.msra.mxu0 0
    %3687 = vmatprep.subr.bf16.mxu0 0
    %3688 = vmatpush1.bf16.msra.mxu0 0
    %3689 = vmatprep.subr.bf16.mxu0 0
    %3690 = vmatpush1.bf16.msra.mxu0 0
    %3691 = vmatprep.subr.bf16.mxu0 0
    %3692 = vmatpush1.bf16.msra.mxu0 0
    %3693 = vmatprep.subr.bf16.mxu0 0
    %3694 = vmatpush1.bf16.msra.mxu0 0
    %3695 = vmatprep.subr.bf16.mxu0 0
    %3696 = vmatpush1.bf16.msra.mxu0 0
    %3697 = vmatprep.mubr.bf16.mxu0 0
    %3698 = vmatmul.mubr.bf16.gmra.mrb[0].mxu0 %v3654
    %v3699 = vpop.f32.mrb[0].mxu0
    %v3700 = vadd.f32 0.0, %v3699
    %v3701 = vpop.f32.mrb[0].mxu0
    %v3702 = vpop.f32.mrb[0].mxu0
    %v3703 = vadd.f32 0.0, %v3702
    %v3704 = vpop.f32.mrb[0].mxu0
    %3705 = vmatprep.mubr.bf16.mxu0 0
    %3706 = vmatmul.mubr.bf16.gmra.mrb[0].mxu0 %v3657
    %v3707 = vpop.f32.mrb[0].mxu0
    %v3708 = vadd.f32 0.0, %v3707
    %v3709 = vpop.f32.mrb[0].mxu0
    %v3710 = vpop.f32.mrb[0].mxu0
    %v3711 = vadd.f32 0.0, %v3710
    %v3712 = vpop.f32.mrb[0].mxu0
    %3713 = vmatprep.mubr.bf16.mxu0 0
    %3714 = vmatmul.mubr.bf16.gmra.mrb[0].mxu0 %v3660
    %v3715 = vpop.f32.mrb[0].mxu0
    %v3716 = vadd.f32 0.0, %v3715
    %v3717 = vpop.f32.mrb[0].mxu0
    %v3718 = vpop.f32.mrb[0].mxu0
    %v3719 = vadd.f32 0.0, %v3718
    %v3720 = vpop.f32.mrb[0].mxu0
    %3721 = vmatprep.mubr.bf16.mxu0 0
    %3722 = vmatmul.mubr.bf16.gmra.mrb[0].mxu0 %v3663
    %v3723 = vpop.f32.mrb[0].mxu0
    %v3724 = vadd.f32 0.0, %v3723
    %v3725 = vpop.f32.mrb[0].mxu0
    %v3726 = vpop.f32.mrb[0].mxu0
    %v3727 = vadd.f32 0.0, %v3726
    %v3728 = vpop.f32.mrb[0].mxu0
    %3729 = vdwg.mxu0
    %3730 = vrot.lane.b32.xlu0 %v456, 48
    %v3731 = vpop.permute.xlu0 %3730
    %3732 = vrot.lane.b32.xlu0 %v457, 48
    %v3733 = vpop.permute.xlu0 %3732
    %3734 = vrot.lane.b32.xlu0 %v458, 48
    %v3735 = vpop.permute.xlu0 %3734
    %3736 = vrot.lane.b32.xlu0 %v459, 48
    %v3737 = vpop.permute.xlu0 %3736
    %v3743 = vsel %vm877, %v3544, 0
    %v3746 = vsel %vm877, %v3545, 0
    %v3749 = vsel %vm877, %v3546, 0
    %v3752 = vsel %vm877, %v3547, 0
    %3754 = vmatprep.subr.bf16.mxu0 0
    %3755 = vmatpush1.bf16.msra.mxu0 %v3731
    %3756 = vmatprep.subr.bf16.mxu0 0
    %3757 = vmatpush1.bf16.msra.mxu0 %v3733
    %3758 = vmatprep.subr.bf16.mxu0 0
    %3759 = vmatpush1.bf16.msra.mxu0 %v3735
    %3760 = vmatprep.subr.bf16.mxu0 0
    %3761 = vmatpush1.bf16.msra.mxu0 %v3737
    %3762 = vmatprep.subr.bf16.mxu0 0
    %3763 = vmatpush1.bf16.msra.mxu0 0
    %3764 = vmatprep.subr.bf16.mxu0 0
    %3765 = vmatpush1.bf16.msra.mxu0 0
    %3766 = vmatprep.subr.bf16.mxu0 0
    %3767 = vmatpush1.bf16.msra.mxu0 0
    %3768 = vmatprep.subr.bf16.mxu0 0
    %3769 = vmatpush1.bf16.msra.mxu0 0
    %3770 = vmatprep.subr.bf16.mxu0 0
    %3771 = vmatpush1.bf16.msra.mxu0 0
    %3772 = vmatprep.subr.bf16.mxu0 0
    %3773 = vmatpush1.bf16.msra.mxu0 0
    %3774 = vmatprep.subr.bf16.mxu0 0
    %3775 = vmatpush1.bf16.msra.mxu0 0
    %3776 = vmatprep.subr.bf16.mxu0 0
    %3777 = vmatpush1.bf16.msra.mxu0 0
    %3778 = vmatprep.subr.bf16.mxu0 0
    %3779 = vmatpush1.bf16.msra.mxu0 0
    %3780 = vmatprep.subr.bf16.mxu0 0
    %3781 = vmatpush1.bf16.msra.mxu0 0
    %3782 = vmatprep.subr.bf16.mxu0 0
    %3783 = vmatpush1.bf16.msra.mxu0 0
    %3784 = vmatprep.subr.bf16.mxu0 0
    %3785 = vmatpush1.bf16.msra.mxu0 0
    %3786 = vmatprep.mubr.bf16.mxu0 0
    %3787 = vmatmul.mubr.bf16.gmra.mrb[0].mxu0 %v3743
    %v3788 = vpop.f32.mrb[0].mxu0
    %v3789 = vadd.f32 0.0, %v3788
    %v3790 = vpop.f32.mrb[0].mxu0
    %v3791 = vpop.f32.mrb[0].mxu0
    %v3792 = vadd.f32 0.0, %v3791
    %v3793 = vpop.f32.mrb[0].mxu0
    %3794 = vmatprep.mubr.bf16.mxu0 0
    %3795 = vmatmul.mubr.bf16.gmra.mrb[0].mxu0 %v3746
    %v3796 = vpop.f32.mrb[0].mxu0
    %v3797 = vadd.f32 0.0, %v3796
    %v3798 = vpop.f32.mrb[0].mxu0
    %v3799 = vpop.f32.mrb[0].mxu0
    %v3800 = vadd.f32 0.0, %v3799
    %v3801 = vpop.f32.mrb[0].mxu0
    %3802 = vmatprep.mubr.bf16.mxu0 0
    %3803 = vmatmul.mubr.bf16.gmra.mrb[0].mxu0 %v3749
    %v3804 = vpop.f32.mrb[0].mxu0
    %v3805 = vadd.f32 0.0, %v3804
    %v3806 = vpop.f32.mrb[0].mxu0
    %v3807 = vpop.f32.mrb[0].mxu0
    %v3808 = vadd.f32 0.0, %v3807
    %v3809 = vpop.f32.mrb[0].mxu0
    %3810 = vmatprep.mubr.bf16.mxu0 0
    %3811 = vmatmul.mubr.bf16.gmra.mrb[0].mxu0 %v3752
    %v3812 = vpop.f32.mrb[0].mxu0
    %v3813 = vadd.f32 0.0, %v3812
    %v3814 = vpop.f32.mrb[0].mxu0
    %v3815 = vpop.f32.mrb[0].mxu0
    %v3816 = vadd.f32 0.0, %v3815
    %v3817 = vpop.f32.mrb[0].mxu0
    %3818 = vdwg.mxu0
    %3819 = vrot.lane.b32.xlu0 %v460, 48
    %v3820 = vpop.permute.xlu0 %3819
    %3821 = vrot.lane.b32.xlu0 %v461, 48
    %v3822 = vpop.permute.xlu0 %3821
    %3823 = vrot.lane.b32.xlu0 %v462, 48
    %v3824 = vpop.permute.xlu0 %3823
    %3825 = vrot.lane.b32.xlu0 %v463, 48
    %v3826 = vpop.permute.xlu0 %3825
    %v3832 = vsel %vm877, %v3548, 0
    %v3835 = vsel %vm877, %v3549, 0
    %v3838 = vsel %vm877, %v3550, 0
    %v3841 = vsel %vm877, %v3551, 0
    %3843 = vmatprep.subr.bf16.mxu0 0
    %3844 = vmatpush1.bf16.msra.mxu0 %v3820
    %3845 = vmatprep.subr.bf16.mxu0 0
    %3846 = vmatpush1.bf16.msra.mxu0 %v3822
    %3847 = vmatprep.subr.bf16.mxu0 0
    %3848 = vmatpush1.bf16.msra.mxu0 %v3824
    %3849 = vmatprep.subr.bf16.mxu0 0
    %3850 = vmatpush1.bf16.msra.mxu0 %v3826
    %3851 = vmatprep.subr.bf16.mxu0 0
    %3852 = vmatpush1.bf16.msra.mxu0 0
    %3853 = vmatprep.subr.bf16.mxu0 0
    %3854 = vmatpush1.bf16.msra.mxu0 0
    %3855 = vmatprep.subr.bf16.mxu0 0
    %3856 = vmatpush1.bf16.msra.mxu0 0
    %3857 = vmatprep.subr.bf16.mxu0 0
    %3858 = vmatpush1.bf16.msra.mxu0 0
    %3859 = vmatprep.subr.bf16.mxu0 0
    %3860 = vmatpush1.bf16.msra.mxu0 0
    %3861 = vmatprep.subr.bf16.mxu0 0
    %3862 = vmatpush1.bf16.msra.mxu0 0
    %3863 = vmatprep.subr.bf16.mxu0 0
    %3864 = vmatpush1.bf16.msra.mxu0 0
    %3865 = vmatprep.subr.bf16.mxu0 0
    %3866 = vmatpush1.bf16.msra.mxu0 0
    %3867 = vmatprep.subr.bf16.mxu0 0
    %3868 = vmatpush1.bf16.msra.mxu0 0
    %3869 = vmatprep.subr.bf16.mxu0 0
    %3870 = vmatpush1.bf16.msra.mxu0 0
    %3871 = vmatprep.subr.bf16.mxu0 0
    %3872 = vmatpush1.bf16.msra.mxu0 0
    %3873 = vmatprep.subr.bf16.mxu0 0
    %3874 = vmatpush1.bf16.msra.mxu0 0
    %3875 = vmatprep.mubr.bf16.mxu0 0
    %3876 = vmatmul.mubr.bf16.gmra.mrb[0].mxu0 %v3832
    %v3877 = vpop.f32.mrb[0].mxu0
    %v3878 = vadd.f32 0.0, %v3877
    %v3879 = vpop.f32.mrb[0].mxu0
    %v3880 = vpop.f32.mrb[0].mxu0
    %v3881 = vadd.f32 0.0, %v3880
    %v3882 = vpop.f32.mrb[0].mxu0
    %3883 = vmatprep.mubr.bf16.mxu0 0
    %3884 = vmatmul.mubr.bf16.gmra.mrb[0].mxu0 %v3835
    %v3885 = vpop.f32.mrb[0].mxu0
    %v3886 = vadd.f32 0.0, %v3885
    %v3887 = vpop.f32.mrb[0].mxu0
    %v3888 = vpop.f32.mrb[0].mxu0
    %v3889 = vadd.f32 0.0, %v3888
    %v3890 = vpop.f32.mrb[0].mxu0
    %3891 = vmatprep.mubr.bf16.mxu0 0
    %3892 = vmatmul.mubr.bf16.gmra.mrb[0].mxu0 %v3838
    %v3893 = vpop.f32.mrb[0].mxu0
    %v3894 = vadd.f32 0.0, %v3893
    %v3895 = vpop.f32.mrb[0].mxu0
    %v3896 = vpop.f32.mrb[0].mxu0
    %v3897 = vadd.f32 0.0, %v3896
    %v3898 = vpop.f32.mrb[0].mxu0
    %3899 = vmatprep.mubr.bf16.mxu0 0
    %3900 = vmatmul.mubr.bf16.gmra.mrb[0].mxu0 %v3841
    %v3901 = vpop.f32.mrb[0].mxu0
    %v3902 = vadd.f32 0.0, %v3901
    %v3903 = vpop.f32.mrb[0].mxu0
    %v3904 = vpop.f32.mrb[0].mxu0
    %v3905 = vadd.f32 0.0, %v3904
    %v3906 = vpop.f32.mrb[0].mxu0
    %3907 = vdwg.mxu0
    %s3908 = scalar_lea.vmem [#allocation8], 192
    %v3909 = vld [vmem:[%s3908] sm:$0xff]
    %v3910 = vld [vmem:[%s3908 + $0x8] sm:$0xff]
    %v3911 = vld [vmem:[%s3908 + $0x10] sm:$0xff]
    %v3912 = vld [vmem:[%s3908 + $0x18] sm:$0xff]
    %v3913 = vld [vmem:[%s3908 + $0x20] sm:$0xff]
    %v3914 = vld [vmem:[%s3908 + $0x28] sm:$0xff]
    %v3915 = vld [vmem:[%s3908 + $0x30] sm:$0xff]
    %v3916 = vld [vmem:[%s3908 + $0x38] sm:$0xff]
    %3917 = vrot.lane.b32.xlu0 %v448, 104
    %v3918 = vpop.permute.xlu0 %3917
    %3919 = vrot.lane.b32.xlu0 %v449, 104
    %v3920 = vpop.permute.xlu0 %3919
    %3921 = vrot.lane.b32.xlu0 %v450, 104
    %v3922 = vpop.permute.xlu0 %3921
    %3923 = vrot.lane.b32.xlu0 %v451, 104
    %v3924 = vpop.permute.xlu0 %3923
    %3925 = vrot.lane.b32.xlu0 %v448, 72
    %v3926 = vpop.permute.xlu0 %3925
    %3927 = vrot.lane.b32.xlu0 %v449, 72
    %v3928 = vpop.permute.xlu0 %3927
    %3929 = vrot.lane.b32.xlu0 %v450, 72
    %v3930 = vpop.permute.xlu0 %3929
    %3931 = vrot.lane.b32.xlu0 %v451, 72
    %v3932 = vpop.permute.xlu0 %3931
    %v3934 = vsel %vm484, %v3918, 0
    %v3937 = vsel %vm484, %v3920, 0
    %v3940 = vsel %vm484, %v3922, 0
    %v3943 = vsel %vm484, %v3924, 0
    %v3946 = vsel %vm484, %v3926, 0
    %v3949 = vsel %vm484, %v3928, 0
    %v3952 = vsel %vm484, %v3930, 0
    %v3955 = vsel %vm484, %v3932, 0
    %3957 = vmatprep.subr.bf16.mxu0 0
    %3958 = vmatpush1.bf16.xpose.msra.mxu0 %v3946
    %3959 = vmatprep.subr.bf16.mxu0 0
    %3960 = vmatpush1.bf16.xpose.msra.mxu0 %v3949
    %3961 = vmatprep.subr.bf16.mxu0 0
    %3962 = vmatpush1.bf16.xpose.msra.mxu0 %v3952
    %3963 = vmatprep.subr.bf16.mxu0 0
    %3964 = vmatpush1.bf16.xpose.msra.mxu0 %v3955
    %3965 = vmatprep.subr.bf16.mxu0 0
    %3966 = vmatpush1.bf16.xpose.msra.mxu0 0
    %3967 = vmatprep.subr.bf16.mxu0 0
    %3968 = vmatpush1.bf16.xpose.msra.mxu0 0
    %3969 = vmatprep.subr.bf16.mxu0 0
    %3970 = vmatpush1.bf16.xpose.msra.mxu0 0
    %3971 = vmatprep.subr.bf16.mxu0 0
    %3972 = vmatpush1.bf16.xpose.msra.mxu0 0
    %3973 = vmatprep.subr.bf16.mxu0 0
    %3974 = vmatpush1.bf16.xpose.msra.mxu0 0
    %3975 = vmatprep.subr.bf16.mxu0 0
    %3976 = vmatpush1.bf16.xpose.msra.mxu0 0
    %3977 = vmatprep.subr.bf16.mxu0 0
    %3978 = vmatpush1.bf16.xpose.msra.mxu0 0
    %3979 = vmatprep.subr.bf16.mxu0 0
    %3980 = vmatpush1.bf16.xpose.msra.mxu0 0
    %3981 = vmatprep.subr.bf16.mxu0 0
    %3982 = vmatpush1.bf16.xpose.msra.mxu0 0
    %3983 = vmatprep.subr.bf16.mxu0 0
    %3984 = vmatpush1.bf16.xpose.msra.mxu0 0
    %3985 = vmatprep.subr.bf16.mxu0 0
    %3986 = vmatpush1.bf16.xpose.msra.mxu0 0
    %3987 = vmatprep.subr.bf16.mxu0 0
    %3988 = vmatpush1.bf16.xpose.msra.mxu0 0
    %3989 = vmatprep.mubr.bf16.mxu0 0
    %3990 = vmatmul.mubr.bf16.gmra.mrb[0].mxu0 %v3934
    %v3991 = vpop.f32.mrb[0].mxu0
    %v3992 = vadd.f32 %v3909, %v3991
    %v3993 = vpop.f32.mrb[0].mxu0
    %v3994 = vpop.f32.mrb[0].mxu0
    %v3995 = vadd.f32 %v3910, %v3994
    %v3996 = vpop.f32.mrb[0].mxu0
    %3997 = vmatprep.mubr.bf16.mxu0 0
    %3998 = vmatmul.mubr.bf16.gmra.mrb[0].mxu0 %v3937
    %v3999 = vpop.f32.mrb[0].mxu0
    %v4000 = vadd.f32 %v3911, %v3999
    %v4001 = vpop.f32.mrb[0].mxu0
    %v4002 = vpop.f32.mrb[0].mxu0
    %v4003 = vadd.f32 %v3912, %v4002
    %v4004 = vpop.f32.mrb[0].mxu0
    %4005 = vmatprep.mubr.bf16.mxu0 0
    %4006 = vmatmul.mubr.bf16.gmra.mrb[0].mxu0 %v3940
    %v4007 = vpop.f32.mrb[0].mxu0
    %v4008 = vadd.f32 %v3913, %v4007
    %v4009 = vpop.f32.mrb[0].mxu0
    %v4010 = vpop.f32.mrb[0].mxu0
    %v4011 = vadd.f32 %v3914, %v4010
    %v4012 = vpop.f32.mrb[0].mxu0
    %4013 = vmatprep.mubr.bf16.mxu0 0
    %4014 = vmatmul.mubr.bf16.gmra.mrb[0].mxu0 %v3943
    %v4015 = vpop.f32.mrb[0].mxu0
    %v4016 = vadd.f32 %v3915, %v4015
    %v4017 = vpop.f32.mrb[0].mxu0
    %v4018 = vpop.f32.mrb[0].mxu0
    %v4019 = vadd.f32 %v3916, %v4018
    %v4020 = vpop.f32.mrb[0].mxu0
    %4021 = vdwg.mxu0
    %4022 = vrot.lane.b32.xlu0 %v452, 104
    %v4023 = vpop.permute.xlu0 %4022
    %4024 = vrot.lane.b32.xlu0 %v453, 104
    %v4025 = vpop.permute.xlu0 %4024
    %4026 = vrot.lane.b32.xlu0 %v454, 104
    %v4027 = vpop.permute.xlu0 %4026
    %4028 = vrot.lane.b32.xlu0 %v455, 104
    %v4029 = vpop.permute.xlu0 %4028
    %4030 = vrot.lane.b32.xlu0 %v452, 72
    %v4031 = vpop.permute.xlu0 %4030
    %4032 = vrot.lane.b32.xlu0 %v453, 72
    %v4033 = vpop.permute.xlu0 %4032
    %4034 = vrot.lane.b32.xlu0 %v454, 72
    %v4035 = vpop.permute.xlu0 %4034
    %4036 = vrot.lane.b32.xlu0 %v455, 72
    %v4037 = vpop.permute.xlu0 %4036
    %v4039 = vsel %vm484, %v4023, 0
    %v4042 = vsel %vm484, %v4025, 0
    %v4045 = vsel %vm484, %v4027, 0
    %v4048 = vsel %vm484, %v4029, 0
    %v4051 = vsel %vm484, %v4031, 0
    %v4054 = vsel %vm484, %v4033, 0
    %v4057 = vsel %vm484, %v4035, 0
    %v4060 = vsel %vm484, %v4037, 0
    %4062 = vmatprep.subr.bf16.mxu0 0
    %4063 = vmatpush1.bf16.xpose.msra.mxu0 %v4051
    %4064 = vmatprep.subr.bf16.mxu0 0
    %4065 = vmatpush1.bf16.xpose.msra.mxu0 %v4054
    %4066 = vmatprep.subr.bf16.mxu0 0
    %4067 = vmatpush1.bf16.xpose.msra.mxu0 %v4057
    %4068 = vmatprep.subr.bf16.mxu0 0
    %4069 = vmatpush1.bf16.xpose.msra.mxu0 %v4060
    %4070 = vmatprep.subr.bf16.mxu0 0
    %4071 = vmatpush1.bf16.xpose.msra.mxu0 0
    %4072 = vmatprep.subr.bf16.mxu0 0
    %4073 = vmatpush1.bf16.xpose.msra.mxu0 0
    %4074 = vmatprep.subr.bf16.mxu0 0
    %4075 = vmatpush1.bf16.xpose.msra.mxu0 0
    %4076 = vmatprep.subr.bf16.mxu0 0
    %4077 = vmatpush1.bf16.xpose.msra.mxu0 0
    %4078 = vmatprep.subr.bf16.mxu0 0
    %4079 = vmatpush1.bf16.xpose.msra.mxu0 0
    %4080 = vmatprep.subr.bf16.mxu0 0
    %4081 = vmatpush1.bf16.xpose.msra.mxu0 0
    %4082 = vmatprep.subr.bf16.mxu0 0
    %4083 = vmatpush1.bf16.xpose.msra.mxu0 0
    %4084 = vmatprep.subr.bf16.mxu0 0
    %4085 = vmatpush1.bf16.xpose.msra.mxu0 0
    %4086 = vmatprep.subr.bf16.mxu0 0
    %4087 = vmatpush1.bf16.xpose.msra.mxu0 0
    %4088 = vmatprep.subr.bf16.mxu0 0
    %4089 = vmatpush1.bf16.xpose.msra.mxu0 0
    %4090 = vmatprep.subr.bf16.mxu0 0
    %4091 = vmatpush1.bf16.xpose.msra.mxu0 0
    %4092 = vmatprep.subr.bf16.mxu0 0
    %4093 = vmatpush1.bf16.xpose.msra.mxu0 0
    %4094 = vmatprep.mubr.bf16.mxu0 0
    %4095 = vmatmul.mubr.bf16.gmra.mrb[0].mxu0 %v4039
    %v4096 = vpop.f32.mrb[0].mxu0
    %v4097 = vadd.f32 %v3909, %v4096
    %v4098 = vpop.f32.mrb[0].mxu0
    %v4099 = vpop.f32.mrb[0].mxu0
    %v4100 = vadd.f32 %v3910, %v4099
    %v4101 = vpop.f32.mrb[0].mxu0
    %4102 = vmatprep.mubr.bf16.mxu0 0
    %4103 = vmatmul.mubr.bf16.gmra.mrb[0].mxu0 %v4042
    %v4104 = vpop.f32.mrb[0].mxu0
    %v4105 = vadd.f32 %v3911, %v4104
    %v4106 = vpop.f32.mrb[0].mxu0
    %v4107 = vpop.f32.mrb[0].mxu0
    %v4108 = vadd.f32 %v3912, %v4107
    %v4109 = vpop.f32.mrb[0].mxu0
    %4110 = vmatprep.mubr.bf16.mxu0 0
    %4111 = vmatmul.mubr.bf16.gmra.mrb[0].mxu0 %v4045
    %v4112 = vpop.f32.mrb[0].mxu0
    %v4113 = vadd.f32 %v3913, %v4112
    %v4114 = vpop.f32.mrb[0].mxu0
    %v4115 = vpop.f32.mrb[0].mxu0
    %v4116 = vadd.f32 %v3914, %v4115
    %v4117 = vpop.f32.mrb[0].mxu0
    %4118 = vmatprep.mubr.bf16.mxu0 0
    %4119 = vmatmul.mubr.bf16.gmra.mrb[0].mxu0 %v4048
    %v4120 = vpop.f32.mrb[0].mxu0
    %v4121 = vadd.f32 %v3915, %v4120
    %v4122 = vpop.f32.mrb[0].mxu0
    %v4123 = vpop.f32.mrb[0].mxu0
    %v4124 = vadd.f32 %v3916, %v4123
    %v4125 = vpop.f32.mrb[0].mxu0
    %4126 = vdwg.mxu0
    %4127 = vrot.lane.b32.xlu0 %v456, 104
    %v4128 = vpop.permute.xlu0 %4127
    %4129 = vrot.lane.b32.xlu0 %v457, 104
    %v4130 = vpop.permute.xlu0 %4129
    %4131 = vrot.lane.b32.xlu0 %v458, 104
    %v4132 = vpop.permute.xlu0 %4131
    %4133 = vrot.lane.b32.xlu0 %v459, 104
    %v4134 = vpop.permute.xlu0 %4133
    %4135 = vrot.lane.b32.xlu0 %v456, 72
    %v4136 = vpop.permute.xlu0 %4135
    %4137 = vrot.lane.b32.xlu0 %v457, 72
    %v4138 = vpop.permute.xlu0 %4137
    %4139 = vrot.lane.b32.xlu0 %v458, 72
    %v4140 = vpop.permute.xlu0 %4139
    %4141 = vrot.lane.b32.xlu0 %v459, 72
    %v4142 = vpop.permute.xlu0 %4141
    %v4144 = vsel %vm484, %v4128, 0
    %v4147 = vsel %vm484, %v4130, 0
    %v4150 = vsel %vm484, %v4132, 0
    %v4153 = vsel %vm484, %v4134, 0
    %v4156 = vsel %vm484, %v4136, 0
    %v4159 = vsel %vm484, %v4138, 0
    %v4162 = vsel %vm484, %v4140, 0
    %v4165 = vsel %vm484, %v4142, 0
    %4167 = vmatprep.subr.bf16.mxu0 0
    %4168 = vmatpush1.bf16.xpose.msra.mxu0 %v4156
    %4169 = vmatprep.subr.bf16.mxu0 0
    %4170 = vmatpush1.bf16.xpose.msra.mxu0 %v4159
    %4171 = vmatprep.subr.bf16.mxu0 0
    %4172 = vmatpush1.bf16.xpose.msra.mxu0 %v4162
    %4173 = vmatprep.subr.bf16.mxu0 0
    %4174 = vmatpush1.bf16.xpose.msra.mxu0 %v4165
    %4175 = vmatprep.subr.bf16.mxu0 0
    %4176 = vmatpush1.bf16.xpose.msra.mxu0 0
    %4177 = vmatprep.subr.bf16.mxu0 0
    %4178 = vmatpush1.bf16.xpose.msra.mxu0 0
    %4179 = vmatprep.subr.bf16.mxu0 0
    %4180 = vmatpush1.bf16.xpose.msra.mxu0 0
    %4181 = vmatprep.subr.bf16.mxu0 0
    %4182 = vmatpush1.bf16.xpose.msra.mxu0 0
    %4183 = vmatprep.subr.bf16.mxu0 0
    %4184 = vmatpush1.bf16.xpose.msra.mxu0 0
    %4185 = vmatprep.subr.bf16.mxu0 0
    %4186 = vmatpush1.bf16.xpose.msra.mxu0 0
    %4187 = vmatprep.subr.bf16.mxu0 0
    %4188 = vmatpush1.bf16.xpose.msra.mxu0 0
    %4189 = vmatprep.subr.bf16.mxu0 0
    %4190 = vmatpush1.bf16.xpose.msra.mxu0 0
    %4191 = vmatprep.subr.bf16.mxu0 0
    %4192 = vmatpush1.bf16.xpose.msra.mxu0 0
    %4193 = vmatprep.subr.bf16.mxu0 0
    %4194 = vmatpush1.bf16.xpose.msra.mxu0 0
    %4195 = vmatprep.subr.bf16.mxu0 0
    %4196 = vmatpush1.bf16.xpose.msra.mxu0 0
    %4197 = vmatprep.subr.bf16.mxu0 0
    %4198 = vmatpush1.bf16.xpose.msra.mxu0 0
    %4199 = vmatprep.mubr.bf16.mxu0 0
    %4200 = vmatmul.mubr.bf16.gmra.mrb[0].mxu0 %v4144
    %v4201 = vpop.f32.mrb[0].mxu0
    %v4202 = vadd.f32 %v3909, %v4201
    %v4203 = vpop.f32.mrb[0].mxu0
    %v4204 = vpop.f32.mrb[0].mxu0
    %v4205 = vadd.f32 %v3910, %v4204
    %v4206 = vpop.f32.mrb[0].mxu0
    %4207 = vmatprep.mubr.bf16.mxu0 0
    %4208 = vmatmul.mubr.bf16.gmra.mrb[0].mxu0 %v4147
    %v4209 = vpop.f32.mrb[0].mxu0
    %v4210 = vadd.f32 %v3911, %v4209
    %v4211 = vpop.f32.mrb[0].mxu0
    %v4212 = vpop.f32.mrb[0].mxu0
    %v4213 = vadd.f32 %v3912, %v4212
    %v4214 = vpop.f32.mrb[0].mxu0
    %4215 = vmatprep.mubr.bf16.mxu0 0
    %4216 = vmatmul.mubr.bf16.gmra.mrb[0].mxu0 %v4150
    %v4217 = vpop.f32.mrb[0].mxu0
    %v4218 = vadd.f32 %v3913, %v4217
    %v4219 = vpop.f32.mrb[0].mxu0
    %v4220 = vpop.f32.mrb[0].mxu0
    %v4221 = vadd.f32 %v3914, %v4220
    %v4222 = vpop.f32.mrb[0].mxu0
    %4223 = vmatprep.mubr.bf16.mxu0 0
    %4224 = vmatmul.mubr.bf16.gmra.mrb[0].mxu0 %v4153
    %v4225 = vpop.f32.mrb[0].mxu0
    %v4226 = vadd.f32 %v3915, %v4225
    %v4227 = vpop.f32.mrb[0].mxu0
    %v4228 = vpop.f32.mrb[0].mxu0
    %v4229 = vadd.f32 %v3916, %v4228
    %v4230 = vpop.f32.mrb[0].mxu0
    %4231 = vdwg.mxu0
    %4232 = vrot.lane.b32.xlu0 %v460, 104
    %v4233 = vpop.permute.xlu0 %4232
    %4234 = vrot.lane.b32.xlu0 %v461, 104
    %v4235 = vpop.permute.xlu0 %4234
    %4236 = vrot.lane.b32.xlu0 %v462, 104
    %v4237 = vpop.permute.xlu0 %4236
    %4238 = vrot.lane.b32.xlu0 %v463, 104
    %v4239 = vpop.permute.xlu0 %4238
    %4240 = vrot.lane.b32.xlu0 %v460, 72
    %v4241 = vpop.permute.xlu0 %4240
    %4242 = vrot.lane.b32.xlu0 %v461, 72
    %v4243 = vpop.permute.xlu0 %4242
    %4244 = vrot.lane.b32.xlu0 %v462, 72
    %v4245 = vpop.permute.xlu0 %4244
    %4246 = vrot.lane.b32.xlu0 %v463, 72
    %v4247 = vpop.permute.xlu0 %4246
    %v4249 = vsel %vm484, %v4233, 0
    %v4252 = vsel %vm484, %v4235, 0
    %v4255 = vsel %vm484, %v4237, 0
    %v4258 = vsel %vm484, %v4239, 0
    %v4261 = vsel %vm484, %v4241, 0
    %v4264 = vsel %vm484, %v4243, 0
    %v4267 = vsel %vm484, %v4245, 0
    %v4270 = vsel %vm484, %v4247, 0
    %4272 = vmatprep.subr.bf16.mxu0 0
    %4273 = vmatpush1.bf16.xpose.msra.mxu0 %v4261
    %4274 = vmatprep.subr.bf16.mxu0 0
    %4275 = vmatpush1.bf16.xpose.msra.mxu0 %v4264
    %4276 = vmatprep.subr.bf16.mxu0 0
    %4277 = vmatpush1.bf16.xpose.msra.mxu0 %v4267
    %4278 = vmatprep.subr.bf16.mxu0 0
    %4279 = vmatpush1.bf16.xpose.msra.mxu0 %v4270
    %4280 = vmatprep.subr.bf16.mxu0 0
    %4281 = vmatpush1.bf16.xpose.msra.mxu0 0
    %4282 = vmatprep.subr.bf16.mxu0 0
    %4283 = vmatpush1.bf16.xpose.msra.mxu0 0
    %4284 = vmatprep.subr.bf16.mxu0 0
    %4285 = vmatpush1.bf16.xpose.msra.mxu0 0
    %4286 = vmatprep.subr.bf16.mxu0 0
    %4287 = vmatpush1.bf16.xpose.msra.mxu0 0
    %4288 = vmatprep.subr.bf16.mxu0 0
    %4289 = vmatpush1.bf16.xpose.msra.mxu0 0
    %4290 = vmatprep.subr.bf16.mxu0 0
    %4291 = vmatpush1.bf16.xpose.msra.mxu0 0
    %4292 = vmatprep.subr.bf16.mxu0 0
    %4293 = vmatpush1.bf16.xpose.msra.mxu0 0
    %4294 = vmatprep.subr.bf16.mxu0 0
    %4295 = vmatpush1.bf16.xpose.msra.mxu0 0
    %4296 = vmatprep.subr.bf16.mxu0 0
    %4297 = vmatpush1.bf16.xpose.msra.mxu0 0
    %4298 = vmatprep.subr.bf16.mxu0 0
    %4299 = vmatpush1.bf16.xpose.msra.mxu0 0
    %4300 = vmatprep.subr.bf16.mxu0 0
    %4301 = vmatpush1.bf16.xpose.msra.mxu0 0
    %4302 = vmatprep.subr.bf16.mxu0 0
    %4303 = vmatpush1.bf16.xpose.msra.mxu0 0
    %4304 = vmatprep.mubr.bf16.mxu0 0
    %4305 = vmatmul.mubr.bf16.gmra.mrb[0].mxu0 %v4249
    %v4306 = vpop.f32.mrb[0].mxu0
    %v4307 = vadd.f32 %v3909, %v4306
    %v4308 = vpop.f32.mrb[0].mxu0
    %v4309 = vpop.f32.mrb[0].mxu0
    %v4310 = vadd.f32 %v3910, %v4309
    %v4311 = vpop.f32.mrb[0].mxu0
    %4312 = vmatprep.mubr.bf16.mxu0 0
    %4313 = vmatmul.mubr.bf16.gmra.mrb[0].mxu0 %v4252
    %v4314 = vpop.f32.mrb[0].mxu0
    %v4315 = vadd.f32 %v3911, %v4314
    %v4316 = vpop.f32.mrb[0].mxu0
    %v4317 = vpop.f32.mrb[0].mxu0
    %v4318 = vadd.f32 %v3912, %v4317
    %v4319 = vpop.f32.mrb[0].mxu0
    %4320 = vmatprep.mubr.bf16.mxu0 0
    %4321 = vmatmul.mubr.bf16.gmra.mrb[0].mxu0 %v4255
    %v4322 = vpop.f32.mrb[0].mxu0
    %v4323 = vadd.f32 %v3913, %v4322
    %v4324 = vpop.f32.mrb[0].mxu0
    %v4325 = vpop.f32.mrb[0].mxu0
    %v4326 = vadd.f32 %v3914, %v4325
    %v4327 = vpop.f32.mrb[0].mxu0
    %4328 = vmatprep.mubr.bf16.mxu0 0
    %4329 = vmatmul.mubr.bf16.gmra.mrb[0].mxu0 %v4258
    %v4330 = vpop.f32.mrb[0].mxu0
    %v4331 = vadd.f32 %v3915, %v4330
    %v4332 = vpop.f32.mrb[0].mxu0
    %v4333 = vpop.f32.mrb[0].mxu0
    %v4334 = vadd.f32 %v3916, %v4333
    %v4335 = vpop.f32.mrb[0].mxu0
    %4336 = vdwg.mxu0
    %v4337 = vsel %vm877, %v3992, -inf
    %4338 = vmax.xlane.f32.xlu0 %v4337
    %v4339 = vpop.xlane.xlu0 %4338
    %v4340 = vsel %vm877, %v3995, -inf
    %4341 = vmax.xlane.f32.xlu0 %v4340
    %v4342 = vpop.xlane.xlu0 %4341
    %v4343 = vsel %vm877, %v4000, -inf
    %4344 = vmax.xlane.f32.xlu0 %v4343
    %v4345 = vpop.xlane.xlu0 %4344
    %v4346 = vsel %vm877, %v4003, -inf
    %4347 = vmax.xlane.f32.xlu0 %v4346
    %v4348 = vpop.xlane.xlu0 %4347
    %v4349 = vsel %vm877, %v4008, -inf
    %4350 = vmax.xlane.f32.xlu0 %v4349
    %v4351 = vpop.xlane.xlu0 %4350
    %v4352 = vsel %vm877, %v4011, -inf
    %4353 = vmax.xlane.f32.xlu0 %v4352
    %v4354 = vpop.xlane.xlu0 %4353
    %v4355 = vsel %vm877, %v4016, -inf
    %4356 = vmax.xlane.f32.xlu0 %v4355
    %v4357 = vpop.xlane.xlu0 %4356
    %v4358 = vsel %vm877, %v4019, -inf
    %4359 = vmax.xlane.f32.xlu0 %v4358
    %v4360 = vpop.xlane.xlu0 %4359
    %v4361 = vsel %vm877, %v4097, -inf
    %4362 = vmax.xlane.f32.xlu0 %v4361
    %v4363 = vpop.xlane.xlu0 %4362
    %v4364 = vsel %vm877, %v4100, -inf
    %4365 = vmax.xlane.f32.xlu0 %v4364
    %v4366 = vpop.xlane.xlu0 %4365
    %v4367 = vsel %vm877, %v4105, -inf
    %4368 = vmax.xlane.f32.xlu0 %v4367
    %v4369 = vpop.xlane.xlu0 %4368
    %v4370 = vsel %vm877, %v4108, -inf
    %4371 = vmax.xlane.f32.xlu0 %v4370
    %v4372 = vpop.xlane.xlu0 %4371
    %v4373 = vsel %vm877, %v4113, -inf
    %4374 = vmax.xlane.f32.xlu0 %v4373
    %v4375 = vpop.xlane.xlu0 %4374
    %v4376 = vsel %vm877, %v4116, -inf
    %4377 = vmax.xlane.f32.xlu0 %v4376
    %v4378 = vpop.xlane.xlu0 %4377
    %v4379 = vsel %vm877, %v4121, -inf
    %4380 = vmax.xlane.f32.xlu0 %v4379
    %v4381 = vpop.xlane.xlu0 %4380
    %v4382 = vsel %vm877, %v4124, -inf
    %4383 = vmax.xlane.f32.xlu0 %v4382
    %v4384 = vpop.xlane.xlu0 %4383
    %v4385 = vsel %vm877, %v4202, -inf
    %4386 = vmax.xlane.f32.xlu0 %v4385
    %v4387 = vpop.xlane.xlu0 %4386
    %v4388 = vsel %vm877, %v4205, -inf
    %4389 = vmax.xlane.f32.xlu0 %v4388
    %v4390 = vpop.xlane.xlu0 %4389
    %v4391 = vsel %vm877, %v4210, -inf
    %4392 = vmax.xlane.f32.xlu0 %v4391
    %v4393 = vpop.xlane.xlu0 %4392
    %v4394 = vsel %vm877, %v4213, -inf
    %4395 = vmax.xlane.f32.xlu0 %v4394
    %v4396 = vpop.xlane.xlu0 %4395
    %v4397 = vsel %vm877, %v4218, -inf
    %4398 = vmax.xlane.f32.xlu0 %v4397
    %v4399 = vpop.xlane.xlu0 %4398
    %v4400 = vsel %vm877, %v4221, -inf
    %4401 = vmax.xlane.f32.xlu0 %v4400
    %v4402 = vpop.xlane.xlu0 %4401
    %v4403 = vsel %vm877, %v4226, -inf
    %4404 = vmax.xlane.f32.xlu0 %v4403
    %v4405 = vpop.xlane.xlu0 %4404
    %v4406 = vsel %vm877, %v4229, -inf
    %4407 = vmax.xlane.f32.xlu0 %v4406
    %v4408 = vpop.xlane.xlu0 %4407
    %v4409 = vsel %vm877, %v4307, -inf
    %4410 = vmax.xlane.f32.xlu0 %v4409
    %v4411 = vpop.xlane.xlu0 %4410
    %v4412 = vsel %vm877, %v4310, -inf
    %4413 = vmax.xlane.f32.xlu0 %v4412
    %v4414 = vpop.xlane.xlu0 %4413
    %v4415 = vsel %vm877, %v4315, -inf
    %4416 = vmax.xlane.f32.xlu0 %v4415
    %v4417 = vpop.xlane.xlu0 %4416
    %v4418 = vsel %vm877, %v4318, -inf
    %4419 = vmax.xlane.f32.xlu0 %v4418
    %v4420 = vpop.xlane.xlu0 %4419
    %v4421 = vsel %vm877, %v4323, -inf
    %4422 = vmax.xlane.f32.xlu0 %v4421
    %v4423 = vpop.xlane.xlu0 %4422
    %v4424 = vsel %vm877, %v4326, -inf
    %4425 = vmax.xlane.f32.xlu0 %v4424
    %v4426 = vpop.xlane.xlu0 %4425
    %v4427 = vsel %vm877, %v4331, -inf
    %4428 = vmax.xlane.f32.xlu0 %v4427
    %v4429 = vpop.xlane.xlu0 %4428
    %v4430 = vsel %vm877, %v4334, -inf
    %4431 = vmax.xlane.f32.xlu0 %v4430
    %v4432 = vpop.xlane.xlu0 %4431
    %v4433 = vsub.f32 %v3992, %v4339
    %v4434 = vsub.f32 %v3995, %v4342
    %v4435 = vsub.f32 %v4000, %v4345
    %v4436 = vsub.f32 %v4003, %v4348
    %v4437 = vsub.f32 %v4008, %v4351
    %v4438 = vsub.f32 %v4011, %v4354
    %v4439 = vsub.f32 %v4016, %v4357
    %v4440 = vsub.f32 %v4019, %v4360
    %v4441 = vsub.f32 %v4097, %v4363
    %v4442 = vsub.f32 %v4100, %v4366
    %v4443 = vsub.f32 %v4105, %v4369
    %v4444 = vsub.f32 %v4108, %v4372
    %v4445 = vsub.f32 %v4113, %v4375
    %v4446 = vsub.f32 %v4116, %v4378
    %v4447 = vsub.f32 %v4121, %v4381
    %v4448 = vsub.f32 %v4124, %v4384
    %v4449 = vsub.f32 %v4202, %v4387
    %v4450 = vsub.f32 %v4205, %v4390
    %v4451 = vsub.f32 %v4210, %v4393
    %v4452 = vsub.f32 %v4213, %v4396
    %v4453 = vsub.f32 %v4218, %v4399
    %v4454 = vsub.f32 %v4221, %v4402
    %v4455 = vsub.f32 %v4226, %v4405
    %v4456 = vsub.f32 %v4229, %v4408
    %v4457 = vsub.f32 %v4307, %v4411
    %v4458 = vsub.f32 %v4310, %v4414
    %v4459 = vsub.f32 %v4315, %v4417
    %v4460 = vsub.f32 %v4318, %v4420
    %v4461 = vsub.f32 %v4323, %v4423
    %v4462 = vsub.f32 %v4326, %v4426
    %v4463 = vsub.f32 %v4331, %v4429
    %v4464 = vsub.f32 %v4334, %v4432
    %v4465 = vmul.f32 %v4433, 1.442695
    %v4466 = vpow.pop %v4465
    %v4467 = vmul.f32 %v4434, 1.442695
    %v4468 = vpow.pop %v4467
    %v4469 = vmul.f32 %v4435, 1.442695
    %v4470 = vpow.pop %v4469
    %v4471 = vmul.f32 %v4436, 1.442695
    %v4472 = vpow.pop %v4471
    %v4473 = vmul.f32 %v4437, 1.442695
    %v4474 = vpow.pop %v4473
    %v4475 = vmul.f32 %v4438, 1.442695
    %v4476 = vpow.pop %v4475
    %v4477 = vmul.f32 %v4439, 1.442695
    %v4478 = vpow.pop %v4477
    %v4479 = vmul.f32 %v4440, 1.442695
    %v4480 = vpow.pop %v4479
    %v4481 = vmul.f32 %v4441, 1.442695
    %v4482 = vpow.pop %v4481
    %v4483 = vmul.f32 %v4442, 1.442695
    %v4484 = vpow.pop %v4483
    %v4485 = vmul.f32 %v4443, 1.442695
    %v4486 = vpow.pop %v4485
    %v4487 = vmul.f32 %v4444, 1.442695
    %v4488 = vpow.pop %v4487
    %v4489 = vmul.f32 %v4445, 1.442695
    %v4490 = vpow.pop %v4489
    %v4491 = vmul.f32 %v4446, 1.442695
    %v4492 = vpow.pop %v4491
    %v4493 = vmul.f32 %v4447, 1.442695
    %v4494 = vpow.pop %v4493
    %v4495 = vmul.f32 %v4448, 1.442695
    %v4496 = vpow.pop %v4495
    %v4497 = vmul.f32 %v4449, 1.442695
    %v4498 = vpow.pop %v4497
    %v4499 = vmul.f32 %v4450, 1.442695
    %v4500 = vpow.pop %v4499
    %v4501 = vmul.f32 %v4451, 1.442695
    %v4502 = vpow.pop %v4501
    %v4503 = vmul.f32 %v4452, 1.442695
    %v4504 = vpow.pop %v4503
    %v4505 = vmul.f32 %v4453, 1.442695
    %v4506 = vpow.pop %v4505
    %v4507 = vmul.f32 %v4454, 1.442695
    %v4508 = vpow.pop %v4507
    %v4509 = vmul.f32 %v4455, 1.442695
    %v4510 = vpow.pop %v4509
    %v4511 = vmul.f32 %v4456, 1.442695
    %v4512 = vpow.pop %v4511
    %v4513 = vmul.f32 %v4457, 1.442695
    %v4514 = vpow.pop %v4513
    %v4515 = vmul.f32 %v4458, 1.442695
    %v4516 = vpow.pop %v4515
    %v4517 = vmul.f32 %v4459, 1.442695
    %v4518 = vpow.pop %v4517
    %v4519 = vmul.f32 %v4460, 1.442695
    %v4520 = vpow.pop %v4519
    %v4521 = vmul.f32 %v4461, 1.442695
    %v4522 = vpow.pop %v4521
    %v4523 = vmul.f32 %v4462, 1.442695
    %v4524 = vpow.pop %v4523
    %v4525 = vmul.f32 %v4463, 1.442695
    %v4526 = vpow.pop %v4525
    %v4527 = vmul.f32 %v4464, 1.442695
    %v4528 = vpow.pop %v4527
    %v4529 = vsel %vm877, %v4466, 0.0
    %4530 = vadd.xlane.f32.xlu0 %v4529
    %v4531 = vpop.xlane.xlu0 %4530
    %v4532 = vsel %vm877, %v4468, 0.0
    %4533 = vadd.xlane.f32.xlu0 %v4532
    %v4534 = vpop.xlane.xlu0 %4533
    %v4535 = vsel %vm877, %v4470, 0.0
    %4536 = vadd.xlane.f32.xlu0 %v4535
    %v4537 = vpop.xlane.xlu0 %4536
    %v4538 = vsel %vm877, %v4472, 0.0
    %4539 = vadd.xlane.f32.xlu0 %v4538
    %v4540 = vpop.xlane.xlu0 %4539
    %v4541 = vsel %vm877, %v4474, 0.0
    %4542 = vadd.xlane.f32.xlu0 %v4541
    %v4543 = vpop.xlane.xlu0 %4542
    %v4544 = vsel %vm877, %v4476, 0.0
    %4545 = vadd.xlane.f32.xlu0 %v4544
    %v4546 = vpop.xlane.xlu0 %4545
    %v4547 = vsel %vm877, %v4478, 0.0
    %4548 = vadd.xlane.f32.xlu0 %v4547
    %v4549 = vpop.xlane.xlu0 %4548
    %v4550 = vsel %vm877, %v4480, 0.0
    %4551 = vadd.xlane.f32.xlu0 %v4550
    %v4552 = vpop.xlane.xlu0 %4551
    %v4553 = vsel %vm877, %v4482, 0.0
    %4554 = vadd.xlane.f32.xlu0 %v4553
    %v4555 = vpop.xlane.xlu0 %4554
    %v4556 = vsel %vm877, %v4484, 0.0
    %4557 = vadd.xlane.f32.xlu0 %v4556
    %v4558 = vpop.xlane.xlu0 %4557
    %v4559 = vsel %vm877, %v4486, 0.0
    %4560 = vadd.xlane.f32.xlu0 %v4559
    %v4561 = vpop.xlane.xlu0 %4560
    %v4562 = vsel %vm877, %v4488, 0.0
    %4563 = vadd.xlane.f32.xlu0 %v4562
    %v4564 = vpop.xlane.xlu0 %4563
    %v4565 = vsel %vm877, %v4490, 0.0
    %4566 = vadd.xlane.f32.xlu0 %v4565
    %v4567 = vpop.xlane.xlu0 %4566
    %v4568 = vsel %vm877, %v4492, 0.0
    %4569 = vadd.xlane.f32.xlu0 %v4568
    %v4570 = vpop.xlane.xlu0 %4569
    %v4571 = vsel %vm877, %v4494, 0.0
    %4572 = vadd.xlane.f32.xlu0 %v4571
    %v4573 = vpop.xlane.xlu0 %4572
    %v4574 = vsel %vm877, %v4496, 0.0
    %4575 = vadd.xlane.f32.xlu0 %v4574
    %v4576 = vpop.xlane.xlu0 %4575
    %v4577 = vsel %vm877, %v4498, 0.0
    %4578 = vadd.xlane.f32.xlu0 %v4577
    %v4579 = vpop.xlane.xlu0 %4578
    %v4580 = vsel %vm877, %v4500, 0.0
    %4581 = vadd.xlane.f32.xlu0 %v4580
    %v4582 = vpop.xlane.xlu0 %4581
    %v4583 = vsel %vm877, %v4502, 0.0
    %4584 = vadd.xlane.f32.xlu0 %v4583
    %v4585 = vpop.xlane.xlu0 %4584
    %v4586 = vsel %vm877, %v4504, 0.0
    %4587 = vadd.xlane.f32.xlu0 %v4586
    %v4588 = vpop.xlane.xlu0 %4587
    %v4589 = vsel %vm877, %v4506, 0.0
    %4590 = vadd.xlane.f32.xlu0 %v4589
    %v4591 = vpop.xlane.xlu0 %4590
    %v4592 = vsel %vm877, %v4508, 0.0
    %4593 = vadd.xlane.f32.xlu0 %v4592
    %v4594 = vpop.xlane.xlu0 %4593
    %v4595 = vsel %vm877, %v4510, 0.0
    %4596 = vadd.xlane.f32.xlu0 %v4595
    %v4597 = vpop.xlane.xlu0 %4596
    %v4598 = vsel %vm877, %v4512, 0.0
    %4599 = vadd.xlane.f32.xlu0 %v4598
    %v4600 = vpop.xlane.xlu0 %4599
    %v4601 = vsel %vm877, %v4514, 0.0
    %4602 = vadd.xlane.f32.xlu0 %v4601
    %v4603 = vpop.xlane.xlu0 %4602
    %v4604 = vsel %vm877, %v4516, 0.0
    %4605 = vadd.xlane.f32.xlu0 %v4604
    %v4606 = vpop.xlane.xlu0 %4605
    %v4607 = vsel %vm877, %v4518, 0.0
    %4608 = vadd.xlane.f32.xlu0 %v4607
    %v4609 = vpop.xlane.xlu0 %4608
    %v4610 = vsel %vm877, %v4520, 0.0
    %4611 = vadd.xlane.f32.xlu0 %v4610
    %v4612 = vpop.xlane.xlu0 %4611
    %v4613 = vsel %vm877, %v4522, 0.0
    %4614 = vadd.xlane.f32.xlu0 %v4613
    %v4615 = vpop.xlane.xlu0 %4614
    %v4616 = vsel %vm877, %v4524, 0.0
    %4617 = vadd.xlane.f32.xlu0 %v4616
    %v4618 = vpop.xlane.xlu0 %4617
    %v4619 = vsel %vm877, %v4526, 0.0
    %4620 = vadd.xlane.f32.xlu0 %v4619
    %v4621 = vpop.xlane.xlu0 %4620
    %v4622 = vsel %vm877, %v4528, 0.0
    %4623 = vadd.xlane.f32.xlu0 %v4622
    %v4624 = vpop.xlane.xlu0 %4623
    %v4625 = vrcp.pop %v4531
    %v4626 = vrcp.pop %v4534
    %v4627 = vrcp.pop %v4537
    %v4628 = vrcp.pop %v4540
    %v4629 = vrcp.pop %v4543
    %v4630 = vrcp.pop %v4546
    %v4631 = vrcp.pop %v4549
    %v4632 = vrcp.pop %v4552
    %v4633 = vrcp.pop %v4555
    %v4634 = vrcp.pop %v4558
    %v4635 = vrcp.pop %v4561
    %v4636 = vrcp.pop %v4564
    %v4637 = vrcp.pop %v4567
    %v4638 = vrcp.pop %v4570
    %v4639 = vrcp.pop %v4573
    %v4640 = vrcp.pop %v4576
    %v4641 = vrcp.pop %v4579
    %v4642 = vrcp.pop %v4582
    %v4643 = vrcp.pop %v4585
    %v4644 = vrcp.pop %v4588
    %v4645 = vrcp.pop %v4591
    %v4646 = vrcp.pop %v4594
    %v4647 = vrcp.pop %v4597
    %v4648 = vrcp.pop %v4600
    %v4649 = vrcp.pop %v4603
    %v4650 = vrcp.pop %v4606
    %v4651 = vrcp.pop %v4609
    %v4652 = vrcp.pop %v4612
    %v4653 = vrcp.pop %v4615
    %v4654 = vrcp.pop %v4618
    %v4655 = vrcp.pop %v4621
    %v4656 = vrcp.pop %v4624
    %v4657 = vmul.f32 %v4466, %v4625
    %v4658 = vmul.f32 %v4468, %v4626
    %v4659 = vmul.f32 %v4470, %v4627
    %v4660 = vmul.f32 %v4472, %v4628
    %v4661 = vmul.f32 %v4474, %v4629
    %v4662 = vmul.f32 %v4476, %v4630
    %v4663 = vmul.f32 %v4478, %v4631
    %v4664 = vmul.f32 %v4480, %v4632
    %v4665 = vmul.f32 %v4482, %v4633
    %v4666 = vmul.f32 %v4484, %v4634
    %v4667 = vmul.f32 %v4486, %v4635
    %v4668 = vmul.f32 %v4488, %v4636
    %v4669 = vmul.f32 %v4490, %v4637
    %v4670 = vmul.f32 %v4492, %v4638
    %v4671 = vmul.f32 %v4494, %v4639
    %v4672 = vmul.f32 %v4496, %v4640
    %v4673 = vmul.f32 %v4498, %v4641
    %v4674 = vmul.f32 %v4500, %v4642
    %v4675 = vmul.f32 %v4502, %v4643
    %v4676 = vmul.f32 %v4504, %v4644
    %v4677 = vmul.f32 %v4506, %v4645
    %v4678 = vmul.f32 %v4508, %v4646
    %v4679 = vmul.f32 %v4510, %v4647
    %v4680 = vmul.f32 %v4512, %v4648
    %v4681 = vmul.f32 %v4514, %v4649
    %v4682 = vmul.f32 %v4516, %v4650
    %v4683 = vmul.f32 %v4518, %v4651
    %v4684 = vmul.f32 %v4520, %v4652
    %v4685 = vmul.f32 %v4522, %v4653
    %v4686 = vmul.f32 %v4524, %v4654
    %v4687 = vmul.f32 %v4526, %v4655
    %v4688 = vmul.f32 %v4528, %v4656
    %v4689 = vpack.c.bf16 %v4658, %v4657
    %v4690 = vpack.c.bf16 %v4660, %v4659
    %v4691 = vpack.c.bf16 %v4662, %v4661
    %v4692 = vpack.c.bf16 %v4664, %v4663
    %v4693 = vpack.c.bf16 %v4666, %v4665
    %v4694 = vpack.c.bf16 %v4668, %v4667
    %v4695 = vpack.c.bf16 %v4670, %v4669
    %v4696 = vpack.c.bf16 %v4672, %v4671
    %v4697 = vpack.c.bf16 %v4674, %v4673
    %v4698 = vpack.c.bf16 %v4676, %v4675
    %v4699 = vpack.c.bf16 %v4678, %v4677
    %v4700 = vpack.c.bf16 %v4680, %v4679
    %v4701 = vpack.c.bf16 %v4682, %v4681
    %v4702 = vpack.c.bf16 %v4684, %v4683
    %v4703 = vpack.c.bf16 %v4686, %v4685
    %v4704 = vpack.c.bf16 %v4688, %v4687
    %4705 = vrot.lane.b32.xlu0 %v448, 40
    %v4706 = vpop.permute.xlu0 %4705
    %4707 = vrot.lane.b32.xlu0 %v449, 40
    %v4708 = vpop.permute.xlu0 %4707
    %4709 = vrot.lane.b32.xlu0 %v450, 40
    %v4710 = vpop.permute.xlu0 %4709
    %4711 = vrot.lane.b32.xlu0 %v451, 40
    %v4712 = vpop.permute.xlu0 %4711
    %v4718 = vsel %vm877, %v4689, 0
    %v4721 = vsel %vm877, %v4690, 0
    %v4724 = vsel %vm877, %v4691, 0
    %v4727 = vsel %vm877, %v4692, 0
    %4729 = vmatprep.subr.bf16.mxu0 0
    %4730 = vmatpush1.bf16.msra.mxu0 %v4706
    %4731 = vmatprep.subr.bf16.mxu0 0
    %4732 = vmatpush1.bf16.msra.mxu0 %v4708
    %4733 = vmatprep.subr.bf16.mxu0 0
    %4734 = vmatpush1.bf16.msra.mxu0 %v4710
    %4735 = vmatprep.subr.bf16.mxu0 0
    %4736 = vmatpush1.bf16.msra.mxu0 %v4712
    %4737 = vmatprep.subr.bf16.mxu0 0
    %4738 = vmatpush1.bf16.msra.mxu0 0
    %4739 = vmatprep.subr.bf16.mxu0 0
    %4740 = vmatpush1.bf16.msra.mxu0 0
    %4741 = vmatprep.subr.bf16.mxu0 0
    %4742 = vmatpush1.bf16.msra.mxu0 0
    %4743 = vmatprep.subr.bf16.mxu0 0
    %4744 = vmatpush1.bf16.msra.mxu0 0
    %4745 = vmatprep.subr.bf16.mxu0 0
    %4746 = vmatpush1.bf16.msra.mxu0 0
    %4747 = vmatprep.subr.bf16.mxu0 0
    %4748 = vmatpush1.bf16.msra.mxu0 0
    %4749 = vmatprep.subr.bf16.mxu0 0
    %4750 = vmatpush1.bf16.msra.mxu0 0
    %4751 = vmatprep.subr.bf16.mxu0 0
    %4752 = vmatpush1.bf16.msra.mxu0 0
    %4753 = vmatprep.subr.bf16.mxu0 0
    %4754 = vmatpush1.bf16.msra.mxu0 0
    %4755 = vmatprep.subr.bf16.mxu0 0
    %4756 = vmatpush1.bf16.msra.mxu0 0
    %4757 = vmatprep.subr.bf16.mxu0 0
    %4758 = vmatpush1.bf16.msra.mxu0 0
    %4759 = vmatprep.subr.bf16.mxu0 0
    %4760 = vmatpush1.bf16.msra.mxu0 0
    %4761 = vmatprep.mubr.bf16.mxu0 0
    %4762 = vmatmul.mubr.bf16.gmra.mrb[0].mxu0 %v4718
    %v4763 = vpop.f32.mrb[0].mxu0
    %v4764 = vadd.f32 0.0, %v4763
    %v4765 = vpop.f32.mrb[0].mxu0
    %v4766 = vpop.f32.mrb[0].mxu0
    %v4767 = vadd.f32 0.0, %v4766
    %v4768 = vpop.f32.mrb[0].mxu0
    %4769 = vmatprep.mubr.bf16.mxu0 0
    %4770 = vmatmul.mubr.bf16.gmra.mrb[0].mxu0 %v4721
    %v4771 = vpop.f32.mrb[0].mxu0
    %v4772 = vadd.f32 0.0, %v4771
    %v4773 = vpop.f32.mrb[0].mxu0
    %v4774 = vpop.f32.mrb[0].mxu0
    %v4775 = vadd.f32 0.0, %v4774
    %v4776 = vpop.f32.mrb[0].mxu0
    %4777 = vmatprep.mubr.bf16.mxu0 0
    %4778 = vmatmul.mubr.bf16.gmra.mrb[0].mxu0 %v4724
    %v4779 = vpop.f32.mrb[0].mxu0
    %v4780 = vadd.f32 0.0, %v4779
    %v4781 = vpop.f32.mrb[0].mxu0
    %v4782 = vpop.f32.mrb[0].mxu0
    %v4783 = vadd.f32 0.0, %v4782
    %v4784 = vpop.f32.mrb[0].mxu0
    %4785 = vmatprep.mubr.bf16.mxu0 0
    %4786 = vmatmul.mubr.bf16.gmra.mrb[0].mxu0 %v4727
    %v4787 = vpop.f32.mrb[0].mxu0
    %v4788 = vadd.f32 0.0, %v4787
    %v4789 = vpop.f32.mrb[0].mxu0
    %v4790 = vpop.f32.mrb[0].mxu0
    %v4791 = vadd.f32 0.0, %v4790
    %v4792 = vpop.f32.mrb[0].mxu0
    %4793 = vdwg.mxu0
    %4794 = vrot.lane.b32.xlu0 %v452, 40
    %v4795 = vpop.permute.xlu0 %4794
    %4796 = vrot.lane.b32.xlu0 %v453, 40
    %v4797 = vpop.permute.xlu0 %4796
    %4798 = vrot.lane.b32.xlu0 %v454, 40
    %v4799 = vpop.permute.xlu0 %4798
    %4800 = vrot.lane.b32.xlu0 %v455, 40
    %v4801 = vpop.permute.xlu0 %4800
    %v4807 = vsel %vm877, %v4693, 0
    %v4810 = vsel %vm877, %v4694, 0
    %v4813 = vsel %vm877, %v4695, 0
    %v4816 = vsel %vm877, %v4696, 0
    %4818 = vmatprep.subr.bf16.mxu0 0
    %4819 = vmatpush1.bf16.msra.mxu0 %v4795
    %4820 = vmatprep.subr.bf16.mxu0 0
    %4821 = vmatpush1.bf16.msra.mxu0 %v4797
    %4822 = vmatprep.subr.bf16.mxu0 0
    %4823 = vmatpush1.bf16.msra.mxu0 %v4799
    %4824 = vmatprep.subr.bf16.mxu0 0
    %4825 = vmatpush1.bf16.msra.mxu0 %v4801
    %4826 = vmatprep.subr.bf16.mxu0 0
    %4827 = vmatpush1.bf16.msra.mxu0 0
    %4828 = vmatprep.subr.bf16.mxu0 0
    %4829 = vmatpush1.bf16.msra.mxu0 0
    %4830 = vmatprep.subr.bf16.mxu0 0
    %4831 = vmatpush1.bf16.msra.mxu0 0
    %4832 = vmatprep.subr.bf16.mxu0 0
    %4833 = vmatpush1.bf16.msra.mxu0 0
    %4834 = vmatprep.subr.bf16.mxu0 0
    %4835 = vmatpush1.bf16.msra.mxu0 0
    %4836 = vmatprep.subr.bf16.mxu0 0
    %4837 = vmatpush1.bf16.msra.mxu0 0
    %4838 = vmatprep.subr.bf16.mxu0 0
    %4839 = vmatpush1.bf16.msra.mxu0 0
    %4840 = vmatprep.subr.bf16.mxu0 0
    %4841 = vmatpush1.bf16.msra.mxu0 0
    %4842 = vmatprep.subr.bf16.mxu0 0
    %4843 = vmatpush1.bf16.msra.mxu0 0
    %4844 = vmatprep.subr.bf16.mxu0 0
    %4845 = vmatpush1.bf16.msra.mxu0 0
    %4846 = vmatprep.subr.bf16.mxu0 0
    %4847 = vmatpush1.bf16.msra.mxu0 0
    %4848 = vmatprep.subr.bf16.mxu0 0
    %4849 = vmatpush1.bf16.msra.mxu0 0
    %4850 = vmatprep.mubr.bf16.mxu0 0
    %4851 = vmatmul.mubr.bf16.gmra.mrb[0].mxu0 %v4807
    %v4852 = vpop.f32.mrb[0].mxu0
    %v4853 = vadd.f32 0.0, %v4852
    %v4854 = vpop.f32.mrb[0].mxu0
    %v4855 = vpop.f32.mrb[0].mxu0
    %v4856 = vadd.f32 0.0, %v4855
    %v4857 = vpop.f32.mrb[0].mxu0
    %4858 = vmatprep.mubr.bf16.mxu0 0
    %4859 = vmatmul.mubr.bf16.gmra.mrb[0].mxu0 %v4810
    %v4860 = vpop.f32.mrb[0].mxu0
    %v4861 = vadd.f32 0.0, %v4860
    %v4862 = vpop.f32.mrb[0].mxu0
    %v4863 = vpop.f32.mrb[0].mxu0
    %v4864 = vadd.f32 0.0, %v4863
    %v4865 = vpop.f32.mrb[0].mxu0
    %4866 = vmatprep.mubr.bf16.mxu0 0
    %4867 = vmatmul.mubr.bf16.gmra.mrb[0].mxu0 %v4813
    %v4868 = vpop.f32.mrb[0].mxu0
    %v4869 = vadd.f32 0.0, %v4868
    %v4870 = vpop.f32.mrb[0].mxu0
    %v4871 = vpop.f32.mrb[0].mxu0
    %v4872 = vadd.f32 0.0, %v4871
    %v4873 = vpop.f32.mrb[0].mxu0
    %4874 = vmatprep.mubr.bf16.mxu0 0
    %4875 = vmatmul.mubr.bf16.gmra.mrb[0].mxu0 %v4816
    %v4876 = vpop.f32.mrb[0].mxu0
    %v4877 = vadd.f32 0.0, %v4876
    %v4878 = vpop.f32.mrb[0].mxu0
    %v4879 = vpop.f32.mrb[0].mxu0
    %v4880 = vadd.f32 0.0, %v4879
    %v4881 = vpop.f32.mrb[0].mxu0
    %4882 = vdwg.mxu0
    %4883 = vrot.lane.b32.xlu0 %v456, 40
    %v4884 = vpop.permute.xlu0 %4883
    %4885 = vrot.lane.b32.xlu0 %v457, 40
    %v4886 = vpop.permute.xlu0 %4885
    %4887 = vrot.lane.b32.xlu0 %v458, 40
    %v4888 = vpop.permute.xlu0 %4887
    %4889 = vrot.lane.b32.xlu0 %v459, 40
    %v4890 = vpop.permute.xlu0 %4889
    %v4896 = vsel %vm877, %v4697, 0
    %v4899 = vsel %vm877, %v4698, 0
    %v4902 = vsel %vm877, %v4699, 0
    %v4905 = vsel %vm877, %v4700, 0
    %4907 = vmatprep.subr.bf16.mxu0 0
    %4908 = vmatpush1.bf16.msra.mxu0 %v4884
    %4909 = vmatprep.subr.bf16.mxu0 0
    %4910 = vmatpush1.bf16.msra.mxu0 %v4886
    %4911 = vmatprep.subr.bf16.mxu0 0
    %4912 = vmatpush1.bf16.msra.mxu0 %v4888
    %4913 = vmatprep.subr.bf16.mxu0 0
    %4914 = vmatpush1.bf16.msra.mxu0 %v4890
    %4915 = vmatprep.subr.bf16.mxu0 0
    %4916 = vmatpush1.bf16.msra.mxu0 0
    %4917 = vmatprep.subr.bf16.mxu0 0
    %4918 = vmatpush1.bf16.msra.mxu0 0
    %4919 = vmatprep.subr.bf16.mxu0 0
    %4920 = vmatpush1.bf16.msra.mxu0 0
    %4921 = vmatprep.subr.bf16.mxu0 0
    %4922 = vmatpush1.bf16.msra.mxu0 0
    %4923 = vmatprep.subr.bf16.mxu0 0
    %4924 = vmatpush1.bf16.msra.mxu0 0
    %4925 = vmatprep.subr.bf16.mxu0 0
    %4926 = vmatpush1.bf16.msra.mxu0 0
    %4927 = vmatprep.subr.bf16.mxu0 0
    %4928 = vmatpush1.bf16.msra.mxu0 0
    %4929 = vmatprep.subr.bf16.mxu0 0
    %4930 = vmatpush1.bf16.msra.mxu0 0
    %4931 = vmatprep.subr.bf16.mxu0 0
    %4932 = vmatpush1.bf16.msra.mxu0 0
    %4933 = vmatprep.subr.bf16.mxu0 0
    %4934 = vmatpush1.bf16.msra.mxu0 0
    %4935 = vmatprep.subr.bf16.mxu0 0
    %4936 = vmatpush1.bf16.msra.mxu0 0
    %4937 = vmatprep.subr.bf16.mxu0 0
    %4938 = vmatpush1.bf16.msra.mxu0 0
    %4939 = vmatprep.mubr.bf16.mxu0 0
    %4940 = vmatmul.mubr.bf16.gmra.mrb[0].mxu0 %v4896
    %v4941 = vpop.f32.mrb[0].mxu0
    %v4942 = vadd.f32 0.0, %v4941
    %v4943 = vpop.f32.mrb[0].mxu0
    %v4944 = vpop.f32.mrb[0].mxu0
    %v4945 = vadd.f32 0.0, %v4944
    %v4946 = vpop.f32.mrb[0].mxu0
    %4947 = vmatprep.mubr.bf16.mxu0 0
    %4948 = vmatmul.mubr.bf16.gmra.mrb[0].mxu0 %v4899
    %v4949 = vpop.f32.mrb[0].mxu0
    %v4950 = vadd.f32 0.0, %v4949
    %v4951 = vpop.f32.mrb[0].mxu0
    %v4952 = vpop.f32.mrb[0].mxu0
    %v4953 = vadd.f32 0.0, %v4952
    %v4954 = vpop.f32.mrb[0].mxu0
    %4955 = vmatprep.mubr.bf16.mxu0 0
    %4956 = vmatmul.mubr.bf16.gmra.mrb[0].mxu0 %v4902
    %v4957 = vpop.f32.mrb[0].mxu0
    %v4958 = vadd.f32 0.0, %v4957
    %v4959 = vpop.f32.mrb[0].mxu0
    %v4960 = vpop.f32.mrb[0].mxu0
    %v4961 = vadd.f32 0.0, %v4960
    %v4962 = vpop.f32.mrb[0].mxu0
    %4963 = vmatprep.mubr.bf16.mxu0 0
    %4964 = vmatmul.mubr.bf16.gmra.mrb[0].mxu0 %v4905
    %v4965 = vpop.f32.mrb[0].mxu0
    %v4966 = vadd.f32 0.0, %v4965
    %v4967 = vpop.f32.mrb[0].mxu0
    %v4968 = vpop.f32.mrb[0].mxu0
    %v4969 = vadd.f32 0.0, %v4968
    %v4970 = vpop.f32.mrb[0].mxu0
    %4971 = vdwg.mxu0
    %4972 = vrot.lane.b32.xlu0 %v460, 40
    %v4973 = vpop.permute.xlu0 %4972
    %4974 = vrot.lane.b32.xlu0 %v461, 40
    %v4975 = vpop.permute.xlu0 %4974
    %4976 = vrot.lane.b32.xlu0 %v462, 40
    %v4977 = vpop.permute.xlu0 %4976
    %4978 = vrot.lane.b32.xlu0 %v463, 40
    %v4979 = vpop.permute.xlu0 %4978
    %v4985 = vsel %vm877, %v4701, 0
    %v4988 = vsel %vm877, %v4702, 0
    %v4991 = vsel %vm877, %v4703, 0
    %v4994 = vsel %vm877, %v4704, 0
    %4996 = vmatprep.subr.bf16.mxu0 0
    %4997 = vmatpush1.bf16.msra.mxu0 %v4973
    %4998 = vmatprep.subr.bf16.mxu0 0
    %4999 = vmatpush1.bf16.msra.mxu0 %v4975
    %5000 = vmatprep.subr.bf16.mxu0 0
    %5001 = vmatpush1.bf16.msra.mxu0 %v4977
    %5002 = vmatprep.subr.bf16.mxu0 0
    %5003 = vmatpush1.bf16.msra.mxu0 %v4979
    %5004 = vmatprep.subr.bf16.mxu0 0
    %5005 = vmatpush1.bf16.msra.mxu0 0
    %5006 = vmatprep.subr.bf16.mxu0 0
    %5007 = vmatpush1.bf16.msra.mxu0 0
    %5008 = vmatprep.subr.bf16.mxu0 0
    %5009 = vmatpush1.bf16.msra.mxu0 0
    %5010 = vmatprep.subr.bf16.mxu0 0
    %5011 = vmatpush1.bf16.msra.mxu0 0
    %5012 = vmatprep.subr.bf16.mxu0 0
    %5013 = vmatpush1.bf16.msra.mxu0 0
    %5014 = vmatprep.subr.bf16.mxu0 0
    %5015 = vmatpush1.bf16.msra.mxu0 0
    %5016 = vmatprep.subr.bf16.mxu0 0
    %5017 = vmatpush1.bf16.msra.mxu0 0
    %5018 = vmatprep.subr.bf16.mxu0 0
    %5019 = vmatpush1.bf16.msra.mxu0 0
    %5020 = vmatprep.subr.bf16.mxu0 0
    %5021 = vmatpush1.bf16.msra.mxu0 0
    %5022 = vmatprep.subr.bf16.mxu0 0
    %5023 = vmatpush1.bf16.msra.mxu0 0
    %5024 = vmatprep.subr.bf16.mxu0 0
    %5025 = vmatpush1.bf16.msra.mxu0 0
    %5026 = vmatprep.subr.bf16.mxu0 0
    %5027 = vmatpush1.bf16.msra.mxu0 0
    %5028 = vmatprep.mubr.bf16.mxu0 0
    %5029 = vmatmul.mubr.bf16.gmra.mrb[0].mxu0 %v4985
    %v5030 = vpop.f32.mrb[0].mxu0
    %v5031 = vadd.f32 0.0, %v5030
    %v5032 = vpop.f32.mrb[0].mxu0
    %v5033 = vpop.f32.mrb[0].mxu0
    %v5034 = vadd.f32 0.0, %v5033
    %v5035 = vpop.f32.mrb[0].mxu0
    %5036 = vmatprep.mubr.bf16.mxu0 0
    %5037 = vmatmul.mubr.bf16.gmra.mrb[0].mxu0 %v4988
    %v5038 = vpop.f32.mrb[0].mxu0
    %v5039 = vadd.f32 0.0, %v5038
    %v5040 = vpop.f32.mrb[0].mxu0
    %v5041 = vpop.f32.mrb[0].mxu0
    %v5042 = vadd.f32 0.0, %v5041
    %v5043 = vpop.f32.mrb[0].mxu0
    %5044 = vmatprep.mubr.bf16.mxu0 0
    %5045 = vmatmul.mubr.bf16.gmra.mrb[0].mxu0 %v4991
    %v5046 = vpop.f32.mrb[0].mxu0
    %v5047 = vadd.f32 0.0, %v5046
    %v5048 = vpop.f32.mrb[0].mxu0
    %v5049 = vpop.f32.mrb[0].mxu0
    %v5050 = vadd.f32 0.0, %v5049
    %v5051 = vpop.f32.mrb[0].mxu0
    %5052 = vmatprep.mubr.bf16.mxu0 0
    %5053 = vmatmul.mubr.bf16.gmra.mrb[0].mxu0 %v4994
    %v5054 = vpop.f32.mrb[0].mxu0
    %v5055 = vadd.f32 0.0, %v5054
    %v5056 = vpop.f32.mrb[0].mxu0
    %v5057 = vpop.f32.mrb[0].mxu0
    %v5058 = vadd.f32 0.0, %v5057
    %v5059 = vpop.f32.mrb[0].mxu0
    %5060 = vdwg.mxu0
    %5093 = vrot.lane.b32.xlu0 %v2458, 8
    %v5094 = vpop.permute.xlu0 %5093
    %5095 = vrot.lane.b32.xlu0 %v2461, 8
    %v5096 = vpop.permute.xlu0 %5095
    %5097 = vrot.lane.b32.xlu0 %v2466, 8
    %v5098 = vpop.permute.xlu0 %5097
    %5099 = vrot.lane.b32.xlu0 %v2469, 8
    %v5100 = vpop.permute.xlu0 %5099
    %5101 = vrot.lane.b32.xlu0 %v2474, 8
    %v5102 = vpop.permute.xlu0 %5101
    %5103 = vrot.lane.b32.xlu0 %v2477, 8
    %v5104 = vpop.permute.xlu0 %5103
    %5105 = vrot.lane.b32.xlu0 %v2482, 8
    %v5106 = vpop.permute.xlu0 %5105
    %5107 = vrot.lane.b32.xlu0 %v2485, 8
    %v5108 = vpop.permute.xlu0 %5107
    %5109 = vrot.lane.b32.xlu0 %v2547, 8
    %v5110 = vpop.permute.xlu0 %5109
    %5111 = vrot.lane.b32.xlu0 %v2550, 8
    %v5112 = vpop.permute.xlu0 %5111
    %5113 = vrot.lane.b32.xlu0 %v2555, 8
    %v5114 = vpop.permute.xlu0 %5113
    %5115 = vrot.lane.b32.xlu0 %v2558, 8
    %v5116 = vpop.permute.xlu0 %5115
    %5117 = vrot.lane.b32.xlu0 %v2563, 8
    %v5118 = vpop.permute.xlu0 %5117
    %5119 = vrot.lane.b32.xlu0 %v2566, 8
    %v5120 = vpop.permute.xlu0 %5119
    %5121 = vrot.lane.b32.xlu0 %v2571, 8
    %v5122 = vpop.permute.xlu0 %5121
    %5123 = vrot.lane.b32.xlu0 %v2574, 8
    %v5124 = vpop.permute.xlu0 %5123
    %5125 = vrot.lane.b32.xlu0 %v2636, 8
    %v5126 = vpop.permute.xlu0 %5125
    %5127 = vrot.lane.b32.xlu0 %v2639, 8
    %v5128 = vpop.permute.xlu0 %5127
    %5129 = vrot.lane.b32.xlu0 %v2644, 8
    %v5130 = vpop.permute.xlu0 %5129
    %5131 = vrot.lane.b32.xlu0 %v2647, 8
    %v5132 = vpop.permute.xlu0 %5131
    %5133 = vrot.lane.b32.xlu0 %v2652, 8
    %v5134 = vpop.permute.xlu0 %5133
    %5135 = vrot.lane.b32.xlu0 %v2655, 8
    %v5136 = vpop.permute.xlu0 %5135
    %5137 = vrot.lane.b32.xlu0 %v2660, 8
    %v5138 = vpop.permute.xlu0 %5137
    %5139 = vrot.lane.b32.xlu0 %v2663, 8
    %v5140 = vpop.permute.xlu0 %5139
    %5141 = vrot.lane.b32.xlu0 %v2725, 8
    %v5142 = vpop.permute.xlu0 %5141
    %5143 = vrot.lane.b32.xlu0 %v2728, 8
    %v5144 = vpop.permute.xlu0 %5143
    %5145 = vrot.lane.b32.xlu0 %v2733, 8
    %v5146 = vpop.permute.xlu0 %5145
    %5147 = vrot.lane.b32.xlu0 %v2736, 8
    %v5148 = vpop.permute.xlu0 %5147
    %5149 = vrot.lane.b32.xlu0 %v2741, 8
    %v5150 = vpop.permute.xlu0 %5149
    %5151 = vrot.lane.b32.xlu0 %v2744, 8
    %v5152 = vpop.permute.xlu0 %5151
    %5153 = vrot.lane.b32.xlu0 %v2749, 8
    %v5154 = vpop.permute.xlu0 %5153
    %5155 = vrot.lane.b32.xlu0 %v2752, 8
    %v5156 = vpop.permute.xlu0 %5155
    %5221 = vrot.lane.b32.xlu0 %v3611, 16
    %v5222 = vpop.permute.xlu0 %5221
    %5223 = vrot.lane.b32.xlu0 %v3614, 16
    %v5224 = vpop.permute.xlu0 %5223
    %5225 = vrot.lane.b32.xlu0 %v3619, 16
    %v5226 = vpop.permute.xlu0 %5225
    %5227 = vrot.lane.b32.xlu0 %v3622, 16
    %v5228 = vpop.permute.xlu0 %5227
    %5229 = vrot.lane.b32.xlu0 %v3627, 16
    %v5230 = vpop.permute.xlu0 %5229
    %5231 = vrot.lane.b32.xlu0 %v3630, 16
    %v5232 = vpop.permute.xlu0 %5231
    %5233 = vrot.lane.b32.xlu0 %v3635, 16
    %v5234 = vpop.permute.xlu0 %5233
    %5235 = vrot.lane.b32.xlu0 %v3638, 16
    %v5236 = vpop.permute.xlu0 %5235
    %5237 = vrot.lane.b32.xlu0 %v3700, 16
    %v5238 = vpop.permute.xlu0 %5237
    %5239 = vrot.lane.b32.xlu0 %v3703, 16
    %v5240 = vpop.permute.xlu0 %5239
    %5241 = vrot.lane.b32.xlu0 %v3708, 16
    %v5242 = vpop.permute.xlu0 %5241
    %5243 = vrot.lane.b32.xlu0 %v3711, 16
    %v5244 = vpop.permute.xlu0 %5243
    %5245 = vrot.lane.b32.xlu0 %v3716, 16
    %v5246 = vpop.permute.xlu0 %5245
    %5247 = vrot.lane.b32.xlu0 %v3719, 16
    %v5248 = vpop.permute.xlu0 %5247
    %5249 = vrot.lane.b32.xlu0 %v3724, 16
    %v5250 = vpop.permute.xlu0 %5249
    %5251 = vrot.lane.b32.xlu0 %v3727, 16
    %v5252 = vpop.permute.xlu0 %5251
    %5253 = vrot.lane.b32.xlu0 %v3789, 16
    %v5254 = vpop.permute.xlu0 %5253
    %5255 = vrot.lane.b32.xlu0 %v3792, 16
    %v5256 = vpop.permute.xlu0 %5255
    %5257 = vrot.lane.b32.xlu0 %v3797, 16
    %v5258 = vpop.permute.xlu0 %5257
    %5259 = vrot.lane.b32.xlu0 %v3800, 16
    %v5260 = vpop.permute.xlu0 %5259
    %5261 = vrot.lane.b32.xlu0 %v3805, 16
    %v5262 = vpop.permute.xlu0 %5261
    %5263 = vrot.lane.b32.xlu0 %v3808, 16
    %v5264 = vpop.permute.xlu0 %5263
    %5265 = vrot.lane.b32.xlu0 %v3813, 16
    %v5266 = vpop.permute.xlu0 %5265
    %5267 = vrot.lane.b32.xlu0 %v3816, 16
    %v5268 = vpop.permute.xlu0 %5267
    %5269 = vrot.lane.b32.xlu0 %v3878, 16
    %v5270 = vpop.permute.xlu0 %5269
    %5271 = vrot.lane.b32.xlu0 %v3881, 16
    %v5272 = vpop.permute.xlu0 %5271
    %5273 = vrot.lane.b32.xlu0 %v3886, 16
    %v5274 = vpop.permute.xlu0 %5273
    %5275 = vrot.lane.b32.xlu0 %v3889, 16
    %v5276 = vpop.permute.xlu0 %5275
    %5277 = vrot.lane.b32.xlu0 %v3894, 16
    %v5278 = vpop.permute.xlu0 %5277
    %5279 = vrot.lane.b32.xlu0 %v3897, 16
    %v5280 = vpop.permute.xlu0 %5279
    %5281 = vrot.lane.b32.xlu0 %v3902, 16
    %v5282 = vpop.permute.xlu0 %5281
    %5283 = vrot.lane.b32.xlu0 %v3905, 16
    %v5284 = vpop.permute.xlu0 %5283
    %5349 = vrot.lane.b32.xlu0 %v4764, 24
    %v5350 = vpop.permute.xlu0 %5349
    %5351 = vrot.lane.b32.xlu0 %v4767, 24
    %v5352 = vpop.permute.xlu0 %5351
    %5353 = vrot.lane.b32.xlu0 %v4772, 24
    %v5354 = vpop.permute.xlu0 %5353
    %5355 = vrot.lane.b32.xlu0 %v4775, 24
    %v5356 = vpop.permute.xlu0 %5355
    %5357 = vrot.lane.b32.xlu0 %v4780, 24
    %v5358 = vpop.permute.xlu0 %5357
    %5359 = vrot.lane.b32.xlu0 %v4783, 24
    %v5360 = vpop.permute.xlu0 %5359
    %5361 = vrot.lane.b32.xlu0 %v4788, 24
    %v5362 = vpop.permute.xlu0 %5361
    %5363 = vrot.lane.b32.xlu0 %v4791, 24
    %v5364 = vpop.permute.xlu0 %5363
    %5365 = vrot.lane.b32.xlu0 %v4853, 24
    %v5366 = vpop.permute.xlu0 %5365
    %5367 = vrot.lane.b32.xlu0 %v4856, 24
    %v5368 = vpop.permute.xlu0 %5367
    %5369 = vrot.lane.b32.xlu0 %v4861, 24
    %v5370 = vpop.permute.xlu0 %5369
    %5371 = vrot.lane.b32.xlu0 %v4864, 24
    %v5372 = vpop.permute.xlu0 %5371
    %5373 = vrot.lane.b32.xlu0 %v4869, 24
    %v5374 = vpop.permute.xlu0 %5373
    %5375 = vrot.lane.b32.xlu0 %v4872, 24
    %v5376 = vpop.permute.xlu0 %5375
    %5377 = vrot.lane.b32.xlu0 %v4877, 24
    %v5378 = vpop.permute.xlu0 %5377
    %5379 = vrot.lane.b32.xlu0 %v4880, 24
    %v5380 = vpop.permute.xlu0 %5379
    %5381 = vrot.lane.b32.xlu0 %v4942, 24
    %v5382 = vpop.permute.xlu0 %5381
    %5383 = vrot.lane.b32.xlu0 %v4945, 24
    %v5384 = vpop.permute.xlu0 %5383
    %5385 = vrot.lane.b32.xlu0 %v4950, 24
    %v5386 = vpop.permute.xlu0 %5385
    %5387 = vrot.lane.b32.xlu0 %v4953, 24
    %v5388 = vpop.permute.xlu0 %5387
    %5389 = vrot.lane.b32.xlu0 %v4958, 24
    %v5390 = vpop.permute.xlu0 %5389
    %5391 = vrot.lane.b32.xlu0 %v4961, 24
    %v5392 = vpop.permute.xlu0 %5391
    %5393 = vrot.lane.b32.xlu0 %v4966, 24
    %v5394 = vpop.permute.xlu0 %5393
    %5395 = vrot.lane.b32.xlu0 %v4969, 24
    %v5396 = vpop.permute.xlu0 %5395
    %5397 = vrot.lane.b32.xlu0 %v5031, 24
    %v5398 = vpop.permute.xlu0 %5397
    %5399 = vrot.lane.b32.xlu0 %v5034, 24
    %v5400 = vpop.permute.xlu0 %5399
    %5401 = vrot.lane.b32.xlu0 %v5039, 24
    %v5402 = vpop.permute.xlu0 %5401
    %5403 = vrot.lane.b32.xlu0 %v5042, 24
    %v5404 = vpop.permute.xlu0 %5403
    %5405 = vrot.lane.b32.xlu0 %v5047, 24
    %v5406 = vpop.permute.xlu0 %5405
    %5407 = vrot.lane.b32.xlu0 %v5050, 24
    %v5408 = vpop.permute.xlu0 %5407
    %5409 = vrot.lane.b32.xlu0 %v5055, 24
    %v5410 = vpop.permute.xlu0 %5409
    %5411 = vrot.lane.b32.xlu0 %v5058, 24
    %v5412 = vpop.permute.xlu0 %5411
    %v5445 = vsel %vm484, %v1305, %v5094
    %v5446 = vsel %vm484, %v1308, %v5096
    %v5447 = vsel %vm484, %v1313, %v5098
    %v5448 = vsel %vm484, %v1316, %v5100
    %v5449 = vsel %vm484, %v1321, %v5102
    %v5450 = vsel %vm484, %v1324, %v5104
    %v5451 = vsel %vm484, %v1329, %v5106
    %v5452 = vsel %vm484, %v1332, %v5108
    %v5453 = vsel %vm484, %v1394, %v5110
    %v5454 = vsel %vm484, %v1397, %v5112
    %v5455 = vsel %vm484, %v1402, %v5114
    %v5456 = vsel %vm484, %v1405, %v5116
    %v5457 = vsel %vm484, %v1410, %v5118
    %v5458 = vsel %vm484, %v1413, %v5120
    %v5459 = vsel %vm484, %v1418, %v5122
    %v5460 = vsel %vm484, %v1421, %v5124
    %v5461 = vsel %vm484, %v1483, %v5126
    %v5462 = vsel %vm484, %v1486, %v5128
    %v5463 = vsel %vm484, %v1491, %v5130
    %v5464 = vsel %vm484, %v1494, %v5132
    %v5465 = vsel %vm484, %v1499, %v5134
    %v5466 = vsel %vm484, %v1502, %v5136
    %v5467 = vsel %vm484, %v1507, %v5138
    %v5468 = vsel %vm484, %v1510, %v5140
    %v5469 = vsel %vm484, %v1572, %v5142
    %v5470 = vsel %vm484, %v1575, %v5144
    %v5471 = vsel %vm484, %v1580, %v5146
    %v5472 = vsel %vm484, %v1583, %v5148
    %v5473 = vsel %vm484, %v1588, %v5150
    %v5474 = vsel %vm484, %v1591, %v5152
    %v5475 = vsel %vm484, %v1596, %v5154
    %v5476 = vsel %vm484, %v1599, %v5156
    %vm5477 = vcmask 130048
    %v5478 = vsel %vm5477, %v5445, %v5222
    %v5479 = vsel %vm5477, %v5446, %v5224
    %v5480 = vsel %vm5477, %v5447, %v5226
    %v5481 = vsel %vm5477, %v5448, %v5228
    %v5482 = vsel %vm5477, %v5449, %v5230
    %v5483 = vsel %vm5477, %v5450, %v5232
    %v5484 = vsel %vm5477, %v5451, %v5234
    %v5485 = vsel %vm5477, %v5452, %v5236
    %v5486 = vsel %vm5477, %v5453, %v5238
    %v5487 = vsel %vm5477, %v5454, %v5240
    %v5488 = vsel %vm5477, %v5455, %v5242
    %v5489 = vsel %vm5477, %v5456, %v5244
    %v5490 = vsel %vm5477, %v5457, %v5246
    %v5491 = vsel %vm5477, %v5458, %v5248
    %v5492 = vsel %vm5477, %v5459, %v5250
    %v5493 = vsel %vm5477, %v5460, %v5252
    %v5494 = vsel %vm5477, %v5461, %v5254
    %v5495 = vsel %vm5477, %v5462, %v5256
    %v5496 = vsel %vm5477, %v5463, %v5258
    %v5497 = vsel %vm5477, %v5464, %v5260
    %v5498 = vsel %vm5477, %v5465, %v5262
    %v5499 = vsel %vm5477, %v5466, %v5264
    %v5500 = vsel %vm5477, %v5467, %v5266
    %v5501 = vsel %vm5477, %v5468, %v5268
    %v5502 = vsel %vm5477, %v5469, %v5270
    %v5503 = vsel %vm5477, %v5470, %v5272
    %v5504 = vsel %vm5477, %v5471, %v5274
    %v5505 = vsel %vm5477, %v5472, %v5276
    %v5506 = vsel %vm5477, %v5473, %v5278
    %v5507 = vsel %vm5477, %v5474, %v5280
    %v5508 = vsel %vm5477, %v5475, %v5282
    %v5509 = vsel %vm5477, %v5476, %v5284
    %vm5510 = vcmask 195584
    %v5511 = vsel %vm5510, %v5478, %v5350
    %v5512 = vsel %vm5510, %v5479, %v5352
    %v5513 = vsel %vm5510, %v5480, %v5354
    %v5514 = vsel %vm5510, %v5481, %v5356
    %v5515 = vsel %vm5510, %v5482, %v5358
    %v5516 = vsel %vm5510, %v5483, %v5360
    %v5517 = vsel %vm5510, %v5484, %v5362
    %v5518 = vsel %vm5510, %v5485, %v5364
    %v5519 = vsel %vm5510, %v5486, %v5366
    %v5520 = vsel %vm5510, %v5487, %v5368
    %v5521 = vsel %vm5510, %v5488, %v5370
    %v5522 = vsel %vm5510, %v5489, %v5372
    %v5523 = vsel %vm5510, %v5490, %v5374
    %v5524 = vsel %vm5510, %v5491, %v5376
    %v5525 = vsel %vm5510, %v5492, %v5378
    %v5526 = vsel %vm5510, %v5493, %v5380
    %v5527 = vsel %vm5510, %v5494, %v5382
    %v5528 = vsel %vm5510, %v5495, %v5384
    %v5529 = vsel %vm5510, %v5496, %v5386
    %v5530 = vsel %vm5510, %v5497, %v5388
    %v5531 = vsel %vm5510, %v5498, %v5390
    %v5532 = vsel %vm5510, %v5499, %v5392
    %v5533 = vsel %vm5510, %v5500, %v5394
    %v5534 = vsel %vm5510, %v5501, %v5396
    %v5535 = vsel %vm5510, %v5502, %v5398
    %v5536 = vsel %vm5510, %v5503, %v5400
    %v5537 = vsel %vm5510, %v5504, %v5402
    %v5538 = vsel %vm5510, %v5505, %v5404
    %v5539 = vsel %vm5510, %v5506, %v5406
    %v5540 = vsel %vm5510, %v5507, %v5408
    %v5541 = vsel %vm5510, %v5508, %v5410
    %v5542 = vsel %vm5510, %v5509, %v5412
    %v5543 = vpack.c.bf16 %v5512, %v5511
    %v5544 = vpack.c.bf16 %v5514, %v5513
    %v5545 = vpack.c.bf16 %v5516, %v5515
    %v5546 = vpack.c.bf16 %v5518, %v5517
    %v5547 = vpack.c.bf16 %v5520, %v5519
    %v5548 = vpack.c.bf16 %v5522, %v5521
    %v5549 = vpack.c.bf16 %v5524, %v5523
    %v5550 = vpack.c.bf16 %v5526, %v5525
    %v5551 = vpack.c.bf16 %v5528, %v5527
    %v5552 = vpack.c.bf16 %v5530, %v5529
    %v5553 = vpack.c.bf16 %v5532, %v5531
    %v5554 = vpack.c.bf16 %v5534, %v5533
    %v5555 = vpack.c.bf16 %v5536, %v5535
    %v5556 = vpack.c.bf16 %v5538, %v5537
    %v5557 = vpack.c.bf16 %v5540, %v5539
    %v5558 = vpack.c.bf16 %v5542, %v5541
    %v5559 = vld [vmem:[#allocation10] sm:$0xf]
    %v5560 = vld [vmem:[#allocation10 + $0x4] sm:$0xf]
    %v5561 = vld [vmem:[#allocation10 + $0x8] sm:$0xf]
    %v5562 = vld [vmem:[#allocation10 + $0xc] sm:$0xf]
    %v5563 = vld [vmem:[#allocation11] sm:$0x1]
    %v5565 = vlaneseq
    %v5566 = vshrl.u32 %v5565, 7
    %v5567 = vsub.s32 0, %v5566
    %v5568 = vrot.slane %v5563, %v5567
    %v5574 = vunpack.c.l.b16 %v5559
    %v5575 = vunpack.c.l.b16 %v5560
    %v5576 = vunpack.c.l.b16 %v5561
    %v5577 = vunpack.c.l.b16 %v5562
    %v5578 = vpack.c.b16 %v5575, %v5574
    %v5579 = vpack.c.b16 %v5577, %v5576
    %v5583 = vsel %vm238, %v5543, 0
    %v5586 = vsel %vm238, %v5544, 0
    %v5589 = vsel %vm238, %v5545, 0
    %v5592 = vsel %vm238, %v5546, 0
    %v5595 = vsel %vm238, %v5547, 0
    %v5598 = vsel %vm238, %v5548, 0
    %v5601 = vsel %vm238, %v5549, 0
    %v5604 = vsel %vm238, %v5550, 0
    %v5607 = vsel %vm238, %v5551, 0
    %v5610 = vsel %vm238, %v5552, 0
    %v5613 = vsel %vm238, %v5553, 0
    %v5616 = vsel %vm238, %v5554, 0
    %v5619 = vsel %vm238, %v5555, 0
    %v5622 = vsel %vm238, %v5556, 0
    %v5625 = vsel %vm238, %v5557, 0
    %v5628 = vsel %vm238, %v5558, 0
    %5630 = vmatprep.subr.bf16.mxu0 0
    %5631 = vmatpush1.bf16.msra.mxu0 %v5578
    %5632 = vmatprep.subr.bf16.mxu0 0
    %5633 = vmatpush1.bf16.msra.mxu0 %v5579
    %5634 = vmatprep.subr.bf16.mxu0 0
    %5635 = vmatpush1.bf16.msra.mxu0 0
    %5636 = vmatprep.subr.bf16.mxu0 0
    %5637 = vmatpush1.bf16.msra.mxu0 0
    %5638 = vmatprep.subr.bf16.mxu0 0
    %5639 = vmatpush1.bf16.msra.mxu0 0
    %5640 = vmatprep.subr.bf16.mxu0 0
    %5641 = vmatpush1.bf16.msra.mxu0 0
    %5642 = vmatprep.subr.bf16.mxu0 0
    %5643 = vmatpush1.bf16.msra.mxu0 0
    %5644 = vmatprep.subr.bf16.mxu0 0
    %5645 = vmatpush1.bf16.msra.mxu0 0
    %5646 = vmatprep.subr.bf16.mxu0 0
    %5647 = vmatpush1.bf16.msra.mxu0 0
    %5648 = vmatprep.subr.bf16.mxu0 0
    %5649 = vmatpush1.bf16.msra.mxu0 0
    %5650 = vmatprep.subr.bf16.mxu0 0
    %5651 = vmatpush1.bf16.msra.mxu0 0
    %5652 = vmatprep.subr.bf16.mxu0 0
    %5653 = vmatpush1.bf16.msra.mxu0 0
    %5654 = vmatprep.subr.bf16.mxu0 0
    %5655 = vmatpush1.bf16.msra.mxu0 0
    %5656 = vmatprep.subr.bf16.mxu0 0
    %5657 = vmatpush1.bf16.msra.mxu0 0
    %5658 = vmatprep.subr.bf16.mxu0 0
    %5659 = vmatpush1.bf16.msra.mxu0 0
    %5660 = vmatprep.subr.bf16.mxu0 0
    %5661 = vmatpush1.bf16.msra.mxu0 0
    %5662 = vmatprep.mubr.bf16.mxu0 0
    %5663 = vmatmul.mubr.bf16.gmra.mrb[0].mxu0 %v5583
    %v5664 = vpop.f32.mrb[0].mxu0
    %v5665 = vadd.f32 %v5568, %v5664
    %v5666 = vpop.f32.mrb[0].mxu0
    %v5667 = vpop.f32.mrb[0].mxu0
    %v5668 = vadd.f32 %v5568, %v5667
    %v5669 = vpop.f32.mrb[0].mxu0
    %5670 = vmatprep.mubr.bf16.mxu0 0
    %5671 = vmatmul.mubr.bf16.gmra.mrb[0].mxu0 %v5586
    %v5672 = vpop.f32.mrb[0].mxu0
    %v5673 = vadd.f32 %v5568, %v5672
    %v5674 = vpop.f32.mrb[0].mxu0
    %v5675 = vpop.f32.mrb[0].mxu0
    %v5676 = vadd.f32 %v5568, %v5675
    %v5677 = vpop.f32.mrb[0].mxu0
    %5678 = vmatprep.mubr.bf16.mxu0 0
    %5679 = vmatmul.mubr.bf16.gmra.mrb[0].mxu0 %v5589
    %v5680 = vpop.f32.mrb[0].mxu0
    %v5681 = vadd.f32 %v5568, %v5680
    %v5682 = vpop.f32.mrb[0].mxu0
    %v5683 = vpop.f32.mrb[0].mxu0
    %v5684 = vadd.f32 %v5568, %v5683
    %v5685 = vpop.f32.mrb[0].mxu0
    %5686 = vmatprep.mubr.bf16.mxu0 0
    %5687 = vmatmul.mubr.bf16.gmra.mrb[0].mxu0 %v5592
    %v5688 = vpop.f32.mrb[0].mxu0
    %v5689 = vadd.f32 %v5568, %v5688
    %v5690 = vpop.f32.mrb[0].mxu0
    %v5691 = vpop.f32.mrb[0].mxu0
    %v5692 = vadd.f32 %v5568, %v5691
    %v5693 = vpop.f32.mrb[0].mxu0
    %5694 = vmatprep.mubr.bf16.mxu0 0
    %5695 = vmatmul.mubr.bf16.gmra.mrb[0].mxu0 %v5595
    %v5696 = vpop.f32.mrb[0].mxu0
    %v5697 = vadd.f32 %v5568, %v5696
    %v5698 = vpop.f32.mrb[0].mxu0
    %v5699 = vpop.f32.mrb[0].mxu0
    %v5700 = vadd.f32 %v5568, %v5699
    %v5701 = vpop.f32.mrb[0].mxu0
    %5702 = vmatprep.mubr.bf16.mxu0 0
    %5703 = vmatmul.mubr.bf16.gmra.mrb[0].mxu0 %v5598
    %v5704 = vpop.f32.mrb[0].mxu0
    %v5705 = vadd.f32 %v5568, %v5704
    %v5706 = vpop.f32.mrb[0].mxu0
    %v5707 = vpop.f32.mrb[0].mxu0
    %v5708 = vadd.f32 %v5568, %v5707
    %v5709 = vpop.f32.mrb[0].mxu0
    %5710 = vmatprep.mubr.bf16.mxu0 0
    %5711 = vmatmul.mubr.bf16.gmra.mrb[0].mxu0 %v5601
    %v5712 = vpop.f32.mrb[0].mxu0
    %v5713 = vadd.f32 %v5568, %v5712
    %v5714 = vpop.f32.mrb[0].mxu0
    %v5715 = vpop.f32.mrb[0].mxu0
    %v5716 = vadd.f32 %v5568, %v5715
    %v5717 = vpop.f32.mrb[0].mxu0
    %5718 = vmatprep.mubr.bf16.mxu0 0
    %5719 = vmatmul.mubr.bf16.gmra.mrb[0].mxu0 %v5604
    %v5720 = vpop.f32.mrb[0].mxu0
    %v5721 = vadd.f32 %v5568, %v5720
    %v5722 = vpop.f32.mrb[0].mxu0
    %v5723 = vpop.f32.mrb[0].mxu0
    %v5724 = vadd.f32 %v5568, %v5723
    %v5725 = vpop.f32.mrb[0].mxu0
    %5726 = vmatprep.mubr.bf16.mxu0 0
    %5727 = vmatmul.mubr.bf16.gmra.mrb[0].mxu0 %v5607
    %v5728 = vpop.f32.mrb[0].mxu0
    %v5729 = vadd.f32 %v5568, %v5728
    %v5730 = vpop.f32.mrb[0].mxu0
    %v5731 = vpop.f32.mrb[0].mxu0
    %v5732 = vadd.f32 %v5568, %v5731
    %v5733 = vpop.f32.mrb[0].mxu0
    %5734 = vmatprep.mubr.bf16.mxu0 0
    %5735 = vmatmul.mubr.bf16.gmra.mrb[0].mxu0 %v5610
    %v5736 = vpop.f32.mrb[0].mxu0
    %v5737 = vadd.f32 %v5568, %v5736
    %v5738 = vpop.f32.mrb[0].mxu0
    %v5739 = vpop.f32.mrb[0].mxu0
    %v5740 = vadd.f32 %v5568, %v5739
    %v5741 = vpop.f32.mrb[0].mxu0
    %5742 = vmatprep.mubr.bf16.mxu0 0
    %5743 = vmatmul.mubr.bf16.gmra.mrb[0].mxu0 %v5613
    %v5744 = vpop.f32.mrb[0].mxu0
    %v5745 = vadd.f32 %v5568, %v5744
    %v5746 = vpop.f32.mrb[0].mxu0
    %v5747 = vpop.f32.mrb[0].mxu0
    %v5748 = vadd.f32 %v5568, %v5747
    %v5749 = vpop.f32.mrb[0].mxu0
    %5750 = vmatprep.mubr.bf16.mxu0 0
    %5751 = vmatmul.mubr.bf16.gmra.mrb[0].mxu0 %v5616
    %v5752 = vpop.f32.mrb[0].mxu0
    %v5753 = vadd.f32 %v5568, %v5752
    %v5754 = vpop.f32.mrb[0].mxu0
    %v5755 = vpop.f32.mrb[0].mxu0
    %v5756 = vadd.f32 %v5568, %v5755
    %v5757 = vpop.f32.mrb[0].mxu0
    %5758 = vmatprep.mubr.bf16.mxu0 0
    %5759 = vmatmul.mubr.bf16.gmra.mrb[0].mxu0 %v5619
    %v5760 = vpop.f32.mrb[0].mxu0
    %v5761 = vadd.f32 %v5568, %v5760
    %v5762 = vpop.f32.mrb[0].mxu0
    %v5763 = vpop.f32.mrb[0].mxu0
    %v5764 = vadd.f32 %v5568, %v5763
    %v5765 = vpop.f32.mrb[0].mxu0
    %5766 = vmatprep.mubr.bf16.mxu0 0
    %5767 = vmatmul.mubr.bf16.gmra.mrb[0].mxu0 %v5622
    %v5768 = vpop.f32.mrb[0].mxu0
    %v5769 = vadd.f32 %v5568, %v5768
    %v5770 = vpop.f32.mrb[0].mxu0
    %v5771 = vpop.f32.mrb[0].mxu0
    %v5772 = vadd.f32 %v5568, %v5771
    %v5773 = vpop.f32.mrb[0].mxu0
    %5774 = vmatprep.mubr.bf16.mxu0 0
    %5775 = vmatmul.mubr.bf16.gmra.mrb[0].mxu0 %v5625
    %v5776 = vpop.f32.mrb[0].mxu0
    %v5777 = vadd.f32 %v5568, %v5776
    %v5778 = vpop.f32.mrb[0].mxu0
    %v5779 = vpop.f32.mrb[0].mxu0
    %v5780 = vadd.f32 %v5568, %v5779
    %v5781 = vpop.f32.mrb[0].mxu0
    %5782 = vmatprep.mubr.bf16.mxu0 0
    %5783 = vmatmul.mubr.bf16.gmra.mrb[0].mxu0 %v5628
    %v5784 = vpop.f32.mrb[0].mxu0
    %v5785 = vadd.f32 %v5568, %v5784
    %v5786 = vpop.f32.mrb[0].mxu0
    %v5787 = vpop.f32.mrb[0].mxu0
    %v5788 = vadd.f32 %v5568, %v5787
    %v5789 = vpop.f32.mrb[0].mxu0
    %5790 = vdwg.mxu0
    %5791 = vst.msk [vmem:[#allocation13] sm:$0xff] %vm238, %v5665
    %5792 = vst.msk [vmem:[#allocation13 + $0x8] sm:$0xff] %vm238, %v5668
    %5793 = vst.msk [vmem:[#allocation13 + $0x10] sm:$0xff] %vm238, %v5673
    %5794 = vst.msk [vmem:[#allocation13 + $0x18] sm:$0xff] %vm238, %v5676
    %5795 = vst.msk [vmem:[#allocation13 + $0x20] sm:$0xff] %vm238, %v5681
    %5796 = vst.msk [vmem:[#allocation13 + $0x28] sm:$0xff] %vm238, %v5684
    %5797 = vst.msk [vmem:[#allocation13 + $0x30] sm:$0xff] %vm238, %v5689
    %5798 = vst.msk [vmem:[#allocation13 + $0x38] sm:$0xff] %vm238, %v5692
    %5799 = vst.msk [vmem:[#allocation13 + $0x40] sm:$0xff] %vm238, %v5697
    %5800 = vst.msk [vmem:[#allocation13 + $0x48] sm:$0xff] %vm238, %v5700
    %5801 = vst.msk [vmem:[#allocation13 + $0x50] sm:$0xff] %vm238, %v5705
    %5802 = vst.msk [vmem:[#allocation13 + $0x58] sm:$0xff] %vm238, %v5708
    %5803 = vst.msk [vmem:[#allocation13 + $0x60] sm:$0xff] %vm238, %v5713
    %5804 = vst.msk [vmem:[#allocation13 + $0x68] sm:$0xff] %vm238, %v5716
    %5805 = vst.msk [vmem:[#allocation13 + $0x70] sm:$0xff] %vm238, %v5721
    %5806 = vst.msk [vmem:[#allocation13 + $0x78] sm:$0xff] %vm238, %v5724
    %5807 = vst.msk [vmem:[#allocation13 + $0x80] sm:$0xff] %vm238, %v5729
    %5808 = vst.msk [vmem:[#allocation13 + $0x88] sm:$0xff] %vm238, %v5732
    %5809 = vst.msk [vmem:[#allocation13 + $0x90] sm:$0xff] %vm238, %v5737
    %5810 = vst.msk [vmem:[#allocation13 + $0x98] sm:$0xff] %vm238, %v5740
    %5811 = vst.msk [vmem:[#allocation13 + $0xa0] sm:$0xff] %vm238, %v5745
    %5812 = vst.msk [vmem:[#allocation13 + $0xa8] sm:$0xff] %vm238, %v5748
    %5813 = vst.msk [vmem:[#allocation13 + $0xb0] sm:$0xff] %vm238, %v5753
    %5814 = vst.msk [vmem:[#allocation13 + $0xb8] sm:$0xff] %vm238, %v5756
    %5815 = vst.msk [vmem:[#allocation13 + $0xc0] sm:$0xff] %vm238, %v5761
    %5816 = vst.msk [vmem:[#allocation13 + $0xc8] sm:$0xff] %vm238, %v5764
    %5817 = vst.msk [vmem:[#allocation13 + $0xd0] sm:$0xff] %vm238, %v5769
    %5818 = vst.msk [vmem:[#allocation13 + $0xd8] sm:$0xff] %vm238, %v5772
    %5819 = vst.msk [vmem:[#allocation13 + $0xe0] sm:$0xff] %vm238, %v5777
    %5820 = vst.msk [vmem:[#allocation13 + $0xe8] sm:$0xff] %vm238, %v5780
    %5821 = vst.msk [vmem:[#allocation13 + $0xf0] sm:$0xff] %vm238, %v5785
    %5822 = vst.msk [vmem:[#allocation13 + $0xf8] sm:$0xff] %vm238, %v5788
    // Predicated region
    $region50: #{tpu_custom_call.1} parent=1 // pred_check
      _
    $region51: #{tpu_custom_call.1} parent=1 // pred_check_branch
      %5824 = sbr.rel (0) target = $region53
    $region52: #{tpu_custom_call.1} parent=1 // pred_region
      %s5826 = ssub.s32 4096, 4096
      %5827 = vsyncadd [#allocation4], %s5826
      %s5828 = sshll.u32 [#allocation13], 4
      %s5829 = int_to_ptr.vmem [resolvable:$true] %s5828
      %5834 = dma.vmem_to_hbm [thread:$0]  %s5829, 4096, %s6, [#allocation4], 128, 128, 8
    $region53: #{tpu_custom_call.1} parent=1 // pred_fallthru
      _
    // Predicated region
    $region54: #{tpu_custom_call.1} parent=1 // pred_check
      _
    $region55: #{tpu_custom_call.1} parent=1 // pred_check_branch
      %5836 = sbr.rel (0) target = $region57
    $region56: #{tpu_custom_call.1} parent=1 // pred_region
      %5837 = dma.done [#allocation4], 4096
    $region57: #{tpu_custom_call.1} parent=1 // pred_fallthru
      _
    %5838 = vsyncpa [#allocation3], 1
    %5839 = vsyncpa [#allocation6], 1
    %5840 = vsyncpa [#allocation9], 1
    %5841 = vsyncpa [#allocation12], 1
    %5842 = vsyncpa [#allocation4], 1

</llo_original>
